<compile_context>
chip_gen: v7x
topology: tpu7x:2x2x1
jax: 0.10.0
libtpu: 0.0.40
codegen_flags: <defaults>
</compile_context>

<pallas_src>
import jax
import jax.numpy as jnp
import numpy as np
from jax.experimental import pallas as pl
from jax.experimental.pallas import tpu as pltpu

EPS = 1e-5  # BatchNorm2d default eps


def _make_kernel(N, Cin, Cmid, Cout, HW, HWout, use_res):
    inv_in = 1.0 / float(N * HW)
    inv_out = 1.0 / float(N * HWout)

    def batchnorm(ts, g, b, inv_count, relu):
        # PyTorch train-mode BN: per-channel batch stats over (N, spatial),
        # biased variance, eps=1e-5, affine.  Two-pass for robustness.
        mean = sum(jnp.sum(t, axis=1, keepdims=True) for t in ts) * inv_count
        cs = [t - mean for t in ts]
        var = sum(jnp.sum(c * c, axis=1, keepdims=True) for c in cs) * inv_count
        scale = g * jax.lax.rsqrt(var + EPS)        # rsqrt -> EUP slot
        if relu:
            return [jnp.maximum(c * scale + b, 0.0) for c in cs]
        return [c * scale + b for c in cs]

    def kernel(x_ref, we_ref, g1_ref, b1_ref, wdw_ref, s_ref,
               g2_ref, b2_ref, wp_ref, g3_ref, b3_ref, out_ref):
        we = we_ref[...]              # (Cmid, Cin)
        wp = wp_ref[...]              # (Cout, Cmid)
        wdw = wdw_ref[...]            # (9, Cmid, 1) per-tap per-channel weights

        # ---- 1x1 expand conv: per-image channel matmul on the MXU ----------
        hs = [jnp.dot(we, x_ref[n], preferred_element_type=jnp.float32)
              for n in range(N)]                                   # (Cmid, HW)
        hs = batchnorm(hs, g1_ref[...], b1_ref[...], inv_in, relu=True)

        # ---- 3x3 depthwise conv (pad=1, stride folded into S) --------------
        # tap k: per-channel scale, then one 0/1 selection matmul that does the
        # spatial shift, zero padding and output striding in a single MXU op.
        ds = [None] * N
        for k in range(9):
            sk = s_ref[k]             # (HW, HWout), loaded once per tap
            wk = wdw[k]               # (Cmid, 1)
            for n in range(N):
                contrib = jnp.dot(hs[n] * wk, sk,
                                  preferred_element_type=jnp.float32)
                ds[n] = contrib if ds[n] is None else ds[n] + contrib
        ds = batchnorm(ds, g2_ref[...], b2_ref[...], inv_out, relu=True)

        # ---- 1x1 project conv + BN (+ residual) ----------------------------
        os_ = [jnp.dot(wp, d, preferred_element_type=jnp.float32)
               for d in ds]                                        # (Cout, HWout)
        os_ = batchnorm(os_, g3_ref[...], b3_ref[...], inv_out, relu=False)
        if use_res:
            # residual re-read right before the add (short live range)
            os_ = [o + x_ref[n] for n, o in enumerate(os_)]

        for n in range(N):            # lane-dense per-image stores, no stack copy
            out_ref[n] = os_[n]

    return kernel


def inverted_residual_block(x_nchw, params, stride=1):
    """NCHW in / NCHW out.  Whole block computed in one Pallas kernel."""
    w_exp, g1, b1, w_dw, g2, b2, w_prj, g3, b3 = params
    N, Cin, H, W = x_nchw.shape
    Cmid = w_exp.shape[0]
    Cout = w_prj.shape[0]
    HW = H * W
    Hout = (H + 2 - 3) // stride + 1
    Wout = (W + 2 - 3) // stride + 1
    HWout = Hout * Wout
    use_res = (stride == 1 and Cin == Cout)
    f32 = jnp.float32

    # Free reshape (contiguous dims), no transpose: NCHW stays channel-major.
    x_flat = x_nchw.reshape(N, Cin, HW).astype(f32)

    # Depthwise weights laid out per tap: (9, Cmid, 1), k = (dy+1)*3 + (dx+1).
    wdw_taps = np.transpose(np.asarray(w_dw, np.float32).reshape(Cmid, 9),
                            (1, 0))[:, :, None]

    # Host-side 0/1 selection matrices: S[k, p_in, p_out] = 1 iff input pixel
    # p_in feeds tap k of output pixel p_out (handles pad=1 zeros and stride).
    S = np.zeros((9, HW, HWout), np.float32)
    oy, ox = np.meshgrid(np.arange(Hout), np.arange(Wout), indexing="ij")
    pout = (oy * Wout + ox).reshape(-1)
    k = 0
    for dy in (-1, 0, 1):
        for dx in (-1, 0, 1):
            iy = oy * stride + dy
            ix = ox * stride + dx
            valid = ((iy >= 0) & (iy < H) & (ix >= 0) & (ix < W)).reshape(-1)
            pin = (iy * W + ix).reshape(-1)
            S[k, pin[valid], pout[valid]] = 1.0
            k += 1

    kernel = _make_kernel(N, Cin, Cmid, Cout, HW, HWout, use_res)

    args = [x_flat,
            jnp.asarray(w_exp, f32).reshape(Cmid, Cin),
            jnp.asarray(g1, f32).reshape(Cmid, 1),
            jnp.asarray(b1, f32).reshape(Cmid, 1),
            jnp.asarray(wdw_taps), jnp.asarray(S),
            jnp.asarray(g2, f32).reshape(Cmid, 1),
            jnp.asarray(b2, f32).reshape(Cmid, 1),
            jnp.asarray(w_prj, f32).reshape(Cout, Cmid),
            jnp.asarray(g3, f32).reshape(Cout, 1),
            jnp.asarray(b3, f32).reshape(Cout, 1)]

    vmem = pl.BlockSpec(memory_space=pltpu.MemorySpace.VMEM)
    out_flat = pl.pallas_call(
        kernel,
        out_shape=jax.ShapeDtypeStruct((N, Cout, HWout), jnp.float32),
        in_specs=[vmem] * len(args),
        out_specs=vmem,
        compiler_params=pltpu.CompilerParams(
            vmem_limit_bytes=32 * 1024 * 1024),
    )(*args)
    # Free reshape back to NCHW (no transpose).
    return out_flat.reshape(N, Cout, Hout, Wout)


def reference(x_nchw, params, stride=1):
    """Pure-JAX reference (lax convs, two-pass BN) for correctness checking."""
    w_exp, g1, b1, w_dw, g2, b2, w_prj, g3, b3 = params
    N, Cin, H, W = x_nchw.shape
    Cmid = w_exp.shape[0]
    Cout = w_prj.shape[0]
    use_res = (stride == 1 and Cin == Cout)
    x = jnp.transpose(x_nchw, (0, 2, 3, 1)).astype(jnp.float32)

    def bn(t, g, b):
        mean = t.mean(axis=(0, 1, 2), keepdims=True)
        var = jnp.square(t - mean).mean(axis=(0, 1, 2), keepdims=True)
        return ((t - mean) / jnp.sqrt(var + EPS) * g.reshape(1, 1, 1, -1)
                + b.reshape(1, 1, 1, -1))

    dn = ('NHWC', 'HWIO', 'NHWC')
    h = jax.lax.conv_general_dilated(
        x, jnp.transpose(w_exp, (2, 3, 1, 0)), (1, 1), 'VALID',
        dimension_numbers=dn)
    h = jnp.maximum(bn(h, g1, b1), 0.0)
    d = jax.lax.conv_general_dilated(
        h, jnp.transpose(w_dw, (2, 3, 1, 0)), (stride, stride),
        ((1, 1), (1, 1)), dimension_numbers=dn, feature_group_count=Cmid)
    d = jnp.maximum(bn(d, g2, b2), 0.0)
    o = jax.lax.conv_general_dilated(
        d, jnp.transpose(w_prj, (2, 3, 1, 0)), (1, 1), 'VALID',
        dimension_numbers=dn)
    o = bn(o, g3, b3)
    if use_res:
        o = o + x
    return jnp.transpose(o, (0, 3, 1, 2))


if __name__ == "__main__":
    N, Cin, H, W = 2, 4, 16, 16
    expand_ratio = 6
    Cmid = Cin * expand_ratio      # 24
    Cout = Cin                     # residual path active (stride=1, Cin==Cout)
    stride = 1

    key = jax.random.PRNGKey(0)
    ks = jax.random.split(key, 10)
    x = jax.random.normal(ks[0], (N, Cin, H, W), jnp.float32)

    # PyTorch-shaped parameters.
    w_exp = 0.2 * jax.random.normal(ks[1], (Cmid, Cin, 1, 1), jnp.float32)
    g1 = 1.0 + 0.1 * jax.random.normal(ks[2], (Cmid,), jnp.float32)
    b1 = 0.1 * jax.random.normal(ks[3], (Cmid,), jnp.float32)
    w_dw = 0.2 * jax.random.normal(ks[4], (Cmid, 1, 3, 3), jnp.float32)
    g2 = 1.0 + 0.1 * jax.random.normal(ks[5], (Cmid,), jnp.float32)
    b2 = 0.1 * jax.random.normal(ks[6], (Cmid,), jnp.float32)
    w_prj = 0.2 * jax.random.normal(ks[7], (Cout, Cmid, 1, 1), jnp.float32)
    g3 = 1.0 + 0.1 * jax.random.normal(ks[8], (Cout,), jnp.float32)
    b3 = 0.1 * jax.random.normal(ks[9], (Cout,), jnp.float32)
    params = (w_exp, g1, b1, w_dw, g2, b2, w_prj, g3, b3)

    out = inverted_residual_block(x, params, stride=stride)
    out = jax.block_until_ready(out)

    ref = reference(x, params, stride=stride)
    assert out.shape == (N, Cout, H, W), out.shape
    np.testing.assert_allclose(np.asarray(out), np.asarray(ref),
                               atol=5e-4, rtol=5e-4)
    print("KERNEL_OK")
</pallas_src>

<mosaic_0001>
module attributes {stable_mosaic.version = 11 : i64} {
  func.func @kernel(%arg0: memref<2x4x256xf32, #tpu.memory_space<vmem>>, %arg1: memref<24x4xf32, #tpu.memory_space<vmem>>, %arg2: memref<24x1xf32, #tpu.memory_space<vmem>>, %arg3: memref<24x1xf32, #tpu.memory_space<vmem>>, %arg4: memref<9x24x1xf32, #tpu.memory_space<vmem>>, %arg5: memref<9x256x256xf32, #tpu.memory_space<vmem>>, %arg6: memref<24x1xf32, #tpu.memory_space<vmem>>, %arg7: memref<24x1xf32, #tpu.memory_space<vmem>>, %arg8: memref<4x24xf32, #tpu.memory_space<vmem>>, %arg9: memref<4x1xf32, #tpu.memory_space<vmem>>, %arg10: memref<4x1xf32, #tpu.memory_space<vmem>>, %arg11: memref<2x4x256xf32, #tpu.memory_space<vmem>>) attributes {dimension_semantics = [], scalar_prefetch = 0 : i64, scratch_operands = 0 : i64, tpu.core_type = #tpu.core_type<tc>} {
    %c0 = arith.constant 0 : index
    %c0_0 = arith.constant 0 : index
    %0 = vector.load %arg1[%c0, %c0_0] : memref<24x4xf32, #tpu.memory_space<vmem>>, vector<24x4xf32>
    %c0_1 = arith.constant 0 : index
    %c0_2 = arith.constant 0 : index
    %1 = vector.load %arg8[%c0_1, %c0_2] : memref<4x24xf32, #tpu.memory_space<vmem>>, vector<4x24xf32>
    %c0_3 = arith.constant 0 : index
    %c0_4 = arith.constant 0 : index
    %c0_5 = arith.constant 0 : index
    %2 = vector.load %arg4[%c0_3, %c0_4, %c0_5] : memref<9x24x1xf32, #tpu.memory_space<vmem>>, vector<9x24x1xf32>
    %c0_6 = arith.constant 0 : index
    %c0_7 = arith.constant 0 : index
    %c0_8 = arith.constant 0 : index
    %3 = vector.load %arg0[%c0_6, %c0_7, %c0_8] : memref<2x4x256xf32, #tpu.memory_space<vmem>>, vector<1x4x256xf32>
    %4 = vector.shape_cast %3 : vector<1x4x256xf32> to vector<4x256xf32>
    %cst = arith.constant dense<0.000000e+00> : vector<24x256xf32>
    %5 = tpu.matmul %0, %4, %cst {dimension_numbers = #tpu.dot_dimension_numbers<[1], [0], [0], [1], [0, 0, 1, 1], [], []>} : vector<24x4xf32>, vector<4x256xf32>, vector<24x256xf32> -> vector<24x256xf32>
    %c1 = arith.constant 1 : index
    %c0_9 = arith.constant 0 : index
    %c0_10 = arith.constant 0 : index
    %6 = vector.load %arg0[%c1, %c0_9, %c0_10] : memref<2x4x256xf32, #tpu.memory_space<vmem>>, vector<1x4x256xf32>
    %7 = vector.shape_cast %6 : vector<1x4x256xf32> to vector<4x256xf32>
    %cst_11 = arith.constant dense<0.000000e+00> : vector<24x256xf32>
    %8 = tpu.matmul %0, %7, %cst_11 {dimension_numbers = #tpu.dot_dimension_numbers<[1], [0], [0], [1], [0, 0, 1, 1], [], []>} : vector<24x4xf32>, vector<4x256xf32>, vector<24x256xf32> -> vector<24x256xf32>
    %c0_12 = arith.constant 0 : index
    %c0_13 = arith.constant 0 : index
    %9 = vector.load %arg2[%c0_12, %c0_13] : memref<24x1xf32, #tpu.memory_space<vmem>>, vector<24x1xf32>
    %c0_14 = arith.constant 0 : index
    %c0_15 = arith.constant 0 : index
    %10 = vector.load %arg3[%c0_14, %c0_15] : memref<24x1xf32, #tpu.memory_space<vmem>>, vector<24x1xf32>
    %cst_16 = arith.constant dense<0.000000e+00> : vector<24xf32>
    %11 = vector.multi_reduction <add>, %5, %cst_16 [1] : vector<24x256xf32> to vector<24xf32>
    %12 = vector.shape_cast %11 : vector<24xf32> to vector<24x1xf32>
    %cst_17 = arith.constant 0.000000e+00 : f32
    %13 = vector.broadcast %cst_17 : f32 to vector<24x1xf32>
    %14 = arith.addf %13, %12 : vector<24x1xf32>
    %cst_18 = arith.constant dense<0.000000e+00> : vector<24xf32>
    %15 = vector.multi_reduction <add>, %8, %cst_18 [1] : vector<24x256xf32> to vector<24xf32>
    %16 = vector.shape_cast %15 : vector<24xf32> to vector<24x1xf32>
    %17 = arith.addf %14, %16 : vector<24x1xf32>
    %cst_19 = arith.constant 0.001953125 : f32
    %18 = vector.broadcast %cst_19 : f32 to vector<24x1xf32>
    %19 = arith.mulf %17, %18 : vector<24x1xf32>
    %20 = vector.broadcast %19 : vector<24x1xf32> to vector<24x256xf32>
    %21 = arith.subf %5, %20 : vector<24x256xf32>
    %22 = vector.broadcast %19 : vector<24x1xf32> to vector<24x256xf32>
    %23 = arith.subf %8, %22 : vector<24x256xf32>
    %24 = arith.mulf %21, %21 : vector<24x256xf32>
    %cst_20 = arith.constant dense<0.000000e+00> : vector<24xf32>
    %25 = vector.multi_reduction <add>, %24, %cst_20 [1] : vector<24x256xf32> to vector<24xf32>
    %26 = vector.shape_cast %25 : vector<24xf32> to vector<24x1xf32>
    %cst_21 = arith.constant 0.000000e+00 : f32
    %27 = vector.broadcast %cst_21 : f32 to vector<24x1xf32>
    %28 = arith.addf %27, %26 : vector<24x1xf32>
    %29 = arith.mulf %23, %23 : vector<24x256xf32>
    %cst_22 = arith.constant dense<0.000000e+00> : vector<24xf32>
    %30 = vector.multi_reduction <add>, %29, %cst_22 [1] : vector<24x256xf32> to vector<24xf32>
    %31 = vector.shape_cast %30 : vector<24xf32> to vector<24x1xf32>
    %32 = arith.addf %28, %31 : vector<24x1xf32>
    %cst_23 = arith.constant 0.001953125 : f32
    %33 = vector.broadcast %cst_23 : f32 to vector<24x1xf32>
    %34 = arith.mulf %32, %33 : vector<24x1xf32>
    %cst_24 = arith.constant 9.99999974E-6 : f32
    %35 = vector.broadcast %cst_24 : f32 to vector<24x1xf32>
    %36 = arith.addf %34, %35 : vector<24x1xf32>
    %37 = math.rsqrt %36 : vector<24x1xf32>
    %38 = arith.mulf %9, %37 : vector<24x1xf32>
    %39 = vector.broadcast %38 : vector<24x1xf32> to vector<24x256xf32>
    %40 = arith.mulf %21, %39 : vector<24x256xf32>
    %41 = vector.broadcast %10 : vector<24x1xf32> to vector<24x256xf32>
    %42 = arith.addf %40, %41 : vector<24x256xf32>
    %cst_25 = arith.constant 0.000000e+00 : f32
    %43 = vector.broadcast %cst_25 : f32 to vector<24x256xf32>
    %44 = arith.maximumf %42, %43 : vector<24x256xf32>
    %45 = vector.broadcast %38 : vector<24x1xf32> to vector<24x256xf32>
    %46 = arith.mulf %23, %45 : vector<24x256xf32>
    %47 = vector.broadcast %10 : vector<24x1xf32> to vector<24x256xf32>
    %48 = arith.addf %46, %47 : vector<24x256xf32>
    %cst_26 = arith.constant 0.000000e+00 : f32
    %49 = vector.broadcast %cst_26 : f32 to vector<24x256xf32>
    %50 = arith.maximumf %48, %49 : vector<24x256xf32>
    %c0_27 = arith.constant 0 : index
    %c0_28 = arith.constant 0 : index
    %c0_29 = arith.constant 0 : index
    %51 = vector.load %arg5[%c0_27, %c0_28, %c0_29] : memref<9x256x256xf32, #tpu.memory_space<vmem>>, vector<1x256x256xf32>
    %52 = vector.shape_cast %51 : vector<1x256x256xf32> to vector<256x256xf32>
    %53 = vector.extract_strided_slice %2 {offsets = [0, 0, 0], sizes = [1, 24, 1], strides = [1, 1, 1]} : vector<9x24x1xf32> to vector<1x24x1xf32>
    %54 = vector.shape_cast %53 : vector<1x24x1xf32> to vector<24x1xf32>
    %55 = vector.broadcast %54 : vector<24x1xf32> to vector<24x256xf32>
    %56 = arith.mulf %44, %55 : vector<24x256xf32>
    %cst_30 = arith.constant dense<0.000000e+00> : vector<24x256xf32>
    %57 = tpu.matmul %56, %52, %cst_30 {dimension_numbers = #tpu.dot_dimension_numbers<[1], [0], [0], [1], [0, 0, 1, 1], [], []>} : vector<24x256xf32>, vector<256x256xf32>, vector<24x256xf32> -> vector<24x256xf32>
    %58 = vector.broadcast %54 : vector<24x1xf32> to vector<24x256xf32>
    %59 = arith.mulf %50, %58 : vector<24x256xf32>
    %cst_31 = arith.constant dense<0.000000e+00> : vector<24x256xf32>
    %60 = tpu.matmul %59, %52, %cst_31 {dimension_numbers = #tpu.dot_dimension_numbers<[1], [0], [0], [1], [0, 0, 1, 1], [], []>} : vector<24x256xf32>, vector<256x256xf32>, vector<24x256xf32> -> vector<24x256xf32>
    %c1_32 = arith.constant 1 : index
    %c0_33 = arith.constant 0 : index
    %c0_34 = arith.constant 0 : index
    %61 = vector.load %arg5[%c1_32, %c0_33, %c0_34] : memref<9x256x256xf32, #tpu.memory_space<vmem>>, vector<1x256x256xf32>
    %62 = vector.shape_cast %61 : vector<1x256x256xf32> to vector<256x256xf32>
    %63 = vector.extract_strided_slice %2 {offsets = [1, 0, 0], sizes = [1, 24, 1], strides = [1, 1, 1]} : vector<9x24x1xf32> to vector<1x24x1xf32>
    %64 = vector.shape_cast %63 : vector<1x24x1xf32> to vector<24x1xf32>
    %65 = vector.broadcast %64 : vector<24x1xf32> to vector<24x256xf32>
    %66 = arith.mulf %44, %65 : vector<24x256xf32>
    %cst_35 = arith.constant dense<0.000000e+00> : vector<24x256xf32>
    %67 = tpu.matmul %66, %62, %cst_35 {dimension_numbers = #tpu.dot_dimension_numbers<[1], [0], [0], [1], [0, 0, 1, 1], [], []>} : vector<24x256xf32>, vector<256x256xf32>, vector<24x256xf32> -> vector<24x256xf32>
    %68 = arith.addf %57, %67 : vector<24x256xf32>
    %69 = vector.broadcast %64 : vector<24x1xf32> to vector<24x256xf32>
    %70 = arith.mulf %50, %69 : vector<24x256xf32>
    %cst_36 = arith.constant dense<0.000000e+00> : vector<24x256xf32>
    %71 = tpu.matmul %70, %62, %cst_36 {dimension_numbers = #tpu.dot_dimension_numbers<[1], [0], [0], [1], [0, 0, 1, 1], [], []>} : vector<24x256xf32>, vector<256x256xf32>, vector<24x256xf32> -> vector<24x256xf32>
    %72 = arith.addf %60, %71 : vector<24x256xf32>
    %c2 = arith.constant 2 : index
    %c0_37 = arith.constant 0 : index
    %c0_38 = arith.constant 0 : index
    %73 = vector.load %arg5[%c2, %c0_37, %c0_38] : memref<9x256x256xf32, #tpu.memory_space<vmem>>, vector<1x256x256xf32>
    %74 = vector.shape_cast %73 : vector<1x256x256xf32> to vector<256x256xf32>
    %75 = vector.extract_strided_slice %2 {offsets = [2, 0, 0], sizes = [1, 24, 1], strides = [1, 1, 1]} : vector<9x24x1xf32> to vector<1x24x1xf32>
    %76 = vector.shape_cast %75 : vector<1x24x1xf32> to vector<24x1xf32>
    %77 = vector.broadcast %76 : vector<24x1xf32> to vector<24x256xf32>
    %78 = arith.mulf %44, %77 : vector<24x256xf32>
    %cst_39 = arith.constant dense<0.000000e+00> : vector<24x256xf32>
    %79 = tpu.matmul %78, %74, %cst_39 {dimension_numbers = #tpu.dot_dimension_numbers<[1], [0], [0], [1], [0, 0, 1, 1], [], []>} : vector<24x256xf32>, vector<256x256xf32>, vector<24x256xf32> -> vector<24x256xf32>
    %80 = arith.addf %68, %79 : vector<24x256xf32>
    %81 = vector.broadcast %76 : vector<24x1xf32> to vector<24x256xf32>
    %82 = arith.mulf %50, %81 : vector<24x256xf32>
    %cst_40 = arith.constant dense<0.000000e+00> : vector<24x256xf32>
    %83 = tpu.matmul %82, %74, %cst_40 {dimension_numbers = #tpu.dot_dimension_numbers<[1], [0], [0], [1], [0, 0, 1, 1], [], []>} : vector<24x256xf32>, vector<256x256xf32>, vector<24x256xf32> -> vector<24x256xf32>
    %84 = arith.addf %72, %83 : vector<24x256xf32>
    %c3 = arith.constant 3 : index
    %c0_41 = arith.constant 0 : index
    %c0_42 = arith.constant 0 : index
    %85 = vector.load %arg5[%c3, %c0_41, %c0_42] : memref<9x256x256xf32, #tpu.memory_space<vmem>>, vector<1x256x256xf32>
    %86 = vector.shape_cast %85 : vector<1x256x256xf32> to vector<256x256xf32>
    %87 = vector.extract_strided_slice %2 {offsets = [3, 0, 0], sizes = [1, 24, 1], strides = [1, 1, 1]} : vector<9x24x1xf32> to vector<1x24x1xf32>
    %88 = vector.shape_cast %87 : vector<1x24x1xf32> to vector<24x1xf32>
    %89 = vector.broadcast %88 : vector<24x1xf32> to vector<24x256xf32>
    %90 = arith.mulf %44, %89 : vector<24x256xf32>
    %cst_43 = arith.constant dense<0.000000e+00> : vector<24x256xf32>
    %91 = tpu.matmul %90, %86, %cst_43 {dimension_numbers = #tpu.dot_dimension_numbers<[1], [0], [0], [1], [0, 0, 1, 1], [], []>} : vector<24x256xf32>, vector<256x256xf32>, vector<24x256xf32> -> vector<24x256xf32>
    %92 = arith.addf %80, %91 : vector<24x256xf32>
    %93 = vector.broadcast %88 : vector<24x1xf32> to vector<24x256xf32>
    %94 = arith.mulf %50, %93 : vector<24x256xf32>
    %cst_44 = arith.constant dense<0.000000e+00> : vector<24x256xf32>
    %95 = tpu.matmul %94, %86, %cst_44 {dimension_numbers = #tpu.dot_dimension_numbers<[1], [0], [0], [1], [0, 0, 1, 1], [], []>} : vector<24x256xf32>, vector<256x256xf32>, vector<24x256xf32> -> vector<24x256xf32>
    %96 = arith.addf %84, %95 : vector<24x256xf32>
    %c4 = arith.constant 4 : index
    %c0_45 = arith.constant 0 : index
    %c0_46 = arith.constant 0 : index
    %97 = vector.load %arg5[%c4, %c0_45, %c0_46] : memref<9x256x256xf32, #tpu.memory_space<vmem>>, vector<1x256x256xf32>
    %98 = vector.shape_cast %97 : vector<1x256x256xf32> to vector<256x256xf32>
    %99 = vector.extract_strided_slice %2 {offsets = [4, 0, 0], sizes = [1, 24, 1], strides = [1, 1, 1]} : vector<9x24x1xf32> to vector<1x24x1xf32>
    %100 = vector.shape_cast %99 : vector<1x24x1xf32> to vector<24x1xf32>
    %101 = vector.broadcast %100 : vector<24x1xf32> to vector<24x256xf32>
    %102 = arith.mulf %44, %101 : vector<24x256xf32>
    %cst_47 = arith.constant dense<0.000000e+00> : vector<24x256xf32>
    %103 = tpu.matmul %102, %98, %cst_47 {dimension_numbers = #tpu.dot_dimension_numbers<[1], [0], [0], [1], [0, 0, 1, 1], [], []>} : vector<24x256xf32>, vector<256x256xf32>, vector<24x256xf32> -> vector<24x256xf32>
    %104 = arith.addf %92, %103 : vector<24x256xf32>
    %105 = vector.broadcast %100 : vector<24x1xf32> to vector<24x256xf32>
    %106 = arith.mulf %50, %105 : vector<24x256xf32>
    %cst_48 = arith.constant dense<0.000000e+00> : vector<24x256xf32>
    %107 = tpu.matmul %106, %98, %cst_48 {dimension_numbers = #tpu.dot_dimension_numbers<[1], [0], [0], [1], [0, 0, 1, 1], [], []>} : vector<24x256xf32>, vector<256x256xf32>, vector<24x256xf32> -> vector<24x256xf32>
    %108 = arith.addf %96, %107 : vector<24x256xf32>
    %c5 = arith.constant 5 : index
    %c0_49 = arith.constant 0 : index
    %c0_50 = arith.constant 0 : index
    %109 = vector.load %arg5[%c5, %c0_49, %c0_50] : memref<9x256x256xf32, #tpu.memory_space<vmem>>, vector<1x256x256xf32>
    %110 = vector.shape_cast %109 : vector<1x256x256xf32> to vector<256x256xf32>
    %111 = vector.extract_strided_slice %2 {offsets = [5, 0, 0], sizes = [1, 24, 1], strides = [1, 1, 1]} : vector<9x24x1xf32> to vector<1x24x1xf32>
    %112 = vector.shape_cast %111 : vector<1x24x1xf32> to vector<24x1xf32>
    %113 = vector.broadcast %112 : vector<24x1xf32> to vector<24x256xf32>
    %114 = arith.mulf %44, %113 : vector<24x256xf32>
    %cst_51 = arith.constant dense<0.000000e+00> : vector<24x256xf32>
    %115 = tpu.matmul %114, %110, %cst_51 {dimension_numbers = #tpu.dot_dimension_numbers<[1], [0], [0], [1], [0, 0, 1, 1], [], []>} : vector<24x256xf32>, vector<256x256xf32>, vector<24x256xf32> -> vector<24x256xf32>
    %116 = arith.addf %104, %115 : vector<24x256xf32>
    %117 = vector.broadcast %112 : vector<24x1xf32> to vector<24x256xf32>
    %118 = arith.mulf %50, %117 : vector<24x256xf32>
    %cst_52 = arith.constant dense<0.000000e+00> : vector<24x256xf32>
    %119 = tpu.matmul %118, %110, %cst_52 {dimension_numbers = #tpu.dot_dimension_numbers<[1], [0], [0], [1], [0, 0, 1, 1], [], []>} : vector<24x256xf32>, vector<256x256xf32>, vector<24x256xf32> -> vector<24x256xf32>
    %120 = arith.addf %108, %119 : vector<24x256xf32>
    %c6 = arith.constant 6 : index
    %c0_53 = arith.constant 0 : index
    %c0_54 = arith.constant 0 : index
    %121 = vector.load %arg5[%c6, %c0_53, %c0_54] : memref<9x256x256xf32, #tpu.memory_space<vmem>>, vector<1x256x256xf32>
    %122 = vector.shape_cast %121 : vector<1x256x256xf32> to vector<256x256xf32>
    %123 = vector.extract_strided_slice %2 {offsets = [6, 0, 0], sizes = [1, 24, 1], strides = [1, 1, 1]} : vector<9x24x1xf32> to vector<1x24x1xf32>
    %124 = vector.shape_cast %123 : vector<1x24x1xf32> to vector<24x1xf32>
    %125 = vector.broadcast %124 : vector<24x1xf32> to vector<24x256xf32>
    %126 = arith.mulf %44, %125 : vector<24x256xf32>
    %cst_55 = arith.constant dense<0.000000e+00> : vector<24x256xf32>
    %127 = tpu.matmul %126, %122, %cst_55 {dimension_numbers = #tpu.dot_dimension_numbers<[1], [0], [0], [1], [0, 0, 1, 1], [], []>} : vector<24x256xf32>, vector<256x256xf32>, vector<24x256xf32> -> vector<24x256xf32>
    %128 = arith.addf %116, %127 : vector<24x256xf32>
    %129 = vector.broadcast %124 : vector<24x1xf32> to vector<24x256xf32>
    %130 = arith.mulf %50, %129 : vector<24x256xf32>
    %cst_56 = arith.constant dense<0.000000e+00> : vector<24x256xf32>
    %131 = tpu.matmul %130, %122, %cst_56 {dimension_numbers = #tpu.dot_dimension_numbers<[1], [0], [0], [1], [0, 0, 1, 1], [], []>} : vector<24x256xf32>, vector<256x256xf32>, vector<24x256xf32> -> vector<24x256xf32>
    %132 = arith.addf %120, %131 : vector<24x256xf32>
    %c7 = arith.constant 7 : index
    %c0_57 = arith.constant 0 : index
    %c0_58 = arith.constant 0 : index
    %133 = vector.load %arg5[%c7, %c0_57, %c0_58] : memref<9x256x256xf32, #tpu.memory_space<vmem>>, vector<1x256x256xf32>
    %134 = vector.shape_cast %133 : vector<1x256x256xf32> to vector<256x256xf32>
    %135 = vector.extract_strided_slice %2 {offsets = [7, 0, 0], sizes = [1, 24, 1], strides = [1, 1, 1]} : vector<9x24x1xf32> to vector<1x24x1xf32>
    %136 = vector.shape_cast %135 : vector<1x24x1xf32> to vector<24x1xf32>
    %137 = vector.broadcast %136 : vector<24x1xf32> to vector<24x256xf32>
    %138 = arith.mulf %44, %137 : vector<24x256xf32>
    %cst_59 = arith.constant dense<0.000000e+00> : vector<24x256xf32>
    %139 = tpu.matmul %138, %134, %cst_59 {dimension_numbers = #tpu.dot_dimension_numbers<[1], [0], [0], [1], [0, 0, 1, 1], [], []>} : vector<24x256xf32>, vector<256x256xf32>, vector<24x256xf32> -> vector<24x256xf32>
    %140 = arith.addf %128, %139 : vector<24x256xf32>
    %141 = vector.broadcast %136 : vector<24x1xf32> to vector<24x256xf32>
    %142 = arith.mulf %50, %141 : vector<24x256xf32>
    %cst_60 = arith.constant dense<0.000000e+00> : vector<24x256xf32>
    %143 = tpu.matmul %142, %134, %cst_60 {dimension_numbers = #tpu.dot_dimension_numbers<[1], [0], [0], [1], [0, 0, 1, 1], [], []>} : vector<24x256xf32>, vector<256x256xf32>, vector<24x256xf32> -> vector<24x256xf32>
    %144 = arith.addf %132, %143 : vector<24x256xf32>
    %c8 = arith.constant 8 : index
    %c0_61 = arith.constant 0 : index
    %c0_62 = arith.constant 0 : index
    %145 = vector.load %arg5[%c8, %c0_61, %c0_62] : memref<9x256x256xf32, #tpu.memory_space<vmem>>, vector<1x256x256xf32>
    %146 = vector.shape_cast %145 : vector<1x256x256xf32> to vector<256x256xf32>
    %147 = vector.extract_strided_slice %2 {offsets = [8, 0, 0], sizes = [1, 24, 1], strides = [1, 1, 1]} : vector<9x24x1xf32> to vector<1x24x1xf32>
    %148 = vector.shape_cast %147 : vector<1x24x1xf32> to vector<24x1xf32>
    %149 = vector.broadcast %148 : vector<24x1xf32> to vector<24x256xf32>
    %150 = arith.mulf %44, %149 : vector<24x256xf32>
    %cst_63 = arith.constant dense<0.000000e+00> : vector<24x256xf32>
    %151 = tpu.matmul %150, %146, %cst_63 {dimension_numbers = #tpu.dot_dimension_numbers<[1], [0], [0], [1], [0, 0, 1, 1], [], []>} : vector<24x256xf32>, vector<256x256xf32>, vector<24x256xf32> -> vector<24x256xf32>
    %152 = arith.addf %140, %151 : vector<24x256xf32>
    %153 = vector.broadcast %148 : vector<24x1xf32> to vector<24x256xf32>
    %154 = arith.mulf %50, %153 : vector<24x256xf32>
    %cst_64 = arith.constant dense<0.000000e+00> : vector<24x256xf32>
    %155 = tpu.matmul %154, %146, %cst_64 {dimension_numbers = #tpu.dot_dimension_numbers<[1], [0], [0], [1], [0, 0, 1, 1], [], []>} : vector<24x256xf32>, vector<256x256xf32>, vector<24x256xf32> -> vector<24x256xf32>
    %156 = arith.addf %144, %155 : vector<24x256xf32>
    %c0_65 = arith.constant 0 : index
    %c0_66 = arith.constant 0 : index
    %157 = vector.load %arg6[%c0_65, %c0_66] : memref<24x1xf32, #tpu.memory_space<vmem>>, vector<24x1xf32>
    %c0_67 = arith.constant 0 : index
    %c0_68 = arith.constant 0 : index
    %158 = vector.load %arg7[%c0_67, %c0_68] : memref<24x1xf32, #tpu.memory_space<vmem>>, vector<24x1xf32>
    %cst_69 = arith.constant dense<0.000000e+00> : vector<24xf32>
    %159 = vector.multi_reduction <add>, %152, %cst_69 [1] : vector<24x256xf32> to vector<24xf32>
    %160 = vector.shape_cast %159 : vector<24xf32> to vector<24x1xf32>
    %cst_70 = arith.constant 0.000000e+00 : f32
    %161 = vector.broadcast %cst_70 : f32 to vector<24x1xf32>
    %162 = arith.addf %161, %160 : vector<24x1xf32>
    %cst_71 = arith.constant dense<0.000000e+00> : vector<24xf32>
    %163 = vector.multi_reduction <add>, %156, %cst_71 [1] : vector<24x256xf32> to vector<24xf32>
    %164 = vector.shape_cast %163 : vector<24xf32> to vector<24x1xf32>
    %165 = arith.addf %162, %164 : vector<24x1xf32>
    %cst_72 = arith.constant 0.001953125 : f32
    %166 = vector.broadcast %cst_72 : f32 to vector<24x1xf32>
    %167 = arith.mulf %165, %166 : vector<24x1xf32>
    %168 = vector.broadcast %167 : vector<24x1xf32> to vector<24x256xf32>
    %169 = arith.subf %152, %168 : vector<24x256xf32>
    %170 = vector.broadcast %167 : vector<24x1xf32> to vector<24x256xf32>
    %171 = arith.subf %156, %170 : vector<24x256xf32>
    %172 = arith.mulf %169, %169 : vector<24x256xf32>
    %cst_73 = arith.constant dense<0.000000e+00> : vector<24xf32>
    %173 = vector.multi_reduction <add>, %172, %cst_73 [1] : vector<24x256xf32> to vector<24xf32>
    %174 = vector.shape_cast %173 : vector<24xf32> to vector<24x1xf32>
    %cst_74 = arith.constant 0.000000e+00 : f32
    %175 = vector.broadcast %cst_74 : f32 to vector<24x1xf32>
    %176 = arith.addf %175, %174 : vector<24x1xf32>
    %177 = arith.mulf %171, %171 : vector<24x256xf32>
    %cst_75 = arith.constant dense<0.000000e+00> : vector<24xf32>
    %178 = vector.multi_reduction <add>, %177, %cst_75 [1] : vector<24x256xf32> to vector<24xf32>
    %179 = vector.shape_cast %178 : vector<24xf32> to vector<24x1xf32>
    %180 = arith.addf %176, %179 : vector<24x1xf32>
    %cst_76 = arith.constant 0.001953125 : f32
    %181 = vector.broadcast %cst_76 : f32 to vector<24x1xf32>
    %182 = arith.mulf %180, %181 : vector<24x1xf32>
    %cst_77 = arith.constant 9.99999974E-6 : f32
    %183 = vector.broadcast %cst_77 : f32 to vector<24x1xf32>
    %184 = arith.addf %182, %183 : vector<24x1xf32>
    %185 = math.rsqrt %184 : vector<24x1xf32>
    %186 = arith.mulf %157, %185 : vector<24x1xf32>
    %187 = vector.broadcast %186 : vector<24x1xf32> to vector<24x256xf32>
    %188 = arith.mulf %169, %187 : vector<24x256xf32>
    %189 = vector.broadcast %158 : vector<24x1xf32> to vector<24x256xf32>
    %190 = arith.addf %188, %189 : vector<24x256xf32>
    %cst_78 = arith.constant 0.000000e+00 : f32
    %191 = vector.broadcast %cst_78 : f32 to vector<24x256xf32>
    %192 = arith.maximumf %190, %191 : vector<24x256xf32>
    %193 = vector.broadcast %186 : vector<24x1xf32> to vector<24x256xf32>
    %194 = arith.mulf %171, %193 : vector<24x256xf32>
    %195 = vector.broadcast %158 : vector<24x1xf32> to vector<24x256xf32>
    %196 = arith.addf %194, %195 : vector<24x256xf32>
    %cst_79 = arith.constant 0.000000e+00 : f32
    %197 = vector.broadcast %cst_79 : f32 to vector<24x256xf32>
    %198 = arith.maximumf %196, %197 : vector<24x256xf32>
    %cst_80 = arith.constant dense<0.000000e+00> : vector<4x256xf32>
    %199 = tpu.matmul %1, %192, %cst_80 {dimension_numbers = #tpu.dot_dimension_numbers<[1], [0], [0], [1], [0, 0, 1, 1], [], []>} : vector<4x24xf32>, vector<24x256xf32>, vector<4x256xf32> -> vector<4x256xf32>
    %cst_81 = arith.constant dense<0.000000e+00> : vector<4x256xf32>
    %200 = tpu.matmul %1, %198, %cst_81 {dimension_numbers = #tpu.dot_dimension_numbers<[1], [0], [0], [1], [0, 0, 1, 1], [], []>} : vector<4x24xf32>, vector<24x256xf32>, vector<4x256xf32> -> vector<4x256xf32>
    %c0_82 = arith.constant 0 : index
    %c0_83 = arith.constant 0 : index
    %201 = vector.load %arg9[%c0_82, %c0_83] : memref<4x1xf32, #tpu.memory_space<vmem>>, vector<4x1xf32>
    %c0_84 = arith.constant 0 : index
    %c0_85 = arith.constant 0 : index
    %202 = vector.load %arg10[%c0_84, %c0_85] : memref<4x1xf32, #tpu.memory_space<vmem>>, vector<4x1xf32>
    %cst_86 = arith.constant dense<0.000000e+00> : vector<4xf32>
    %203 = vector.multi_reduction <add>, %199, %cst_86 [1] : vector<4x256xf32> to vector<4xf32>
    %204 = vector.shape_cast %203 : vector<4xf32> to vector<4x1xf32>
    %cst_87 = arith.constant 0.000000e+00 : f32
    %205 = vector.broadcast %cst_87 : f32 to vector<4x1xf32>
    %206 = arith.addf %205, %204 : vector<4x1xf32>
    %cst_88 = arith.constant dense<0.000000e+00> : vector<4xf32>
    %207 = vector.multi_reduction <add>, %200, %cst_88 [1] : vector<4x256xf32> to vector<4xf32>
    %208 = vector.shape_cast %207 : vector<4xf32> to vector<4x1xf32>
    %209 = arith.addf %206, %208 : vector<4x1xf32>
    %cst_89 = arith.constant 0.001953125 : f32
    %210 = vector.broadcast %cst_89 : f32 to vector<4x1xf32>
    %211 = arith.mulf %209, %210 : vector<4x1xf32>
    %212 = vector.broadcast %211 : vector<4x1xf32> to vector<4x256xf32>
    %213 = arith.subf %199, %212 : vector<4x256xf32>
    %214 = vector.broadcast %211 : vector<4x1xf32> to vector<4x256xf32>
    %215 = arith.subf %200, %214 : vector<4x256xf32>
    %216 = arith.mulf %213, %213 : vector<4x256xf32>
    %cst_90 = arith.constant dense<0.000000e+00> : vector<4xf32>
    %217 = vector.multi_reduction <add>, %216, %cst_90 [1] : vector<4x256xf32> to vector<4xf32>
    %218 = vector.shape_cast %217 : vector<4xf32> to vector<4x1xf32>
    %cst_91 = arith.constant 0.000000e+00 : f32
    %219 = vector.broadcast %cst_91 : f32 to vector<4x1xf32>
    %220 = arith.addf %219, %218 : vector<4x1xf32>
    %221 = arith.mulf %215, %215 : vector<4x256xf32>
    %cst_92 = arith.constant dense<0.000000e+00> : vector<4xf32>
    %222 = vector.multi_reduction <add>, %221, %cst_92 [1] : vector<4x256xf32> to vector<4xf32>
    %223 = vector.shape_cast %222 : vector<4xf32> to vector<4x1xf32>
    %224 = arith.addf %220, %223 : vector<4x1xf32>
    %cst_93 = arith.constant 0.001953125 : f32
    %225 = vector.broadcast %cst_93 : f32 to vector<4x1xf32>
    %226 = arith.mulf %224, %225 : vector<4x1xf32>
    %cst_94 = arith.constant 9.99999974E-6 : f32
    %227 = vector.broadcast %cst_94 : f32 to vector<4x1xf32>
    %228 = arith.addf %226, %227 : vector<4x1xf32>
    %229 = math.rsqrt %228 : vector<4x1xf32>
    %230 = arith.mulf %201, %229 : vector<4x1xf32>
    %231 = vector.broadcast %230 : vector<4x1xf32> to vector<4x256xf32>
    %232 = arith.mulf %213, %231 : vector<4x256xf32>
    %233 = vector.broadcast %202 : vector<4x1xf32> to vector<4x256xf32>
    %234 = arith.addf %232, %233 : vector<4x256xf32>
    %235 = vector.broadcast %230 : vector<4x1xf32> to vector<4x256xf32>
    %236 = arith.mulf %215, %235 : vector<4x256xf32>
    %237 = vector.broadcast %202 : vector<4x1xf32> to vector<4x256xf32>
    %238 = arith.addf %236, %237 : vector<4x256xf32>
    %c0_95 = arith.constant 0 : index
    %c0_96 = arith.constant 0 : index
    %c0_97 = arith.constant 0 : index
    %239 = vector.load %arg0[%c0_95, %c0_96, %c0_97] : memref<2x4x256xf32, #tpu.memory_space<vmem>>, vector<1x4x256xf32>
    %240 = vector.shape_cast %239 : vector<1x4x256xf32> to vector<4x256xf32>
    %241 = arith.addf %234, %240 : vector<4x256xf32>
    %c1_98 = arith.constant 1 : index
    %c0_99 = arith.constant 0 : index
    %c0_100 = arith.constant 0 : index
    %242 = vector.load %arg0[%c1_98, %c0_99, %c0_100] : memref<2x4x256xf32, #tpu.memory_space<vmem>>, vector<1x4x256xf32>
    %243 = vector.shape_cast %242 : vector<1x4x256xf32> to vector<4x256xf32>
    %244 = arith.addf %238, %243 : vector<4x256xf32>
    %c0_101 = arith.constant 0 : index
    %c0_102 = arith.constant 0 : index
    %c0_103 = arith.constant 0 : index
    %245 = vector.load %arg11[%c0_101, %c0_102, %c0_103] : memref<2x4x256xf32, #tpu.memory_space<vmem>>, vector<1x4x256xf32>
    %246 = vector.shape_cast %245 : vector<1x4x256xf32> to vector<4x256xf32>
    %247 = vector.shape_cast %241 : vector<4x256xf32> to vector<1x4x256xf32>
    tpu.vector_store %arg11[%c0_101, %c0_102, %c0_103], %247 {strides = array<i32>} : memref<2x4x256xf32, #tpu.memory_space<vmem>>, vector<1x4x256xf32>,
    %c1_104 = arith.constant 1 : index
    %c0_105 = arith.constant 0 : index
    %c0_106 = arith.constant 0 : index
    %248 = vector.load %arg11[%c1_104, %c0_105, %c0_106] : memref<2x4x256xf32, #tpu.memory_space<vmem>>, vector<1x4x256xf32>
    %249 = vector.shape_cast %248 : vector<1x4x256xf32> to vector<4x256xf32>
    %250 = vector.shape_cast %244 : vector<4x256xf32> to vector<1x4x256xf32>
    tpu.vector_store %arg11[%c1_104, %c0_105, %c0_106], %250 {strides = array<i32>} : memref<2x4x256xf32, #tpu.memory_space<vmem>>, vector<1x4x256xf32>,
    return
  }
}

</mosaic_0001>

<llo_original>
// kernel: tpu_custom_call.1
$region0: #{tpu_custom_call.1}
  #allocation0 [shape = 'u32[]', space=smem, size = 0x4, offset = 0x4, fixed_abs, tag = 'smem constant byte address 0x4 - core index']
  #allocation1 [shape = 'u32[144,128]{1,0:T(1,128)}', space=vmem, size = 0x12000, scoped, tag = 'internal scratch']
  %s0 = inlined_call_operand.hbm [shape: f32[2,4,256], index: 0, kind: input, shape index: {}]
  %s1 = inlined_call_operand.vmem [shape: f32[24,4], index: 1, kind: input, shape index: {}]
  %s2 = inlined_call_operand.vmem [shape: f32[24,1], index: 2, kind: input, shape index: {}]
  %s3 = inlined_call_operand.vmem [shape: f32[24,1], index: 3, kind: input, shape index: {}]
  %s4 = inlined_call_operand.vmem [shape: f32[9,24,1], index: 4, kind: input, shape index: {}]
  %s5 = inlined_call_operand.hbm [shape: f32[9,256,256], index: 5, kind: input, shape index: {}]
  %s6 = inlined_call_operand.vmem [shape: f32[24,1], index: 6, kind: input, shape index: {}]
  %s7 = inlined_call_operand.vmem [shape: f32[24,1], index: 7, kind: input, shape index: {}]
  %s8 = inlined_call_operand.hbm [shape: f32[4,24], index: 8, kind: input, shape index: {}]
  %s9 = inlined_call_operand.vmem [shape: f32[4,1], index: 9, kind: input, shape index: {}]
  %s10 = inlined_call_operand.vmem [shape: f32[4,1], index: 10, kind: input, shape index: {}]
  %s11 = inlined_call_operand.hbm [shape: f32[2,4,256], index: 11, kind: output, shape index: {}]
  %s12 = sld [smem:[#allocation0]]
  $region66: #{tpu_custom_call.1} parent=0
    _
  %s14 = ssub.s32 1, %s12
  %s15 = scalar_select 0, %s14, %s12
  $region1: #{tpu_custom_call.1} parent=0
    #allocation2 [shape = 'u8[8192]{0}', space=vmem, size = 0x2000, scoped, tag = 'input window, operand 0, single buffered']
    #allocation3 [shape = 's32[1]{0}', space=sflag, size = 0x4, scoped, tag = 'scoped memory for tpu_custom_call.1']
    #allocation4 [shape = 's32[1]{0}', space=sflag, size = 0x4, scoped, tag = 'scoped memory for tpu_custom_call.1']
    #allocation5 [shape = 'u8[2359296]{0}', space=vmem, size = 0x240000, scoped, tag = 'input window, operand 5, single buffered']
    #allocation6 [shape = 's32[1]{0}', space=sflag, size = 0x4, scoped, tag = 'scoped memory for tpu_custom_call.1']
    #allocation7 [shape = 'u8[2048]{0}', space=vmem, size = 0x800, scoped, tag = 'input window, operand 8, single buffered']
    #allocation8 [shape = 'u8[8192]{0}', space=vmem, size = 0x2000, scoped, tag = 'output window, operand 0, single buffered']
    %16 = vsyncpa [#allocation3], 0
    %17 = vsyncpa [#allocation6], 0
    %18 = vsyncpa [#allocation4], 0
    // Predicated region
    $region2: #{tpu_custom_call.1} parent=1 // pred_check
      _
    $region3: #{tpu_custom_call.1} parent=1 // pred_check_branch
      %20 = sbr.rel (0) target = $region5
    $region4: #{tpu_custom_call.1} parent=1 // pred_region
      %s22 = ssub.s32 256, 256
      %23 = vsyncadd [#allocation3], %s22
      %s24 = sshll.u32 [#allocation2], 4
      %s25 = int_to_ptr.vmem [resolvable:$true] %s24
      %30 = dma.hbm_to_vmem [thread:$0]  %s0, 256, %s25, [#allocation3], 128, 128, 8
    $region5: #{tpu_custom_call.1} parent=1 // pred_fallthru
      _
    // Predicated region
    $region6: #{tpu_custom_call.1} parent=1 // pred_check
      _
    $region7: #{tpu_custom_call.1} parent=1 // pred_check_branch
      %32 = sbr.rel (0) target = $region9
    $region8: #{tpu_custom_call.1} parent=1 // pred_region
      _
    $region9: #{tpu_custom_call.1} parent=1 // pred_fallthru
      _
    // Predicated region
    $region10: #{tpu_custom_call.1} parent=1 // pred_check
      _
    $region11: #{tpu_custom_call.1} parent=1 // pred_check_branch
      %34 = sbr.rel (0) target = $region13
    $region12: #{tpu_custom_call.1} parent=1 // pred_region
      _
    $region13: #{tpu_custom_call.1} parent=1 // pred_fallthru
      _
    // Predicated region
    $region14: #{tpu_custom_call.1} parent=1 // pred_check
      _
    $region15: #{tpu_custom_call.1} parent=1 // pred_check_branch
      %36 = sbr.rel (0) target = $region17
    $region16: #{tpu_custom_call.1} parent=1 // pred_region
      _
    $region17: #{tpu_custom_call.1} parent=1 // pred_fallthru
      _
    // Predicated region
    $region18: #{tpu_custom_call.1} parent=1 // pred_check
      _
    $region19: #{tpu_custom_call.1} parent=1 // pred_check_branch
      %38 = sbr.rel (0) target = $region21
    $region20: #{tpu_custom_call.1} parent=1 // pred_region
      _
    $region21: #{tpu_custom_call.1} parent=1 // pred_fallthru
      _
    // Predicated region
    $region22: #{tpu_custom_call.1} parent=1 // pred_check
      _
    $region23: #{tpu_custom_call.1} parent=1 // pred_check_branch
      %40 = sbr.rel (0) target = $region25
    $region24: #{tpu_custom_call.1} parent=1 // pred_region
      %s42 = ssub.s32 73728, 73728
      %43 = vsyncadd [#allocation6], %s42
      %s44 = sshll.u32 [#allocation5], 4
      %s45 = int_to_ptr.vmem [resolvable:$true] %s44
      %50 = dma.hbm_to_vmem [thread:$0]  %s5, 73728, %s45, [#allocation6], 256, 256, 16
    $region25: #{tpu_custom_call.1} parent=1 // pred_fallthru
      _
    // Predicated region
    $region26: #{tpu_custom_call.1} parent=1 // pred_check
      _
    $region27: #{tpu_custom_call.1} parent=1 // pred_check_branch
      %52 = sbr.rel (0) target = $region29
    $region28: #{tpu_custom_call.1} parent=1 // pred_region
      _
    $region29: #{tpu_custom_call.1} parent=1 // pred_fallthru
      _
    // Predicated region
    $region30: #{tpu_custom_call.1} parent=1 // pred_check
      _
    $region31: #{tpu_custom_call.1} parent=1 // pred_check_branch
      %54 = sbr.rel (0) target = $region33
    $region32: #{tpu_custom_call.1} parent=1 // pred_region
      _
    $region33: #{tpu_custom_call.1} parent=1 // pred_fallthru
      _
    // Predicated region
    $region34: #{tpu_custom_call.1} parent=1 // pred_check
      _
    $region35: #{tpu_custom_call.1} parent=1 // pred_check_branch
      %56 = sbr.rel (0) target = $region37
    $region36: #{tpu_custom_call.1} parent=1 // pred_region
      %s58 = ssub.s32 64, 64
      %59 = vsyncadd [#allocation6], %s58
      %s61 = sshll.u32 [#allocation7], 4
      %s62 = int_to_ptr.vmem [resolvable:$true] %s61
      %64 = dma.hbm_to_vmem [thread:$0]  %s8, 64, %s62, [#allocation6]
    $region37: #{tpu_custom_call.1} parent=1 // pred_fallthru
      _
    // Predicated region
    $region38: #{tpu_custom_call.1} parent=1 // pred_check
      _
    $region39: #{tpu_custom_call.1} parent=1 // pred_check_branch
      %66 = sbr.rel (0) target = $region41
    $region40: #{tpu_custom_call.1} parent=1 // pred_region
      _
    $region41: #{tpu_custom_call.1} parent=1 // pred_fallthru
      _
    // Predicated region
    $region42: #{tpu_custom_call.1} parent=1 // pred_check
      _
    $region43: #{tpu_custom_call.1} parent=1 // pred_check_branch
      %68 = sbr.rel (0) target = $region45
    $region44: #{tpu_custom_call.1} parent=1 // pred_region
      _
    $region45: #{tpu_custom_call.1} parent=1 // pred_fallthru
      _
    // Predicated region
    $region46: #{tpu_custom_call.1} parent=1 // pred_check
      _
    $region47: #{tpu_custom_call.1} parent=1 // pred_check_branch
      %70 = sbr.rel (0) target = $region49
    $region48: #{tpu_custom_call.1} parent=1 // pred_region
      %71 = dma.done [#allocation3], 256
    $region49: #{tpu_custom_call.1} parent=1 // pred_fallthru
      _
    // Predicated region
    $region50: #{tpu_custom_call.1} parent=1 // pred_check
      _
    $region51: #{tpu_custom_call.1} parent=1 // pred_check_branch
      %73 = sbr.rel (0) target = $region53
    $region52: #{tpu_custom_call.1} parent=1 // pred_region
      %74 = dma.done [#allocation6], 73728
    $region53: #{tpu_custom_call.1} parent=1 // pred_fallthru
      _
    // Predicated region
    $region54: #{tpu_custom_call.1} parent=1 // pred_check
      _
    $region55: #{tpu_custom_call.1} parent=1 // pred_check_branch
      %76 = sbr.rel (0) target = $region57
    $region56: #{tpu_custom_call.1} parent=1 // pred_region
      %77 = dma.done [#allocation6], 64
    $region57: #{tpu_custom_call.1} parent=1 // pred_fallthru
      _
    %v78 = vld [vmem:[%s1] sm:$0xff]
    %v79 = vld [vmem:[%s1 + $0x8] sm:$0xff]
    %v80 = vld [vmem:[%s1 + $0x10] sm:$0xff]
    %v81 = vld [vmem:[#allocation7] sm:$0xf]
    %v82 = vld [vmem:[%s4] sm:$0xff]
    %v83 = vld [vmem:[%s4 + $0x8] sm:$0xff]
    %v84 = vld [vmem:[%s4 + $0x10] sm:$0xff]
    %v85 = vld [vmem:[%s4 + $0x18] sm:$0xff]
    %v86 = vld [vmem:[%s4 + $0x20] sm:$0xff]
    %v87 = vld [vmem:[%s4 + $0x28] sm:$0xff]
    %v88 = vld [vmem:[%s4 + $0x30] sm:$0xff]
    %v89 = vld [vmem:[%s4 + $0x38] sm:$0xff]
    %v90 = vld [vmem:[%s4 + $0x40] sm:$0xff]
    %v91 = vld [vmem:[%s4 + $0x48] sm:$0xff]
    %v92 = vld [vmem:[%s4 + $0x50] sm:$0xff]
    %v93 = vld [vmem:[%s4 + $0x58] sm:$0xff]
    %v94 = vld [vmem:[%s4 + $0x60] sm:$0xff]
    %v95 = vld [vmem:[%s4 + $0x68] sm:$0xff]
    %v96 = vld [vmem:[%s4 + $0x70] sm:$0xff]
    %v97 = vld [vmem:[%s4 + $0x78] sm:$0xff]
    %v98 = vld [vmem:[%s4 + $0x80] sm:$0xff]
    %v99 = vld [vmem:[%s4 + $0x88] sm:$0xff]
    %v100 = vld [vmem:[%s4 + $0x90] sm:$0xff]
    %v101 = vld [vmem:[%s4 + $0x98] sm:$0xff]
    %v102 = vld [vmem:[%s4 + $0xa0] sm:$0xff]
    %v103 = vld [vmem:[%s4 + $0xa8] sm:$0xff]
    %v104 = vld [vmem:[%s4 + $0xb0] sm:$0xff]
    %v105 = vld [vmem:[%s4 + $0xb8] sm:$0xff]
    %v106 = vld [vmem:[%s4 + $0xc0] sm:$0xff]
    %v107 = vld [vmem:[%s4 + $0xc8] sm:$0xff]
    %v108 = vld [vmem:[%s4 + $0xd0] sm:$0xff]
    %v109 = vld [vmem:[#allocation2] sm:$0xff]
    %v111 = vcombine.high %v109, %v109
    %vm112 = vcmask 31744
    %v114 = vsel %vm112, %v78, 0
    %v117 = vsel %vm112, %v79, 0
    %v120 = vsel %vm112, %v80, 0
    %vm122 = vcmask 1043456
    %v123 = vsel %vm122, %v109, 0
    %v125 = vsel %vm122, %v111, 0
    %127 = vmatprep.subr.mxu0 %v125
    %128 = vmatpush1.msra.mxu0 %v123
    %129 = vmatprep.subr.mxu0 0.0
    %130 = vmatpush1.msra.mxu0 0.0
    %131 = vmatprep.subr.mxu0 0.0
    %132 = vmatpush1.msra.mxu0 0.0
    %133 = vmatprep.subr.mxu0 0.0
    %134 = vmatpush1.msra.mxu0 0.0
    %135 = vmatprep.subr.mxu0 0.0
    %136 = vmatpush1.msra.mxu0 0.0
    %137 = vmatprep.subr.mxu0 0.0
    %138 = vmatpush1.msra.mxu0 0.0
    %139 = vmatprep.subr.mxu0 0.0
    %140 = vmatpush1.msra.mxu0 0.0
    %141 = vmatprep.subr.mxu0 0.0
    %142 = vmatpush1.msra.mxu0 0.0
    %143 = vmatprep.subr.mxu0 0.0
    %144 = vmatpush1.msra.mxu0 0.0
    %145 = vmatprep.subr.mxu0 0.0
    %146 = vmatpush1.msra.mxu0 0.0
    %147 = vmatprep.subr.mxu0 0.0
    %148 = vmatpush1.msra.mxu0 0.0
    %149 = vmatprep.subr.mxu0 0.0
    %150 = vmatpush1.msra.mxu0 0.0
    %151 = vmatprep.subr.mxu0 0.0
    %152 = vmatpush1.msra.mxu0 0.0
    %153 = vmatprep.subr.mxu0 0.0
    %154 = vmatpush1.msra.mxu0 0.0
    %155 = vmatprep.subr.mxu0 0.0
    %156 = vmatpush1.msra.mxu0 0.0
    %157 = vmatprep.subr.mxu0 0.0
    %158 = vmatpush1.msra.mxu0 0.0
    %159 = vmatprep.subr.mxu0 0.0
    %160 = vmatpush1.msra.mxu0 0.0
    %161 = vmatprep.subr.mxu0 0.0
    %162 = vmatpush1.msra.mxu0 0.0
    %163 = vmatprep.subr.mxu0 0.0
    %164 = vmatpush1.msra.mxu0 0.0
    %165 = vmatprep.subr.mxu0 0.0
    %166 = vmatpush1.msra.mxu0 0.0
    %167 = vmatprep.subr.mxu0 0.0
    %168 = vmatpush1.msra.mxu0 0.0
    %169 = vmatprep.subr.mxu0 0.0
    %170 = vmatpush1.msra.mxu0 0.0
    %171 = vmatprep.subr.mxu0 0.0
    %172 = vmatpush1.msra.mxu0 0.0
    %173 = vmatprep.subr.mxu0 0.0
    %174 = vmatpush1.msra.mxu0 0.0
    %175 = vmatprep.subr.mxu0 0.0
    %176 = vmatpush1.msra.mxu0 0.0
    %177 = vmatprep.subr.mxu0 0.0
    %178 = vmatpush1.msra.mxu0 0.0
    %179 = vmatprep.subr.mxu0 0.0
    %180 = vmatpush1.msra.mxu0 0.0
    %181 = vmatprep.subr.mxu0 0.0
    %182 = vmatpush1.msra.mxu0 0.0
    %183 = vmatprep.subr.mxu0 0.0
    %184 = vmatpush1.msra.mxu0 0.0
    %185 = vmatprep.subr.mxu0 0.0
    %186 = vmatpush1.msra.mxu0 0.0
    %187 = vmatprep.subr.mxu0 0.0
    %188 = vmatpush1.msra.mxu0 0.0
    %189 = vmatprep.subr.mxu0 0.0
    %190 = vmatpush1.msra.mxu0 0.0
    %191 = vmatprep.mubr.f32.mxu0 0.0
    %192 = vmatmul.mubr.f32.gmra.mrb[0].mxu0 %v114
    %v193 = vpop.f32.mrb[0].mxu0
    %v194 = vadd.f32 0.0, %v193
    %v195 = vpop.f32.mrb[0].mxu0
    %v196 = vadd.f32 0.0, %v195
    %197 = vmatprep.mubr.f32.mxu0 0.0
    %198 = vmatmul.mubr.f32.gmra.mrb[0].mxu0 %v117
    %v199 = vpop.f32.mrb[0].mxu0
    %v200 = vadd.f32 0.0, %v199
    %v201 = vpop.f32.mrb[0].mxu0
    %v202 = vadd.f32 0.0, %v201
    %203 = vmatprep.mubr.f32.mxu0 0.0
    %204 = vmatmul.mubr.f32.gmra.mrb[0].mxu0 %v120
    %v205 = vpop.f32.mrb[0].mxu0
    %v206 = vadd.f32 0.0, %v205
    %v207 = vpop.f32.mrb[0].mxu0
    %v208 = vadd.f32 0.0, %v207
    %209 = vdwg.mxu0
    %s210 = scalar_lea.vmem [#allocation2], 8
    %v211 = vld [vmem:[%s210] sm:$0xff]
    %v213 = vcombine.high %v211, %v211
    %v214 = vsel %vm122, %v211, 0
    %v216 = vsel %vm122, %v213, 0
    %218 = vmatprep.subr.mxu0 %v216
    %219 = vmatpush1.msra.mxu0 %v214
    %220 = vmatprep.subr.mxu0 0.0
    %221 = vmatpush1.msra.mxu0 0.0
    %222 = vmatprep.subr.mxu0 0.0
    %223 = vmatpush1.msra.mxu0 0.0
    %224 = vmatprep.subr.mxu0 0.0
    %225 = vmatpush1.msra.mxu0 0.0
    %226 = vmatprep.subr.mxu0 0.0
    %227 = vmatpush1.msra.mxu0 0.0
    %228 = vmatprep.subr.mxu0 0.0
    %229 = vmatpush1.msra.mxu0 0.0
    %230 = vmatprep.subr.mxu0 0.0
    %231 = vmatpush1.msra.mxu0 0.0
    %232 = vmatprep.subr.mxu0 0.0
    %233 = vmatpush1.msra.mxu0 0.0
    %234 = vmatprep.subr.mxu0 0.0
    %235 = vmatpush1.msra.mxu0 0.0
    %236 = vmatprep.subr.mxu0 0.0
    %237 = vmatpush1.msra.mxu0 0.0
    %238 = vmatprep.subr.mxu0 0.0
    %239 = vmatpush1.msra.mxu0 0.0
    %240 = vmatprep.subr.mxu0 0.0
    %241 = vmatpush1.msra.mxu0 0.0
    %242 = vmatprep.subr.mxu0 0.0
    %243 = vmatpush1.msra.mxu0 0.0
    %244 = vmatprep.subr.mxu0 0.0
    %245 = vmatpush1.msra.mxu0 0.0
    %246 = vmatprep.subr.mxu0 0.0
    %247 = vmatpush1.msra.mxu0 0.0
    %248 = vmatprep.subr.mxu0 0.0
    %249 = vmatpush1.msra.mxu0 0.0
    %250 = vmatprep.subr.mxu0 0.0
    %251 = vmatpush1.msra.mxu0 0.0
    %252 = vmatprep.subr.mxu0 0.0
    %253 = vmatpush1.msra.mxu0 0.0
    %254 = vmatprep.subr.mxu0 0.0
    %255 = vmatpush1.msra.mxu0 0.0
    %256 = vmatprep.subr.mxu0 0.0
    %257 = vmatpush1.msra.mxu0 0.0
    %258 = vmatprep.subr.mxu0 0.0
    %259 = vmatpush1.msra.mxu0 0.0
    %260 = vmatprep.subr.mxu0 0.0
    %261 = vmatpush1.msra.mxu0 0.0
    %262 = vmatprep.subr.mxu0 0.0
    %263 = vmatpush1.msra.mxu0 0.0
    %264 = vmatprep.subr.mxu0 0.0
    %265 = vmatpush1.msra.mxu0 0.0
    %266 = vmatprep.subr.mxu0 0.0
    %267 = vmatpush1.msra.mxu0 0.0
    %268 = vmatprep.subr.mxu0 0.0
    %269 = vmatpush1.msra.mxu0 0.0
    %270 = vmatprep.subr.mxu0 0.0
    %271 = vmatpush1.msra.mxu0 0.0
    %272 = vmatprep.subr.mxu0 0.0
    %273 = vmatpush1.msra.mxu0 0.0
    %274 = vmatprep.subr.mxu0 0.0
    %275 = vmatpush1.msra.mxu0 0.0
    %276 = vmatprep.subr.mxu0 0.0
    %277 = vmatpush1.msra.mxu0 0.0
    %278 = vmatprep.subr.mxu0 0.0
    %279 = vmatpush1.msra.mxu0 0.0
    %280 = vmatprep.subr.mxu0 0.0
    %281 = vmatpush1.msra.mxu0 0.0
    %282 = vmatprep.mubr.f32.mxu0 0.0
    %283 = vmatmul.mubr.f32.gmra.mrb[0].mxu0 %v114
    %v284 = vpop.f32.mrb[0].mxu0
    %v285 = vadd.f32 0.0, %v284
    %v286 = vpop.f32.mrb[0].mxu0
    %v287 = vadd.f32 0.0, %v286
    %288 = vmatprep.mubr.f32.mxu0 0.0
    %289 = vmatmul.mubr.f32.gmra.mrb[0].mxu0 %v117
    %v290 = vpop.f32.mrb[0].mxu0
    %v291 = vadd.f32 0.0, %v290
    %v292 = vpop.f32.mrb[0].mxu0
    %v293 = vadd.f32 0.0, %v292
    %294 = vmatprep.mubr.f32.mxu0 0.0
    %295 = vmatmul.mubr.f32.gmra.mrb[0].mxu0 %v120
    %v296 = vpop.f32.mrb[0].mxu0
    %v297 = vadd.f32 0.0, %v296
    %v298 = vpop.f32.mrb[0].mxu0
    %v299 = vadd.f32 0.0, %v298
    %300 = vdwg.mxu0
    %v301 = vld [vmem:[%s2] sm:$0xff]
    %v302 = vld [vmem:[%s2 + $0x8] sm:$0xff]
    %v303 = vld [vmem:[%s2 + $0x10] sm:$0xff]
    %v304 = vld [vmem:[%s3] sm:$0xff]
    %v305 = vld [vmem:[%s3 + $0x8] sm:$0xff]
    %v306 = vld [vmem:[%s3 + $0x10] sm:$0xff]
    %v307 = vadd.f32 %v194, %v196
    %308 = vadd.xlane.f32.xlu0 %v307
    %v309 = vpop.xlane.xlu0 %308
    %v310 = vadd.f32 %v200, %v202
    %311 = vadd.xlane.f32.xlu0 %v310
    %v312 = vpop.xlane.xlu0 %311
    %v313 = vadd.f32 %v206, %v208
    %314 = vadd.xlane.f32.xlu0 %v313
    %v315 = vpop.xlane.xlu0 %314
    %v316 = vadd.f32 %v309, 0.0
    %v317 = vadd.f32 %v312, 0.0
    %v318 = vadd.f32 %v315, 0.0
    %v319 = vadd.f32 %v285, %v287
    %320 = vadd.xlane.f32.xlu0 %v319
    %v321 = vpop.xlane.xlu0 %320
    %v322 = vadd.f32 %v291, %v293
    %323 = vadd.xlane.f32.xlu0 %v322
    %v324 = vpop.xlane.xlu0 %323
    %v325 = vadd.f32 %v297, %v299
    %326 = vadd.xlane.f32.xlu0 %v325
    %v327 = vpop.xlane.xlu0 %326
    %v328 = vadd.f32 %v316, %v321
    %v329 = vadd.f32 %v317, %v324
    %v330 = vadd.f32 %v318, %v327
    %v331 = vmul.f32 %v328, 0.001953125
    %v332 = vmul.f32 %v329, 0.001953125
    %v333 = vmul.f32 %v330, 0.001953125
    %v334 = vsub.f32 %v194, %v331
    %v335 = vsub.f32 %v196, %v331
    %v336 = vsub.f32 %v200, %v332
    %v337 = vsub.f32 %v202, %v332
    %v338 = vsub.f32 %v206, %v333
    %v339 = vsub.f32 %v208, %v333
    %v340 = vsub.f32 %v285, %v331
    %v341 = vsub.f32 %v287, %v331
    %v342 = vsub.f32 %v291, %v332
    %v343 = vsub.f32 %v293, %v332
    %v344 = vsub.f32 %v297, %v333
    %v345 = vsub.f32 %v299, %v333
    %v346 = vmul.f32 %v334, %v334
    %v347 = vmul.f32 %v335, %v335
    %v348 = vmul.f32 %v336, %v336
    %v349 = vmul.f32 %v337, %v337
    %v350 = vmul.f32 %v338, %v338
    %v351 = vmul.f32 %v339, %v339
    %v352 = vadd.f32 %v346, %v347
    %353 = vadd.xlane.f32.xlu0 %v352
    %v354 = vpop.xlane.xlu0 %353
    %v355 = vadd.f32 %v348, %v349
    %356 = vadd.xlane.f32.xlu0 %v355
    %v357 = vpop.xlane.xlu0 %356
    %v358 = vadd.f32 %v350, %v351
    %359 = vadd.xlane.f32.xlu0 %v358
    %v360 = vpop.xlane.xlu0 %359
    %v361 = vadd.f32 %v354, 0.0
    %v362 = vadd.f32 %v357, 0.0
    %v363 = vadd.f32 %v360, 0.0
    %v364 = vmul.f32 %v340, %v340
    %v365 = vmul.f32 %v341, %v341
    %v366 = vmul.f32 %v342, %v342
    %v367 = vmul.f32 %v343, %v343
    %v368 = vmul.f32 %v344, %v344
    %v369 = vmul.f32 %v345, %v345
    %v370 = vadd.f32 %v364, %v365
    %371 = vadd.xlane.f32.xlu0 %v370
    %v372 = vpop.xlane.xlu0 %371
    %v373 = vadd.f32 %v366, %v367
    %374 = vadd.xlane.f32.xlu0 %v373
    %v375 = vpop.xlane.xlu0 %374
    %v376 = vadd.f32 %v368, %v369
    %377 = vadd.xlane.f32.xlu0 %v376
    %v378 = vpop.xlane.xlu0 %377
    %v379 = vadd.f32 %v361, %v372
    %v380 = vadd.f32 %v362, %v375
    %v381 = vadd.f32 %v363, %v378
    %v382 = vmul.f32 %v379, 0.001953125
    %v383 = vmul.f32 %v380, 0.001953125
    %v384 = vmul.f32 %v381, 0.001953125
    %v385 = vadd.f32 %v382, 1e-05
    %v386 = vadd.f32 %v383, 1e-05
    %v387 = vadd.f32 %v384, 1e-05
    %v388 = vrsqrt.pop %v385
    %v389 = vrsqrt.pop %v386
    %v390 = vrsqrt.pop %v387
    %v391 = vmul.f32 %v301, %v388
    %v392 = vmul.f32 %v302, %v389
    %v393 = vmul.f32 %v303, %v390
    %395 = vset.pattern.permute.xlu0 0
    %396 = vperm.xlu0 %395, %v391
    %v397 = vpop.permute.xlu0 %396
    %400 = vset.pattern.permute.xlu0 0
    %401 = vperm.xlu0 %400, %v392
    %v402 = vpop.permute.xlu0 %401
    %405 = vset.pattern.permute.xlu0 0
    %406 = vperm.xlu0 %405, %v393
    %v407 = vpop.permute.xlu0 %406
    %v409 = vmul.f32 %v334, %v397
    %v410 = vmul.f32 %v335, %v397
    %v411 = vmul.f32 %v336, %v402
    %v412 = vmul.f32 %v337, %v402
    %v413 = vmul.f32 %v338, %v407
    %v414 = vmul.f32 %v339, %v407
    %416 = vset.pattern.permute.xlu0 0
    %417 = vperm.xlu0 %416, %v304
    %v418 = vpop.permute.xlu0 %417
    %421 = vset.pattern.permute.xlu0 0
    %422 = vperm.xlu0 %421, %v305
    %v423 = vpop.permute.xlu0 %422
    %426 = vset.pattern.permute.xlu0 0
    %427 = vperm.xlu0 %426, %v306
    %v428 = vpop.permute.xlu0 %427
    %v430 = vadd.f32 %v409, %v418
    %v431 = vadd.f32 %v410, %v418
    %v432 = vadd.f32 %v411, %v423
    %v433 = vadd.f32 %v412, %v423
    %v434 = vadd.f32 %v413, %v428
    %v435 = vadd.f32 %v414, %v428
    %v436 = vmax.f32 %v430, 0.0
    %v437 = vmax.f32 %v431, 0.0
    %v438 = vmax.f32 %v432, 0.0
    %v439 = vmax.f32 %v433, 0.0
    %v440 = vmax.f32 %v434, 0.0
    %v441 = vmax.f32 %v435, 0.0
    %v442 = vmul.f32 %v340, %v397
    %v443 = vmul.f32 %v341, %v397
    %v444 = vmul.f32 %v342, %v402
    %v445 = vmul.f32 %v343, %v402
    %v446 = vmul.f32 %v344, %v407
    %v447 = vmul.f32 %v345, %v407
    %v448 = vadd.f32 %v442, %v418
    %v449 = vadd.f32 %v443, %v418
    %v450 = vadd.f32 %v444, %v423
    %v451 = vadd.f32 %v445, %v423
    %v452 = vadd.f32 %v446, %v428
    %v453 = vadd.f32 %v447, %v428
    %v454 = vmax.f32 %v448, 0.0
    %v455 = vmax.f32 %v449, 0.0
    %v456 = vmax.f32 %v450, 0.0
    %v457 = vmax.f32 %v451, 0.0
    %v458 = vmax.f32 %v452, 0.0
    %v459 = vmax.f32 %v453, 0.0
    %v460 = vld [vmem:[#allocation5] sm:$0xff]
    %v461 = vld [vmem:[#allocation5 + $0x8] sm:$0xff]
    %v462 = vld [vmem:[#allocation5 + $0x10] sm:$0xff]
    %v463 = vld [vmem:[#allocation5 + $0x18] sm:$0xff]
    %v464 = vld [vmem:[#allocation5 + $0x20] sm:$0xff]
    %v465 = vld [vmem:[#allocation5 + $0x28] sm:$0xff]
    %v466 = vld [vmem:[#allocation5 + $0x30] sm:$0xff]
    %v467 = vld [vmem:[#allocation5 + $0x38] sm:$0xff]
    %v468 = vld [vmem:[#allocation5 + $0x40] sm:$0xff]
    %v469 = vld [vmem:[#allocation5 + $0x48] sm:$0xff]
    %v470 = vld [vmem:[#allocation5 + $0x50] sm:$0xff]
    %v471 = vld [vmem:[#allocation5 + $0x58] sm:$0xff]
    %v472 = vld [vmem:[#allocation5 + $0x60] sm:$0xff]
    %v473 = vld [vmem:[#allocation5 + $0x68] sm:$0xff]
    %v474 = vld [vmem:[#allocation5 + $0x70] sm:$0xff]
    %v475 = vld [vmem:[#allocation5 + $0x78] sm:$0xff]
    %v476 = vld [vmem:[#allocation5 + $0x80] sm:$0xff]
    %v477 = vld [vmem:[#allocation5 + $0x88] sm:$0xff]
    %v478 = vld [vmem:[#allocation5 + $0x90] sm:$0xff]
    %v479 = vld [vmem:[#allocation5 + $0x98] sm:$0xff]
    %v480 = vld [vmem:[#allocation5 + $0xa0] sm:$0xff]
    %v481 = vld [vmem:[#allocation5 + $0xa8] sm:$0xff]
    %v482 = vld [vmem:[#allocation5 + $0xb0] sm:$0xff]
    %v483 = vld [vmem:[#allocation5 + $0xb8] sm:$0xff]
    %v484 = vld [vmem:[#allocation5 + $0xc0] sm:$0xff]
    %v485 = vld [vmem:[#allocation5 + $0xc8] sm:$0xff]
    %v486 = vld [vmem:[#allocation5 + $0xd0] sm:$0xff]
    %v487 = vld [vmem:[#allocation5 + $0xd8] sm:$0xff]
    %v488 = vld [vmem:[#allocation5 + $0xe0] sm:$0xff]
    %v489 = vld [vmem:[#allocation5 + $0xe8] sm:$0xff]
    %v490 = vld [vmem:[#allocation5 + $0xf0] sm:$0xff]
    %v491 = vld [vmem:[#allocation5 + $0xf8] sm:$0xff]
    %v492 = vld [vmem:[#allocation5 + $0x100] sm:$0xff]
    %v493 = vld [vmem:[#allocation5 + $0x108] sm:$0xff]
    %v494 = vld [vmem:[#allocation5 + $0x110] sm:$0xff]
    %v495 = vld [vmem:[#allocation5 + $0x118] sm:$0xff]
    %v496 = vld [vmem:[#allocation5 + $0x120] sm:$0xff]
    %v497 = vld [vmem:[#allocation5 + $0x128] sm:$0xff]
    %v498 = vld [vmem:[#allocation5 + $0x130] sm:$0xff]
    %v499 = vld [vmem:[#allocation5 + $0x138] sm:$0xff]
    %v500 = vld [vmem:[#allocation5 + $0x140] sm:$0xff]
    %v501 = vld [vmem:[#allocation5 + $0x148] sm:$0xff]
    %v502 = vld [vmem:[#allocation5 + $0x150] sm:$0xff]
    %v503 = vld [vmem:[#allocation5 + $0x158] sm:$0xff]
    %v504 = vld [vmem:[#allocation5 + $0x160] sm:$0xff]
    %v505 = vld [vmem:[#allocation5 + $0x168] sm:$0xff]
    %v506 = vld [vmem:[#allocation5 + $0x170] sm:$0xff]
    %v507 = vld [vmem:[#allocation5 + $0x178] sm:$0xff]
    %v508 = vld [vmem:[#allocation5 + $0x180] sm:$0xff]
    %v509 = vld [vmem:[#allocation5 + $0x188] sm:$0xff]
    %v510 = vld [vmem:[#allocation5 + $0x190] sm:$0xff]
    %v511 = vld [vmem:[#allocation5 + $0x198] sm:$0xff]
    %v512 = vld [vmem:[#allocation5 + $0x1a0] sm:$0xff]
    %v513 = vld [vmem:[#allocation5 + $0x1a8] sm:$0xff]
    %v514 = vld [vmem:[#allocation5 + $0x1b0] sm:$0xff]
    %v515 = vld [vmem:[#allocation5 + $0x1b8] sm:$0xff]
    %v516 = vld [vmem:[#allocation5 + $0x1c0] sm:$0xff]
    %v517 = vld [vmem:[#allocation5 + $0x1c8] sm:$0xff]
    %v518 = vld [vmem:[#allocation5 + $0x1d0] sm:$0xff]
    %v519 = vld [vmem:[#allocation5 + $0x1d8] sm:$0xff]
    %v520 = vld [vmem:[#allocation5 + $0x1e0] sm:$0xff]
    %v521 = vld [vmem:[#allocation5 + $0x1e8] sm:$0xff]
    %v522 = vld [vmem:[#allocation5 + $0x1f0] sm:$0xff]
    %v523 = vld [vmem:[#allocation5 + $0x1f8] sm:$0xff]
    %525 = vset.pattern.permute.xlu0 0
    %526 = vperm.xlu0 %525, %v82
    %v527 = vpop.permute.xlu0 %526
    %530 = vset.pattern.permute.xlu0 0
    %531 = vperm.xlu0 %530, %v83
    %v532 = vpop.permute.xlu0 %531
    %535 = vset.pattern.permute.xlu0 0
    %536 = vperm.xlu0 %535, %v84
    %v537 = vpop.permute.xlu0 %536
    %v539 = vmul.f32 %v436, %v527
    %v540 = vmul.f32 %v437, %v527
    %v541 = vmul.f32 %v438, %v532
    %v542 = vmul.f32 %v439, %v532
    %v543 = vmul.f32 %v440, %v537
    %v544 = vmul.f32 %v441, %v537
    %v545 = vmul.f32 %v454, %v527
    %v546 = vmul.f32 %v455, %v527
    %v547 = vmul.f32 %v456, %v532
    %v548 = vmul.f32 %v457, %v532
    %v549 = vmul.f32 %v458, %v537
    %v550 = vmul.f32 %v459, %v537
    %s551 = scalar_lea.vmem [#allocation5], 512
    %v552 = vld [vmem:[%s551] sm:$0xff]
    %v553 = vld [vmem:[%s551 + $0x8] sm:$0xff]
    %v554 = vld [vmem:[%s551 + $0x10] sm:$0xff]
    %v555 = vld [vmem:[%s551 + $0x18] sm:$0xff]
    %v556 = vld [vmem:[%s551 + $0x20] sm:$0xff]
    %v557 = vld [vmem:[%s551 + $0x28] sm:$0xff]
    %v558 = vld [vmem:[%s551 + $0x30] sm:$0xff]
    %v559 = vld [vmem:[%s551 + $0x38] sm:$0xff]
    %v560 = vld [vmem:[%s551 + $0x40] sm:$0xff]
    %v561 = vld [vmem:[%s551 + $0x48] sm:$0xff]
    %v562 = vld [vmem:[%s551 + $0x50] sm:$0xff]
    %v563 = vld [vmem:[%s551 + $0x58] sm:$0xff]
    %v564 = vld [vmem:[%s551 + $0x60] sm:$0xff]
    %v565 = vld [vmem:[%s551 + $0x68] sm:$0xff]
    %v566 = vld [vmem:[%s551 + $0x70] sm:$0xff]
    %v567 = vld [vmem:[%s551 + $0x78] sm:$0xff]
    %v568 = vld [vmem:[%s551 + $0x80] sm:$0xff]
    %v569 = vld [vmem:[%s551 + $0x88] sm:$0xff]
    %v570 = vld [vmem:[%s551 + $0x90] sm:$0xff]
    %v571 = vld [vmem:[%s551 + $0x98] sm:$0xff]
    %v572 = vld [vmem:[%s551 + $0xa0] sm:$0xff]
    %v573 = vld [vmem:[%s551 + $0xa8] sm:$0xff]
    %v574 = vld [vmem:[%s551 + $0xb0] sm:$0xff]
    %v575 = vld [vmem:[%s551 + $0xb8] sm:$0xff]
    %v576 = vld [vmem:[%s551 + $0xc0] sm:$0xff]
    %v577 = vld [vmem:[%s551 + $0xc8] sm:$0xff]
    %v578 = vld [vmem:[%s551 + $0xd0] sm:$0xff]
    %v579 = vld [vmem:[%s551 + $0xd8] sm:$0xff]
    %v580 = vld [vmem:[%s551 + $0xe0] sm:$0xff]
    %v581 = vld [vmem:[%s551 + $0xe8] sm:$0xff]
    %v582 = vld [vmem:[%s551 + $0xf0] sm:$0xff]
    %v583 = vld [vmem:[%s551 + $0xf8] sm:$0xff]
    %v584 = vld [vmem:[%s551 + $0x100] sm:$0xff]
    %v585 = vld [vmem:[%s551 + $0x108] sm:$0xff]
    %v586 = vld [vmem:[%s551 + $0x110] sm:$0xff]
    %v587 = vld [vmem:[%s551 + $0x118] sm:$0xff]
    %v588 = vld [vmem:[%s551 + $0x120] sm:$0xff]
    %v589 = vld [vmem:[%s551 + $0x128] sm:$0xff]
    %v590 = vld [vmem:[%s551 + $0x130] sm:$0xff]
    %v591 = vld [vmem:[%s551 + $0x138] sm:$0xff]
    %v592 = vld [vmem:[%s551 + $0x140] sm:$0xff]
    %v593 = vld [vmem:[%s551 + $0x148] sm:$0xff]
    %v594 = vld [vmem:[%s551 + $0x150] sm:$0xff]
    %v595 = vld [vmem:[%s551 + $0x158] sm:$0xff]
    %v596 = vld [vmem:[%s551 + $0x160] sm:$0xff]
    %v597 = vld [vmem:[%s551 + $0x168] sm:$0xff]
    %v598 = vld [vmem:[%s551 + $0x170] sm:$0xff]
    %v599 = vld [vmem:[%s551 + $0x178] sm:$0xff]
    %v600 = vld [vmem:[%s551 + $0x180] sm:$0xff]
    %v601 = vld [vmem:[%s551 + $0x188] sm:$0xff]
    %v602 = vld [vmem:[%s551 + $0x190] sm:$0xff]
    %v603 = vld [vmem:[%s551 + $0x198] sm:$0xff]
    %v604 = vld [vmem:[%s551 + $0x1a0] sm:$0xff]
    %v605 = vld [vmem:[%s551 + $0x1a8] sm:$0xff]
    %v606 = vld [vmem:[%s551 + $0x1b0] sm:$0xff]
    %v607 = vld [vmem:[%s551 + $0x1b8] sm:$0xff]
    %v608 = vld [vmem:[%s551 + $0x1c0] sm:$0xff]
    %v609 = vld [vmem:[%s551 + $0x1c8] sm:$0xff]
    %v610 = vld [vmem:[%s551 + $0x1d0] sm:$0xff]
    %v611 = vld [vmem:[%s551 + $0x1d8] sm:$0xff]
    %v612 = vld [vmem:[%s551 + $0x1e0] sm:$0xff]
    %v613 = vld [vmem:[%s551 + $0x1e8] sm:$0xff]
    %v614 = vld [vmem:[%s551 + $0x1f0] sm:$0xff]
    %v615 = vld [vmem:[%s551 + $0x1f8] sm:$0xff]
    %617 = vset.pattern.permute.xlu0 0
    %618 = vperm.xlu0 %617, %v85
    %v619 = vpop.permute.xlu0 %618
    %622 = vset.pattern.permute.xlu0 0
    %623 = vperm.xlu0 %622, %v86
    %v624 = vpop.permute.xlu0 %623
    %627 = vset.pattern.permute.xlu0 0
    %628 = vperm.xlu0 %627, %v87
    %v629 = vpop.permute.xlu0 %628
    %v631 = vmul.f32 %v436, %v619
    %v632 = vmul.f32 %v437, %v619
    %v633 = vmul.f32 %v438, %v624
    %v634 = vmul.f32 %v439, %v624
    %v635 = vmul.f32 %v440, %v629
    %v636 = vmul.f32 %v441, %v629
    %637 = vmatprep.subr.mxu0 %v553
    %638 = vmatpush1.msra.mxu0 %v552
    %639 = vmatprep.subr.mxu0 %v555
    %640 = vmatpush1.msra.mxu0 %v554
    %641 = vmatprep.subr.mxu0 %v557
    %642 = vmatpush1.msra.mxu0 %v556
    %643 = vmatprep.subr.mxu0 %v559
    %644 = vmatpush1.msra.mxu0 %v558
    %645 = vmatprep.subr.mxu0 %v561
    %646 = vmatpush1.msra.mxu0 %v560
    %647 = vmatprep.subr.mxu0 %v563
    %648 = vmatpush1.msra.mxu0 %v562
    %649 = vmatprep.subr.mxu0 %v565
    %650 = vmatpush1.msra.mxu0 %v564
    %651 = vmatprep.subr.mxu0 %v567
    %652 = vmatpush1.msra.mxu0 %v566
    %653 = vmatprep.subr.mxu0 %v569
    %654 = vmatpush1.msra.mxu0 %v568
    %655 = vmatprep.subr.mxu0 %v571
    %656 = vmatpush1.msra.mxu0 %v570
    %657 = vmatprep.subr.mxu0 %v573
    %658 = vmatpush1.msra.mxu0 %v572
    %659 = vmatprep.subr.mxu0 %v575
    %660 = vmatpush1.msra.mxu0 %v574
    %661 = vmatprep.subr.mxu0 %v577
    %662 = vmatpush1.msra.mxu0 %v576
    %663 = vmatprep.subr.mxu0 %v579
    %664 = vmatpush1.msra.mxu0 %v578
    %665 = vmatprep.subr.mxu0 %v581
    %666 = vmatpush1.msra.mxu0 %v580
    %667 = vmatprep.subr.mxu0 %v583
    %668 = vmatpush1.msra.mxu0 %v582
    %669 = vmatprep.subr.mxu0 %v585
    %670 = vmatpush1.msra.mxu0 %v584
    %671 = vmatprep.subr.mxu0 %v587
    %672 = vmatpush1.msra.mxu0 %v586
    %673 = vmatprep.subr.mxu0 %v589
    %674 = vmatpush1.msra.mxu0 %v588
    %675 = vmatprep.subr.mxu0 %v591
    %676 = vmatpush1.msra.mxu0 %v590
    %677 = vmatprep.subr.mxu0 %v593
    %678 = vmatpush1.msra.mxu0 %v592
    %679 = vmatprep.subr.mxu0 %v595
    %680 = vmatpush1.msra.mxu0 %v594
    %681 = vmatprep.subr.mxu0 %v597
    %682 = vmatpush1.msra.mxu0 %v596
    %683 = vmatprep.subr.mxu0 %v599
    %684 = vmatpush1.msra.mxu0 %v598
    %685 = vmatprep.subr.mxu0 %v601
    %686 = vmatpush1.msra.mxu0 %v600
    %687 = vmatprep.subr.mxu0 %v603
    %688 = vmatpush1.msra.mxu0 %v602
    %689 = vmatprep.subr.mxu0 %v605
    %690 = vmatpush1.msra.mxu0 %v604
    %691 = vmatprep.subr.mxu0 %v607
    %692 = vmatpush1.msra.mxu0 %v606
    %693 = vmatprep.subr.mxu0 %v609
    %694 = vmatpush1.msra.mxu0 %v608
    %695 = vmatprep.subr.mxu0 %v611
    %696 = vmatpush1.msra.mxu0 %v610
    %697 = vmatprep.subr.mxu0 %v613
    %698 = vmatpush1.msra.mxu0 %v612
    %699 = vmatprep.subr.mxu0 %v615
    %700 = vmatpush1.msra.mxu0 %v614
    %701 = vmatprep.mubr.f32.mxu0 %v632
    %702 = vmatmul.mubr.f32.gmra.mrb[0].mxu0 %v631
    %v703 = vpop.f32.mrb[0].mxu0
    %v704 = vadd.f32 0.0, %v703
    %v705 = vpop.f32.mrb[0].mxu0
    %v706 = vadd.f32 0.0, %v705
    %707 = vmatprep.mubr.f32.mxu0 %v634
    %708 = vmatmul.mubr.f32.gmra.mrb[0].mxu0 %v633
    %v709 = vpop.f32.mrb[0].mxu0
    %v710 = vadd.f32 0.0, %v709
    %v711 = vpop.f32.mrb[0].mxu0
    %v712 = vadd.f32 0.0, %v711
    %713 = vmatprep.mubr.f32.mxu0 %v636
    %714 = vmatmul.mubr.f32.gmra.mrb[0].mxu0 %v635
    %v715 = vpop.f32.mrb[0].mxu0
    %v716 = vadd.f32 0.0, %v715
    %v717 = vpop.f32.mrb[0].mxu0
    %v718 = vadd.f32 0.0, %v717
    %719 = vdwg.mxu0
    %720 = vmatprep.subr.mxu0 %v461
    %721 = vmatpush1.msra.mxu0 %v460
    %722 = vmatprep.subr.mxu0 %v463
    %723 = vmatpush1.msra.mxu0 %v462
    %724 = vmatprep.subr.mxu0 %v465
    %725 = vmatpush1.msra.mxu0 %v464
    %726 = vmatprep.subr.mxu0 %v467
    %727 = vmatpush1.msra.mxu0 %v466
    %728 = vmatprep.subr.mxu0 %v469
    %729 = vmatpush1.msra.mxu0 %v468
    %730 = vmatprep.subr.mxu0 %v471
    %731 = vmatpush1.msra.mxu0 %v470
    %732 = vmatprep.subr.mxu0 %v473
    %733 = vmatpush1.msra.mxu0 %v472
    %734 = vmatprep.subr.mxu0 %v475
    %735 = vmatpush1.msra.mxu0 %v474
    %736 = vmatprep.subr.mxu0 %v477
    %737 = vmatpush1.msra.mxu0 %v476
    %738 = vmatprep.subr.mxu0 %v479
    %739 = vmatpush1.msra.mxu0 %v478
    %740 = vmatprep.subr.mxu0 %v481
    %741 = vmatpush1.msra.mxu0 %v480
    %742 = vmatprep.subr.mxu0 %v483
    %743 = vmatpush1.msra.mxu0 %v482
    %744 = vmatprep.subr.mxu0 %v485
    %745 = vmatpush1.msra.mxu0 %v484
    %746 = vmatprep.subr.mxu0 %v487
    %747 = vmatpush1.msra.mxu0 %v486
    %748 = vmatprep.subr.mxu0 %v489
    %749 = vmatpush1.msra.mxu0 %v488
    %750 = vmatprep.subr.mxu0 %v491
    %751 = vmatpush1.msra.mxu0 %v490
    %752 = vmatprep.subr.mxu0 %v493
    %753 = vmatpush1.msra.mxu0 %v492
    %754 = vmatprep.subr.mxu0 %v495
    %755 = vmatpush1.msra.mxu0 %v494
    %756 = vmatprep.subr.mxu0 %v497
    %757 = vmatpush1.msra.mxu0 %v496
    %758 = vmatprep.subr.mxu0 %v499
    %759 = vmatpush1.msra.mxu0 %v498
    %760 = vmatprep.subr.mxu0 %v501
    %761 = vmatpush1.msra.mxu0 %v500
    %762 = vmatprep.subr.mxu0 %v503
    %763 = vmatpush1.msra.mxu0 %v502
    %764 = vmatprep.subr.mxu0 %v505
    %765 = vmatpush1.msra.mxu0 %v504
    %766 = vmatprep.subr.mxu0 %v507
    %767 = vmatpush1.msra.mxu0 %v506
    %768 = vmatprep.subr.mxu0 %v509
    %769 = vmatpush1.msra.mxu0 %v508
    %770 = vmatprep.subr.mxu0 %v511
    %771 = vmatpush1.msra.mxu0 %v510
    %772 = vmatprep.subr.mxu0 %v513
    %773 = vmatpush1.msra.mxu0 %v512
    %774 = vmatprep.subr.mxu0 %v515
    %775 = vmatpush1.msra.mxu0 %v514
    %776 = vmatprep.subr.mxu0 %v517
    %777 = vmatpush1.msra.mxu0 %v516
    %778 = vmatprep.subr.mxu0 %v519
    %779 = vmatpush1.msra.mxu0 %v518
    %780 = vmatprep.subr.mxu0 %v521
    %781 = vmatpush1.msra.mxu0 %v520
    %782 = vmatprep.subr.mxu0 %v523
    %783 = vmatpush1.msra.mxu0 %v522
    %784 = vmatprep.mubr.f32.mxu0 %v540
    %785 = vmatmul.mubr.f32.gmra.mrb[0].mxu0 %v539
    %v786 = vpop.f32.mrb[0].mxu0
    %v787 = vadd.f32 %v704, %v786
    %v788 = vpop.f32.mrb[0].mxu0
    %v789 = vadd.f32 %v706, %v788
    %790 = vmatprep.mubr.f32.mxu0 %v542
    %791 = vmatmul.mubr.f32.gmra.mrb[0].mxu0 %v541
    %v792 = vpop.f32.mrb[0].mxu0
    %v793 = vadd.f32 %v710, %v792
    %v794 = vpop.f32.mrb[0].mxu0
    %v795 = vadd.f32 %v712, %v794
    %796 = vmatprep.mubr.f32.mxu0 %v544
    %797 = vmatmul.mubr.f32.gmra.mrb[0].mxu0 %v543
    %v798 = vpop.f32.mrb[0].mxu0
    %v799 = vadd.f32 %v716, %v798
    %v800 = vpop.f32.mrb[0].mxu0
    %v801 = vadd.f32 %v718, %v800
    %802 = vdwg.mxu0
    %v803 = vmul.f32 %v454, %v619
    %v804 = vmul.f32 %v455, %v619
    %v805 = vmul.f32 %v456, %v624
    %v806 = vmul.f32 %v457, %v624
    %v807 = vmul.f32 %v458, %v629
    %v808 = vmul.f32 %v459, %v629
    %809 = vmatprep.subr.mxu0 %v553
    %810 = vmatpush1.msra.mxu0 %v552
    %811 = vmatprep.subr.mxu0 %v555
    %812 = vmatpush1.msra.mxu0 %v554
    %813 = vmatprep.subr.mxu0 %v557
    %814 = vmatpush1.msra.mxu0 %v556
    %815 = vmatprep.subr.mxu0 %v559
    %816 = vmatpush1.msra.mxu0 %v558
    %817 = vmatprep.subr.mxu0 %v561
    %818 = vmatpush1.msra.mxu0 %v560
    %819 = vmatprep.subr.mxu0 %v563
    %820 = vmatpush1.msra.mxu0 %v562
    %821 = vmatprep.subr.mxu0 %v565
    %822 = vmatpush1.msra.mxu0 %v564
    %823 = vmatprep.subr.mxu0 %v567
    %824 = vmatpush1.msra.mxu0 %v566
    %825 = vmatprep.subr.mxu0 %v569
    %826 = vmatpush1.msra.mxu0 %v568
    %827 = vmatprep.subr.mxu0 %v571
    %828 = vmatpush1.msra.mxu0 %v570
    %829 = vmatprep.subr.mxu0 %v573
    %830 = vmatpush1.msra.mxu0 %v572
    %831 = vmatprep.subr.mxu0 %v575
    %832 = vmatpush1.msra.mxu0 %v574
    %833 = vmatprep.subr.mxu0 %v577
    %834 = vmatpush1.msra.mxu0 %v576
    %835 = vmatprep.subr.mxu0 %v579
    %836 = vmatpush1.msra.mxu0 %v578
    %837 = vmatprep.subr.mxu0 %v581
    %838 = vmatpush1.msra.mxu0 %v580
    %839 = vmatprep.subr.mxu0 %v583
    %840 = vmatpush1.msra.mxu0 %v582
    %841 = vmatprep.subr.mxu0 %v585
    %842 = vmatpush1.msra.mxu0 %v584
    %843 = vmatprep.subr.mxu0 %v587
    %844 = vmatpush1.msra.mxu0 %v586
    %845 = vmatprep.subr.mxu0 %v589
    %846 = vmatpush1.msra.mxu0 %v588
    %847 = vmatprep.subr.mxu0 %v591
    %848 = vmatpush1.msra.mxu0 %v590
    %849 = vmatprep.subr.mxu0 %v593
    %850 = vmatpush1.msra.mxu0 %v592
    %851 = vmatprep.subr.mxu0 %v595
    %852 = vmatpush1.msra.mxu0 %v594
    %853 = vmatprep.subr.mxu0 %v597
    %854 = vmatpush1.msra.mxu0 %v596
    %855 = vmatprep.subr.mxu0 %v599
    %856 = vmatpush1.msra.mxu0 %v598
    %857 = vmatprep.subr.mxu0 %v601
    %858 = vmatpush1.msra.mxu0 %v600
    %859 = vmatprep.subr.mxu0 %v603
    %860 = vmatpush1.msra.mxu0 %v602
    %861 = vmatprep.subr.mxu0 %v605
    %862 = vmatpush1.msra.mxu0 %v604
    %863 = vmatprep.subr.mxu0 %v607
    %864 = vmatpush1.msra.mxu0 %v606
    %865 = vmatprep.subr.mxu0 %v609
    %866 = vmatpush1.msra.mxu0 %v608
    %867 = vmatprep.subr.mxu0 %v611
    %868 = vmatpush1.msra.mxu0 %v610
    %869 = vmatprep.subr.mxu0 %v613
    %870 = vmatpush1.msra.mxu0 %v612
    %871 = vmatprep.subr.mxu0 %v615
    %872 = vmatpush1.msra.mxu0 %v614
    %873 = vmatprep.mubr.f32.mxu0 %v804
    %874 = vmatmul.mubr.f32.gmra.mrb[0].mxu0 %v803
    %v875 = vpop.f32.mrb[0].mxu0
    %v876 = vadd.f32 0.0, %v875
    %v877 = vpop.f32.mrb[0].mxu0
    %v878 = vadd.f32 0.0, %v877
    %879 = vmatprep.mubr.f32.mxu0 %v806
    %880 = vmatmul.mubr.f32.gmra.mrb[0].mxu0 %v805
    %v881 = vpop.f32.mrb[0].mxu0
    %v882 = vadd.f32 0.0, %v881
    %v883 = vpop.f32.mrb[0].mxu0
    %v884 = vadd.f32 0.0, %v883
    %885 = vmatprep.mubr.f32.mxu0 %v808
    %886 = vmatmul.mubr.f32.gmra.mrb[0].mxu0 %v807
    %v887 = vpop.f32.mrb[0].mxu0
    %v888 = vadd.f32 0.0, %v887
    %v889 = vpop.f32.mrb[0].mxu0
    %v890 = vadd.f32 0.0, %v889
    %891 = vdwg.mxu0
    %892 = vmatprep.subr.mxu0 %v461
    %893 = vmatpush1.msra.mxu0 %v460
    %894 = vmatprep.subr.mxu0 %v463
    %895 = vmatpush1.msra.mxu0 %v462
    %896 = vmatprep.subr.mxu0 %v465
    %897 = vmatpush1.msra.mxu0 %v464
    %898 = vmatprep.subr.mxu0 %v467
    %899 = vmatpush1.msra.mxu0 %v466
    %900 = vmatprep.subr.mxu0 %v469
    %901 = vmatpush1.msra.mxu0 %v468
    %902 = vmatprep.subr.mxu0 %v471
    %903 = vmatpush1.msra.mxu0 %v470
    %904 = vmatprep.subr.mxu0 %v473
    %905 = vmatpush1.msra.mxu0 %v472
    %906 = vmatprep.subr.mxu0 %v475
    %907 = vmatpush1.msra.mxu0 %v474
    %908 = vmatprep.subr.mxu0 %v477
    %909 = vmatpush1.msra.mxu0 %v476
    %910 = vmatprep.subr.mxu0 %v479
    %911 = vmatpush1.msra.mxu0 %v478
    %912 = vmatprep.subr.mxu0 %v481
    %913 = vmatpush1.msra.mxu0 %v480
    %914 = vmatprep.subr.mxu0 %v483
    %915 = vmatpush1.msra.mxu0 %v482
    %916 = vmatprep.subr.mxu0 %v485
    %917 = vmatpush1.msra.mxu0 %v484
    %918 = vmatprep.subr.mxu0 %v487
    %919 = vmatpush1.msra.mxu0 %v486
    %920 = vmatprep.subr.mxu0 %v489
    %921 = vmatpush1.msra.mxu0 %v488
    %922 = vmatprep.subr.mxu0 %v491
    %923 = vmatpush1.msra.mxu0 %v490
    %924 = vmatprep.subr.mxu0 %v493
    %925 = vmatpush1.msra.mxu0 %v492
    %926 = vmatprep.subr.mxu0 %v495
    %927 = vmatpush1.msra.mxu0 %v494
    %928 = vmatprep.subr.mxu0 %v497
    %929 = vmatpush1.msra.mxu0 %v496
    %930 = vmatprep.subr.mxu0 %v499
    %931 = vmatpush1.msra.mxu0 %v498
    %932 = vmatprep.subr.mxu0 %v501
    %933 = vmatpush1.msra.mxu0 %v500
    %934 = vmatprep.subr.mxu0 %v503
    %935 = vmatpush1.msra.mxu0 %v502
    %936 = vmatprep.subr.mxu0 %v505
    %937 = vmatpush1.msra.mxu0 %v504
    %938 = vmatprep.subr.mxu0 %v507
    %939 = vmatpush1.msra.mxu0 %v506
    %940 = vmatprep.subr.mxu0 %v509
    %941 = vmatpush1.msra.mxu0 %v508
    %942 = vmatprep.subr.mxu0 %v511
    %943 = vmatpush1.msra.mxu0 %v510
    %944 = vmatprep.subr.mxu0 %v513
    %945 = vmatpush1.msra.mxu0 %v512
    %946 = vmatprep.subr.mxu0 %v515
    %947 = vmatpush1.msra.mxu0 %v514
    %948 = vmatprep.subr.mxu0 %v517
    %949 = vmatpush1.msra.mxu0 %v516
    %950 = vmatprep.subr.mxu0 %v519
    %951 = vmatpush1.msra.mxu0 %v518
    %952 = vmatprep.subr.mxu0 %v521
    %953 = vmatpush1.msra.mxu0 %v520
    %954 = vmatprep.subr.mxu0 %v523
    %955 = vmatpush1.msra.mxu0 %v522
    %956 = vmatprep.mubr.f32.mxu0 %v546
    %957 = vmatmul.mubr.f32.gmra.mrb[0].mxu0 %v545
    %v958 = vpop.f32.mrb[0].mxu0
    %v959 = vadd.f32 %v876, %v958
    %v960 = vpop.f32.mrb[0].mxu0
    %v961 = vadd.f32 %v878, %v960
    %962 = vmatprep.mubr.f32.mxu0 %v548
    %963 = vmatmul.mubr.f32.gmra.mrb[0].mxu0 %v547
    %v964 = vpop.f32.mrb[0].mxu0
    %v965 = vadd.f32 %v882, %v964
    %v966 = vpop.f32.mrb[0].mxu0
    %v967 = vadd.f32 %v884, %v966
    %968 = vmatprep.mubr.f32.mxu0 %v550
    %969 = vmatmul.mubr.f32.gmra.mrb[0].mxu0 %v549
    %v970 = vpop.f32.mrb[0].mxu0
    %v971 = vadd.f32 %v888, %v970
    %v972 = vpop.f32.mrb[0].mxu0
    %v973 = vadd.f32 %v890, %v972
    %974 = vdwg.mxu0
    %s975 = scalar_lea.vmem [#allocation5], 1024
    %v976 = vld [vmem:[%s975] sm:$0xff]
    %v977 = vld [vmem:[%s975 + $0x8] sm:$0xff]
    %v978 = vld [vmem:[%s975 + $0x10] sm:$0xff]
    %v979 = vld [vmem:[%s975 + $0x18] sm:$0xff]
    %v980 = vld [vmem:[%s975 + $0x20] sm:$0xff]
    %v981 = vld [vmem:[%s975 + $0x28] sm:$0xff]
    %v982 = vld [vmem:[%s975 + $0x30] sm:$0xff]
    %v983 = vld [vmem:[%s975 + $0x38] sm:$0xff]
    %v984 = vld [vmem:[%s975 + $0x40] sm:$0xff]
    %v985 = vld [vmem:[%s975 + $0x48] sm:$0xff]
    %v986 = vld [vmem:[%s975 + $0x50] sm:$0xff]
    %v987 = vld [vmem:[%s975 + $0x58] sm:$0xff]
    %v988 = vld [vmem:[%s975 + $0x60] sm:$0xff]
    %v989 = vld [vmem:[%s975 + $0x68] sm:$0xff]
    %v990 = vld [vmem:[%s975 + $0x70] sm:$0xff]
    %v991 = vld [vmem:[%s975 + $0x78] sm:$0xff]
    %v992 = vld [vmem:[%s975 + $0x80] sm:$0xff]
    %v993 = vld [vmem:[%s975 + $0x88] sm:$0xff]
    %v994 = vld [vmem:[%s975 + $0x90] sm:$0xff]
    %v995 = vld [vmem:[%s975 + $0x98] sm:$0xff]
    %v996 = vld [vmem:[%s975 + $0xa0] sm:$0xff]
    %v997 = vld [vmem:[%s975 + $0xa8] sm:$0xff]
    %v998 = vld [vmem:[%s975 + $0xb0] sm:$0xff]
    %v999 = vld [vmem:[%s975 + $0xb8] sm:$0xff]
    %v1000 = vld [vmem:[%s975 + $0xc0] sm:$0xff]
    %v1001 = vld [vmem:[%s975 + $0xc8] sm:$0xff]
    %v1002 = vld [vmem:[%s975 + $0xd0] sm:$0xff]
    %v1003 = vld [vmem:[%s975 + $0xd8] sm:$0xff]
    %v1004 = vld [vmem:[%s975 + $0xe0] sm:$0xff]
    %v1005 = vld [vmem:[%s975 + $0xe8] sm:$0xff]
    %v1006 = vld [vmem:[%s975 + $0xf0] sm:$0xff]
    %v1007 = vld [vmem:[%s975 + $0xf8] sm:$0xff]
    %v1008 = vld [vmem:[%s975 + $0x100] sm:$0xff]
    %v1009 = vld [vmem:[%s975 + $0x108] sm:$0xff]
    %v1010 = vld [vmem:[%s975 + $0x110] sm:$0xff]
    %v1011 = vld [vmem:[%s975 + $0x118] sm:$0xff]
    %v1012 = vld [vmem:[%s975 + $0x120] sm:$0xff]
    %v1013 = vld [vmem:[%s975 + $0x128] sm:$0xff]
    %v1014 = vld [vmem:[%s975 + $0x130] sm:$0xff]
    %v1015 = vld [vmem:[%s975 + $0x138] sm:$0xff]
    %v1016 = vld [vmem:[%s975 + $0x140] sm:$0xff]
    %v1017 = vld [vmem:[%s975 + $0x148] sm:$0xff]
    %v1018 = vld [vmem:[%s975 + $0x150] sm:$0xff]
    %v1019 = vld [vmem:[%s975 + $0x158] sm:$0xff]
    %v1020 = vld [vmem:[%s975 + $0x160] sm:$0xff]
    %v1021 = vld [vmem:[%s975 + $0x168] sm:$0xff]
    %v1022 = vld [vmem:[%s975 + $0x170] sm:$0xff]
    %v1023 = vld [vmem:[%s975 + $0x178] sm:$0xff]
    %v1024 = vld [vmem:[%s975 + $0x180] sm:$0xff]
    %v1025 = vld [vmem:[%s975 + $0x188] sm:$0xff]
    %v1026 = vld [vmem:[%s975 + $0x190] sm:$0xff]
    %v1027 = vld [vmem:[%s975 + $0x198] sm:$0xff]
    %v1028 = vld [vmem:[%s975 + $0x1a0] sm:$0xff]
    %v1029 = vld [vmem:[%s975 + $0x1a8] sm:$0xff]
    %v1030 = vld [vmem:[%s975 + $0x1b0] sm:$0xff]
    %v1031 = vld [vmem:[%s975 + $0x1b8] sm:$0xff]
    %v1032 = vld [vmem:[%s975 + $0x1c0] sm:$0xff]
    %v1033 = vld [vmem:[%s975 + $0x1c8] sm:$0xff]
    %v1034 = vld [vmem:[%s975 + $0x1d0] sm:$0xff]
    %v1035 = vld [vmem:[%s975 + $0x1d8] sm:$0xff]
    %v1036 = vld [vmem:[%s975 + $0x1e0] sm:$0xff]
    %v1037 = vld [vmem:[%s975 + $0x1e8] sm:$0xff]
    %v1038 = vld [vmem:[%s975 + $0x1f0] sm:$0xff]
    %v1039 = vld [vmem:[%s975 + $0x1f8] sm:$0xff]
    %1041 = vset.pattern.permute.xlu0 0
    %1042 = vperm.xlu0 %1041, %v88
    %v1043 = vpop.permute.xlu0 %1042
    %1046 = vset.pattern.permute.xlu0 0
    %1047 = vperm.xlu0 %1046, %v89
    %v1048 = vpop.permute.xlu0 %1047
    %1051 = vset.pattern.permute.xlu0 0
    %1052 = vperm.xlu0 %1051, %v90
    %v1053 = vpop.permute.xlu0 %1052
    %v1055 = vmul.f32 %v436, %v1043
    %v1056 = vmul.f32 %v437, %v1043
    %v1057 = vmul.f32 %v438, %v1048
    %v1058 = vmul.f32 %v439, %v1048
    %v1059 = vmul.f32 %v440, %v1053
    %v1060 = vmul.f32 %v441, %v1053
    %1061 = vmatprep.subr.mxu0 %v977
    %1062 = vmatpush1.msra.mxu0 %v976
    %1063 = vmatprep.subr.mxu0 %v979
    %1064 = vmatpush1.msra.mxu0 %v978
    %1065 = vmatprep.subr.mxu0 %v981
    %1066 = vmatpush1.msra.mxu0 %v980
    %1067 = vmatprep.subr.mxu0 %v983
    %1068 = vmatpush1.msra.mxu0 %v982
    %1069 = vmatprep.subr.mxu0 %v985
    %1070 = vmatpush1.msra.mxu0 %v984
    %1071 = vmatprep.subr.mxu0 %v987
    %1072 = vmatpush1.msra.mxu0 %v986
    %1073 = vmatprep.subr.mxu0 %v989
    %1074 = vmatpush1.msra.mxu0 %v988
    %1075 = vmatprep.subr.mxu0 %v991
    %1076 = vmatpush1.msra.mxu0 %v990
    %1077 = vmatprep.subr.mxu0 %v993
    %1078 = vmatpush1.msra.mxu0 %v992
    %1079 = vmatprep.subr.mxu0 %v995
    %1080 = vmatpush1.msra.mxu0 %v994
    %1081 = vmatprep.subr.mxu0 %v997
    %1082 = vmatpush1.msra.mxu0 %v996
    %1083 = vmatprep.subr.mxu0 %v999
    %1084 = vmatpush1.msra.mxu0 %v998
    %1085 = vmatprep.subr.mxu0 %v1001
    %1086 = vmatpush1.msra.mxu0 %v1000
    %1087 = vmatprep.subr.mxu0 %v1003
    %1088 = vmatpush1.msra.mxu0 %v1002
    %1089 = vmatprep.subr.mxu0 %v1005
    %1090 = vmatpush1.msra.mxu0 %v1004
    %1091 = vmatprep.subr.mxu0 %v1007
    %1092 = vmatpush1.msra.mxu0 %v1006
    %1093 = vmatprep.subr.mxu0 %v1009
    %1094 = vmatpush1.msra.mxu0 %v1008
    %1095 = vmatprep.subr.mxu0 %v1011
    %1096 = vmatpush1.msra.mxu0 %v1010
    %1097 = vmatprep.subr.mxu0 %v1013
    %1098 = vmatpush1.msra.mxu0 %v1012
    %1099 = vmatprep.subr.mxu0 %v1015
    %1100 = vmatpush1.msra.mxu0 %v1014
    %1101 = vmatprep.subr.mxu0 %v1017
    %1102 = vmatpush1.msra.mxu0 %v1016
    %1103 = vmatprep.subr.mxu0 %v1019
    %1104 = vmatpush1.msra.mxu0 %v1018
    %1105 = vmatprep.subr.mxu0 %v1021
    %1106 = vmatpush1.msra.mxu0 %v1020
    %1107 = vmatprep.subr.mxu0 %v1023
    %1108 = vmatpush1.msra.mxu0 %v1022
    %1109 = vmatprep.subr.mxu0 %v1025
    %1110 = vmatpush1.msra.mxu0 %v1024
    %1111 = vmatprep.subr.mxu0 %v1027
    %1112 = vmatpush1.msra.mxu0 %v1026
    %1113 = vmatprep.subr.mxu0 %v1029
    %1114 = vmatpush1.msra.mxu0 %v1028
    %1115 = vmatprep.subr.mxu0 %v1031
    %1116 = vmatpush1.msra.mxu0 %v1030
    %1117 = vmatprep.subr.mxu0 %v1033
    %1118 = vmatpush1.msra.mxu0 %v1032
    %1119 = vmatprep.subr.mxu0 %v1035
    %1120 = vmatpush1.msra.mxu0 %v1034
    %1121 = vmatprep.subr.mxu0 %v1037
    %1122 = vmatpush1.msra.mxu0 %v1036
    %1123 = vmatprep.subr.mxu0 %v1039
    %1124 = vmatpush1.msra.mxu0 %v1038
    %1125 = vmatprep.mubr.f32.mxu0 %v1056
    %1126 = vmatmul.mubr.f32.gmra.mrb[0].mxu0 %v1055
    %v1127 = vpop.f32.mrb[0].mxu0
    %v1128 = vadd.f32 0.0, %v1127
    %v1129 = vpop.f32.mrb[0].mxu0
    %v1130 = vadd.f32 0.0, %v1129
    %1131 = vmatprep.mubr.f32.mxu0 %v1058
    %1132 = vmatmul.mubr.f32.gmra.mrb[0].mxu0 %v1057
    %v1133 = vpop.f32.mrb[0].mxu0
    %v1134 = vadd.f32 0.0, %v1133
    %v1135 = vpop.f32.mrb[0].mxu0
    %v1136 = vadd.f32 0.0, %v1135
    %1137 = vmatprep.mubr.f32.mxu0 %v1060
    %1138 = vmatmul.mubr.f32.gmra.mrb[0].mxu0 %v1059
    %v1139 = vpop.f32.mrb[0].mxu0
    %v1140 = vadd.f32 0.0, %v1139
    %v1141 = vpop.f32.mrb[0].mxu0
    %v1142 = vadd.f32 0.0, %v1141
    %1143 = vdwg.mxu0
    %v1144 = vadd.f32 %v787, %v1128
    %v1145 = vadd.f32 %v789, %v1130
    %v1146 = vadd.f32 %v793, %v1134
    %v1147 = vadd.f32 %v795, %v1136
    %v1148 = vadd.f32 %v799, %v1140
    %v1149 = vadd.f32 %v801, %v1142
    %v1150 = vmul.f32 %v454, %v1043
    %v1151 = vmul.f32 %v455, %v1043
    %v1152 = vmul.f32 %v456, %v1048
    %v1153 = vmul.f32 %v457, %v1048
    %v1154 = vmul.f32 %v458, %v1053
    %v1155 = vmul.f32 %v459, %v1053
    %1156 = vmatprep.subr.mxu0 %v977
    %1157 = vmatpush1.msra.mxu0 %v976
    %1158 = vmatprep.subr.mxu0 %v979
    %1159 = vmatpush1.msra.mxu0 %v978
    %1160 = vmatprep.subr.mxu0 %v981
    %1161 = vmatpush1.msra.mxu0 %v980
    %1162 = vmatprep.subr.mxu0 %v983
    %1163 = vmatpush1.msra.mxu0 %v982
    %1164 = vmatprep.subr.mxu0 %v985
    %1165 = vmatpush1.msra.mxu0 %v984
    %1166 = vmatprep.subr.mxu0 %v987
    %1167 = vmatpush1.msra.mxu0 %v986
    %1168 = vmatprep.subr.mxu0 %v989
    %1169 = vmatpush1.msra.mxu0 %v988
    %1170 = vmatprep.subr.mxu0 %v991
    %1171 = vmatpush1.msra.mxu0 %v990
    %1172 = vmatprep.subr.mxu0 %v993
    %1173 = vmatpush1.msra.mxu0 %v992
    %1174 = vmatprep.subr.mxu0 %v995
    %1175 = vmatpush1.msra.mxu0 %v994
    %1176 = vmatprep.subr.mxu0 %v997
    %1177 = vmatpush1.msra.mxu0 %v996
    %1178 = vmatprep.subr.mxu0 %v999
    %1179 = vmatpush1.msra.mxu0 %v998
    %1180 = vmatprep.subr.mxu0 %v1001
    %1181 = vmatpush1.msra.mxu0 %v1000
    %1182 = vmatprep.subr.mxu0 %v1003
    %1183 = vmatpush1.msra.mxu0 %v1002
    %1184 = vmatprep.subr.mxu0 %v1005
    %1185 = vmatpush1.msra.mxu0 %v1004
    %1186 = vmatprep.subr.mxu0 %v1007
    %1187 = vmatpush1.msra.mxu0 %v1006
    %1188 = vmatprep.subr.mxu0 %v1009
    %1189 = vmatpush1.msra.mxu0 %v1008
    %1190 = vmatprep.subr.mxu0 %v1011
    %1191 = vmatpush1.msra.mxu0 %v1010
    %1192 = vmatprep.subr.mxu0 %v1013
    %1193 = vmatpush1.msra.mxu0 %v1012
    %1194 = vmatprep.subr.mxu0 %v1015
    %1195 = vmatpush1.msra.mxu0 %v1014
    %1196 = vmatprep.subr.mxu0 %v1017
    %1197 = vmatpush1.msra.mxu0 %v1016
    %1198 = vmatprep.subr.mxu0 %v1019
    %1199 = vmatpush1.msra.mxu0 %v1018
    %1200 = vmatprep.subr.mxu0 %v1021
    %1201 = vmatpush1.msra.mxu0 %v1020
    %1202 = vmatprep.subr.mxu0 %v1023
    %1203 = vmatpush1.msra.mxu0 %v1022
    %1204 = vmatprep.subr.mxu0 %v1025
    %1205 = vmatpush1.msra.mxu0 %v1024
    %1206 = vmatprep.subr.mxu0 %v1027
    %1207 = vmatpush1.msra.mxu0 %v1026
    %1208 = vmatprep.subr.mxu0 %v1029
    %1209 = vmatpush1.msra.mxu0 %v1028
    %1210 = vmatprep.subr.mxu0 %v1031
    %1211 = vmatpush1.msra.mxu0 %v1030
    %1212 = vmatprep.subr.mxu0 %v1033
    %1213 = vmatpush1.msra.mxu0 %v1032
    %1214 = vmatprep.subr.mxu0 %v1035
    %1215 = vmatpush1.msra.mxu0 %v1034
    %1216 = vmatprep.subr.mxu0 %v1037
    %1217 = vmatpush1.msra.mxu0 %v1036
    %1218 = vmatprep.subr.mxu0 %v1039
    %1219 = vmatpush1.msra.mxu0 %v1038
    %1220 = vmatprep.mubr.f32.mxu0 %v1151
    %1221 = vmatmul.mubr.f32.gmra.mrb[0].mxu0 %v1150
    %v1222 = vpop.f32.mrb[0].mxu0
    %v1223 = vadd.f32 0.0, %v1222
    %v1224 = vpop.f32.mrb[0].mxu0
    %v1225 = vadd.f32 0.0, %v1224
    %1226 = vmatprep.mubr.f32.mxu0 %v1153
    %1227 = vmatmul.mubr.f32.gmra.mrb[0].mxu0 %v1152
    %v1228 = vpop.f32.mrb[0].mxu0
    %v1229 = vadd.f32 0.0, %v1228
    %v1230 = vpop.f32.mrb[0].mxu0
    %v1231 = vadd.f32 0.0, %v1230
    %1232 = vmatprep.mubr.f32.mxu0 %v1155
    %1233 = vmatmul.mubr.f32.gmra.mrb[0].mxu0 %v1154
    %v1234 = vpop.f32.mrb[0].mxu0
    %v1235 = vadd.f32 0.0, %v1234
    %v1236 = vpop.f32.mrb[0].mxu0
    %v1237 = vadd.f32 0.0, %v1236
    %1238 = vdwg.mxu0
    %v1239 = vadd.f32 %v959, %v1223
    %v1240 = vadd.f32 %v961, %v1225
    %v1241 = vadd.f32 %v965, %v1229
    %v1242 = vadd.f32 %v967, %v1231
    %v1243 = vadd.f32 %v971, %v1235
    %v1244 = vadd.f32 %v973, %v1237
    %s1245 = scalar_lea.vmem [#allocation5], 1536
    %v1246 = vld [vmem:[%s1245] sm:$0xff]
    %v1247 = vld [vmem:[%s1245 + $0x8] sm:$0xff]
    %v1248 = vld [vmem:[%s1245 + $0x10] sm:$0xff]
    %v1249 = vld [vmem:[%s1245 + $0x18] sm:$0xff]
    %v1250 = vld [vmem:[%s1245 + $0x20] sm:$0xff]
    %v1251 = vld [vmem:[%s1245 + $0x28] sm:$0xff]
    %v1252 = vld [vmem:[%s1245 + $0x30] sm:$0xff]
    %v1253 = vld [vmem:[%s1245 + $0x38] sm:$0xff]
    %v1254 = vld [vmem:[%s1245 + $0x40] sm:$0xff]
    %v1255 = vld [vmem:[%s1245 + $0x48] sm:$0xff]
    %v1256 = vld [vmem:[%s1245 + $0x50] sm:$0xff]
    %v1257 = vld [vmem:[%s1245 + $0x58] sm:$0xff]
    %v1258 = vld [vmem:[%s1245 + $0x60] sm:$0xff]
    %v1259 = vld [vmem:[%s1245 + $0x68] sm:$0xff]
    %v1260 = vld [vmem:[%s1245 + $0x70] sm:$0xff]
    %v1261 = vld [vmem:[%s1245 + $0x78] sm:$0xff]
    %v1262 = vld [vmem:[%s1245 + $0x80] sm:$0xff]
    %v1263 = vld [vmem:[%s1245 + $0x88] sm:$0xff]
    %v1264 = vld [vmem:[%s1245 + $0x90] sm:$0xff]
    %v1265 = vld [vmem:[%s1245 + $0x98] sm:$0xff]
    %v1266 = vld [vmem:[%s1245 + $0xa0] sm:$0xff]
    %v1267 = vld [vmem:[%s1245 + $0xa8] sm:$0xff]
    %v1268 = vld [vmem:[%s1245 + $0xb0] sm:$0xff]
    %v1269 = vld [vmem:[%s1245 + $0xb8] sm:$0xff]
    %v1270 = vld [vmem:[%s1245 + $0xc0] sm:$0xff]
    %v1271 = vld [vmem:[%s1245 + $0xc8] sm:$0xff]
    %v1272 = vld [vmem:[%s1245 + $0xd0] sm:$0xff]
    %v1273 = vld [vmem:[%s1245 + $0xd8] sm:$0xff]
    %v1274 = vld [vmem:[%s1245 + $0xe0] sm:$0xff]
    %v1275 = vld [vmem:[%s1245 + $0xe8] sm:$0xff]
    %v1276 = vld [vmem:[%s1245 + $0xf0] sm:$0xff]
    %v1277 = vld [vmem:[%s1245 + $0xf8] sm:$0xff]
    %v1278 = vld [vmem:[%s1245 + $0x100] sm:$0xff]
    %v1279 = vld [vmem:[%s1245 + $0x108] sm:$0xff]
    %v1280 = vld [vmem:[%s1245 + $0x110] sm:$0xff]
    %v1281 = vld [vmem:[%s1245 + $0x118] sm:$0xff]
    %v1282 = vld [vmem:[%s1245 + $0x120] sm:$0xff]
    %v1283 = vld [vmem:[%s1245 + $0x128] sm:$0xff]
    %v1284 = vld [vmem:[%s1245 + $0x130] sm:$0xff]
    %v1285 = vld [vmem:[%s1245 + $0x138] sm:$0xff]
    %v1286 = vld [vmem:[%s1245 + $0x140] sm:$0xff]
    %v1287 = vld [vmem:[%s1245 + $0x148] sm:$0xff]
    %v1288 = vld [vmem:[%s1245 + $0x150] sm:$0xff]
    %v1289 = vld [vmem:[%s1245 + $0x158] sm:$0xff]
    %v1290 = vld [vmem:[%s1245 + $0x160] sm:$0xff]
    %v1291 = vld [vmem:[%s1245 + $0x168] sm:$0xff]
    %v1292 = vld [vmem:[%s1245 + $0x170] sm:$0xff]
    %v1293 = vld [vmem:[%s1245 + $0x178] sm:$0xff]
    %v1294 = vld [vmem:[%s1245 + $0x180] sm:$0xff]
    %v1295 = vld [vmem:[%s1245 + $0x188] sm:$0xff]
    %v1296 = vld [vmem:[%s1245 + $0x190] sm:$0xff]
    %v1297 = vld [vmem:[%s1245 + $0x198] sm:$0xff]
    %v1298 = vld [vmem:[%s1245 + $0x1a0] sm:$0xff]
    %v1299 = vld [vmem:[%s1245 + $0x1a8] sm:$0xff]
    %v1300 = vld [vmem:[%s1245 + $0x1b0] sm:$0xff]
    %v1301 = vld [vmem:[%s1245 + $0x1b8] sm:$0xff]
    %v1302 = vld [vmem:[%s1245 + $0x1c0] sm:$0xff]
    %v1303 = vld [vmem:[%s1245 + $0x1c8] sm:$0xff]
    %v1304 = vld [vmem:[%s1245 + $0x1d0] sm:$0xff]
    %v1305 = vld [vmem:[%s1245 + $0x1d8] sm:$0xff]
    %v1306 = vld [vmem:[%s1245 + $0x1e0] sm:$0xff]
    %v1307 = vld [vmem:[%s1245 + $0x1e8] sm:$0xff]
    %v1308 = vld [vmem:[%s1245 + $0x1f0] sm:$0xff]
    %v1309 = vld [vmem:[%s1245 + $0x1f8] sm:$0xff]
    %1311 = vset.pattern.permute.xlu0 0
    %1312 = vperm.xlu0 %1311, %v91
    %v1313 = vpop.permute.xlu0 %1312
    %1316 = vset.pattern.permute.xlu0 0
    %1317 = vperm.xlu0 %1316, %v92
    %v1318 = vpop.permute.xlu0 %1317
    %1321 = vset.pattern.permute.xlu0 0
    %1322 = vperm.xlu0 %1321, %v93
    %v1323 = vpop.permute.xlu0 %1322
    %v1325 = vmul.f32 %v436, %v1313
    %v1326 = vmul.f32 %v437, %v1313
    %v1327 = vmul.f32 %v438, %v1318
    %v1328 = vmul.f32 %v439, %v1318
    %v1329 = vmul.f32 %v440, %v1323
    %v1330 = vmul.f32 %v441, %v1323
    %1331 = vmatprep.subr.mxu0 %v1247
    %1332 = vmatpush1.msra.mxu0 %v1246
    %1333 = vmatprep.subr.mxu0 %v1249
    %1334 = vmatpush1.msra.mxu0 %v1248
    %1335 = vmatprep.subr.mxu0 %v1251
    %1336 = vmatpush1.msra.mxu0 %v1250
    %1337 = vmatprep.subr.mxu0 %v1253
    %1338 = vmatpush1.msra.mxu0 %v1252
    %1339 = vmatprep.subr.mxu0 %v1255
    %1340 = vmatpush1.msra.mxu0 %v1254
    %1341 = vmatprep.subr.mxu0 %v1257
    %1342 = vmatpush1.msra.mxu0 %v1256
    %1343 = vmatprep.subr.mxu0 %v1259
    %1344 = vmatpush1.msra.mxu0 %v1258
    %1345 = vmatprep.subr.mxu0 %v1261
    %1346 = vmatpush1.msra.mxu0 %v1260
    %1347 = vmatprep.subr.mxu0 %v1263
    %1348 = vmatpush1.msra.mxu0 %v1262
    %1349 = vmatprep.subr.mxu0 %v1265
    %1350 = vmatpush1.msra.mxu0 %v1264
    %1351 = vmatprep.subr.mxu0 %v1267
    %1352 = vmatpush1.msra.mxu0 %v1266
    %1353 = vmatprep.subr.mxu0 %v1269
    %1354 = vmatpush1.msra.mxu0 %v1268
    %1355 = vmatprep.subr.mxu0 %v1271
    %1356 = vmatpush1.msra.mxu0 %v1270
    %1357 = vmatprep.subr.mxu0 %v1273
    %1358 = vmatpush1.msra.mxu0 %v1272
    %1359 = vmatprep.subr.mxu0 %v1275
    %1360 = vmatpush1.msra.mxu0 %v1274
    %1361 = vmatprep.subr.mxu0 %v1277
    %1362 = vmatpush1.msra.mxu0 %v1276
    %1363 = vmatprep.subr.mxu0 %v1279
    %1364 = vmatpush1.msra.mxu0 %v1278
    %1365 = vmatprep.subr.mxu0 %v1281
    %1366 = vmatpush1.msra.mxu0 %v1280
    %1367 = vmatprep.subr.mxu0 %v1283
    %1368 = vmatpush1.msra.mxu0 %v1282
    %1369 = vmatprep.subr.mxu0 %v1285
    %1370 = vmatpush1.msra.mxu0 %v1284
    %1371 = vmatprep.subr.mxu0 %v1287
    %1372 = vmatpush1.msra.mxu0 %v1286
    %1373 = vmatprep.subr.mxu0 %v1289
    %1374 = vmatpush1.msra.mxu0 %v1288
    %1375 = vmatprep.subr.mxu0 %v1291
    %1376 = vmatpush1.msra.mxu0 %v1290
    %1377 = vmatprep.subr.mxu0 %v1293
    %1378 = vmatpush1.msra.mxu0 %v1292
    %1379 = vmatprep.subr.mxu0 %v1295
    %1380 = vmatpush1.msra.mxu0 %v1294
    %1381 = vmatprep.subr.mxu0 %v1297
    %1382 = vmatpush1.msra.mxu0 %v1296
    %1383 = vmatprep.subr.mxu0 %v1299
    %1384 = vmatpush1.msra.mxu0 %v1298
    %1385 = vmatprep.subr.mxu0 %v1301
    %1386 = vmatpush1.msra.mxu0 %v1300
    %1387 = vmatprep.subr.mxu0 %v1303
    %1388 = vmatpush1.msra.mxu0 %v1302
    %1389 = vmatprep.subr.mxu0 %v1305
    %1390 = vmatpush1.msra.mxu0 %v1304
    %1391 = vmatprep.subr.mxu0 %v1307
    %1392 = vmatpush1.msra.mxu0 %v1306
    %1393 = vmatprep.subr.mxu0 %v1309
    %1394 = vmatpush1.msra.mxu0 %v1308
    %1395 = vmatprep.mubr.f32.mxu0 %v1326
    %1396 = vmatmul.mubr.f32.gmra.mrb[0].mxu0 %v1325
    %v1397 = vpop.f32.mrb[0].mxu0
    %v1398 = vadd.f32 0.0, %v1397
    %v1399 = vpop.f32.mrb[0].mxu0
    %v1400 = vadd.f32 0.0, %v1399
    %1401 = vmatprep.mubr.f32.mxu0 %v1328
    %1402 = vmatmul.mubr.f32.gmra.mrb[0].mxu0 %v1327
    %v1403 = vpop.f32.mrb[0].mxu0
    %v1404 = vadd.f32 0.0, %v1403
    %v1405 = vpop.f32.mrb[0].mxu0
    %v1406 = vadd.f32 0.0, %v1405
    %1407 = vmatprep.mubr.f32.mxu0 %v1330
    %1408 = vmatmul.mubr.f32.gmra.mrb[0].mxu0 %v1329
    %v1409 = vpop.f32.mrb[0].mxu0
    %v1410 = vadd.f32 0.0, %v1409
    %v1411 = vpop.f32.mrb[0].mxu0
    %v1412 = vadd.f32 0.0, %v1411
    %1413 = vdwg.mxu0
    %v1414 = vadd.f32 %v1144, %v1398
    %v1415 = vadd.f32 %v1145, %v1400
    %v1416 = vadd.f32 %v1146, %v1404
    %v1417 = vadd.f32 %v1147, %v1406
    %v1418 = vadd.f32 %v1148, %v1410
    %v1419 = vadd.f32 %v1149, %v1412
    %v1420 = vmul.f32 %v454, %v1313
    %v1421 = vmul.f32 %v455, %v1313
    %v1422 = vmul.f32 %v456, %v1318
    %v1423 = vmul.f32 %v457, %v1318
    %v1424 = vmul.f32 %v458, %v1323
    %v1425 = vmul.f32 %v459, %v1323
    %1426 = vmatprep.subr.mxu0 %v1247
    %1427 = vmatpush1.msra.mxu0 %v1246
    %1428 = vmatprep.subr.mxu0 %v1249
    %1429 = vmatpush1.msra.mxu0 %v1248
    %1430 = vmatprep.subr.mxu0 %v1251
    %1431 = vmatpush1.msra.mxu0 %v1250
    %1432 = vmatprep.subr.mxu0 %v1253
    %1433 = vmatpush1.msra.mxu0 %v1252
    %1434 = vmatprep.subr.mxu0 %v1255
    %1435 = vmatpush1.msra.mxu0 %v1254
    %1436 = vmatprep.subr.mxu0 %v1257
    %1437 = vmatpush1.msra.mxu0 %v1256
    %1438 = vmatprep.subr.mxu0 %v1259
    %1439 = vmatpush1.msra.mxu0 %v1258
    %1440 = vmatprep.subr.mxu0 %v1261
    %1441 = vmatpush1.msra.mxu0 %v1260
    %1442 = vmatprep.subr.mxu0 %v1263
    %1443 = vmatpush1.msra.mxu0 %v1262
    %1444 = vmatprep.subr.mxu0 %v1265
    %1445 = vmatpush1.msra.mxu0 %v1264
    %1446 = vmatprep.subr.mxu0 %v1267
    %1447 = vmatpush1.msra.mxu0 %v1266
    %1448 = vmatprep.subr.mxu0 %v1269
    %1449 = vmatpush1.msra.mxu0 %v1268
    %1450 = vmatprep.subr.mxu0 %v1271
    %1451 = vmatpush1.msra.mxu0 %v1270
    %1452 = vmatprep.subr.mxu0 %v1273
    %1453 = vmatpush1.msra.mxu0 %v1272
    %1454 = vmatprep.subr.mxu0 %v1275
    %1455 = vmatpush1.msra.mxu0 %v1274
    %1456 = vmatprep.subr.mxu0 %v1277
    %1457 = vmatpush1.msra.mxu0 %v1276
    %1458 = vmatprep.subr.mxu0 %v1279
    %1459 = vmatpush1.msra.mxu0 %v1278
    %1460 = vmatprep.subr.mxu0 %v1281
    %1461 = vmatpush1.msra.mxu0 %v1280
    %1462 = vmatprep.subr.mxu0 %v1283
    %1463 = vmatpush1.msra.mxu0 %v1282
    %1464 = vmatprep.subr.mxu0 %v1285
    %1465 = vmatpush1.msra.mxu0 %v1284
    %1466 = vmatprep.subr.mxu0 %v1287
    %1467 = vmatpush1.msra.mxu0 %v1286
    %1468 = vmatprep.subr.mxu0 %v1289
    %1469 = vmatpush1.msra.mxu0 %v1288
    %1470 = vmatprep.subr.mxu0 %v1291
    %1471 = vmatpush1.msra.mxu0 %v1290
    %1472 = vmatprep.subr.mxu0 %v1293
    %1473 = vmatpush1.msra.mxu0 %v1292
    %1474 = vmatprep.subr.mxu0 %v1295
    %1475 = vmatpush1.msra.mxu0 %v1294
    %1476 = vmatprep.subr.mxu0 %v1297
    %1477 = vmatpush1.msra.mxu0 %v1296
    %1478 = vmatprep.subr.mxu0 %v1299
    %1479 = vmatpush1.msra.mxu0 %v1298
    %1480 = vmatprep.subr.mxu0 %v1301
    %1481 = vmatpush1.msra.mxu0 %v1300
    %1482 = vmatprep.subr.mxu0 %v1303
    %1483 = vmatpush1.msra.mxu0 %v1302
    %1484 = vmatprep.subr.mxu0 %v1305
    %1485 = vmatpush1.msra.mxu0 %v1304
    %1486 = vmatprep.subr.mxu0 %v1307
    %1487 = vmatpush1.msra.mxu0 %v1306
    %1488 = vmatprep.subr.mxu0 %v1309
    %1489 = vmatpush1.msra.mxu0 %v1308
    %1490 = vmatprep.mubr.f32.mxu0 %v1421
    %1491 = vmatmul.mubr.f32.gmra.mrb[0].mxu0 %v1420
    %v1492 = vpop.f32.mrb[0].mxu0
    %v1493 = vadd.f32 0.0, %v1492
    %v1494 = vpop.f32.mrb[0].mxu0
    %v1495 = vadd.f32 0.0, %v1494
    %1496 = vmatprep.mubr.f32.mxu0 %v1423
    %1497 = vmatmul.mubr.f32.gmra.mrb[0].mxu0 %v1422
    %v1498 = vpop.f32.mrb[0].mxu0
    %v1499 = vadd.f32 0.0, %v1498
    %v1500 = vpop.f32.mrb[0].mxu0
    %v1501 = vadd.f32 0.0, %v1500
    %1502 = vmatprep.mubr.f32.mxu0 %v1425
    %1503 = vmatmul.mubr.f32.gmra.mrb[0].mxu0 %v1424
    %v1504 = vpop.f32.mrb[0].mxu0
    %v1505 = vadd.f32 0.0, %v1504
    %v1506 = vpop.f32.mrb[0].mxu0
    %v1507 = vadd.f32 0.0, %v1506
    %1508 = vdwg.mxu0
    %v1509 = vadd.f32 %v1239, %v1493
    %v1510 = vadd.f32 %v1240, %v1495
    %v1511 = vadd.f32 %v1241, %v1499
    %v1512 = vadd.f32 %v1242, %v1501
    %v1513 = vadd.f32 %v1243, %v1505
    %v1514 = vadd.f32 %v1244, %v1507
    %s1515 = scalar_lea.vmem [#allocation5], 2048
    %v1516 = vld [vmem:[%s1515] sm:$0xff]
    %v1517 = vld [vmem:[%s1515 + $0x8] sm:$0xff]
    %v1518 = vld [vmem:[%s1515 + $0x10] sm:$0xff]
    %v1519 = vld [vmem:[%s1515 + $0x18] sm:$0xff]
    %v1520 = vld [vmem:[%s1515 + $0x20] sm:$0xff]
    %v1521 = vld [vmem:[%s1515 + $0x28] sm:$0xff]
    %v1522 = vld [vmem:[%s1515 + $0x30] sm:$0xff]
    %v1523 = vld [vmem:[%s1515 + $0x38] sm:$0xff]
    %v1524 = vld [vmem:[%s1515 + $0x40] sm:$0xff]
    %v1525 = vld [vmem:[%s1515 + $0x48] sm:$0xff]
    %v1526 = vld [vmem:[%s1515 + $0x50] sm:$0xff]
    %v1527 = vld [vmem:[%s1515 + $0x58] sm:$0xff]
    %v1528 = vld [vmem:[%s1515 + $0x60] sm:$0xff]
    %v1529 = vld [vmem:[%s1515 + $0x68] sm:$0xff]
    %v1530 = vld [vmem:[%s1515 + $0x70] sm:$0xff]
    %v1531 = vld [vmem:[%s1515 + $0x78] sm:$0xff]
    %v1532 = vld [vmem:[%s1515 + $0x80] sm:$0xff]
    %v1533 = vld [vmem:[%s1515 + $0x88] sm:$0xff]
    %v1534 = vld [vmem:[%s1515 + $0x90] sm:$0xff]
    %v1535 = vld [vmem:[%s1515 + $0x98] sm:$0xff]
    %v1536 = vld [vmem:[%s1515 + $0xa0] sm:$0xff]
    %v1537 = vld [vmem:[%s1515 + $0xa8] sm:$0xff]
    %v1538 = vld [vmem:[%s1515 + $0xb0] sm:$0xff]
    %v1539 = vld [vmem:[%s1515 + $0xb8] sm:$0xff]
    %v1540 = vld [vmem:[%s1515 + $0xc0] sm:$0xff]
    %v1541 = vld [vmem:[%s1515 + $0xc8] sm:$0xff]
    %v1542 = vld [vmem:[%s1515 + $0xd0] sm:$0xff]
    %v1543 = vld [vmem:[%s1515 + $0xd8] sm:$0xff]
    %v1544 = vld [vmem:[%s1515 + $0xe0] sm:$0xff]
    %v1545 = vld [vmem:[%s1515 + $0xe8] sm:$0xff]
    %v1546 = vld [vmem:[%s1515 + $0xf0] sm:$0xff]
    %v1547 = vld [vmem:[%s1515 + $0xf8] sm:$0xff]
    %v1548 = vld [vmem:[%s1515 + $0x100] sm:$0xff]
    %v1549 = vld [vmem:[%s1515 + $0x108] sm:$0xff]
    %v1550 = vld [vmem:[%s1515 + $0x110] sm:$0xff]
    %v1551 = vld [vmem:[%s1515 + $0x118] sm:$0xff]
    %v1552 = vld [vmem:[%s1515 + $0x120] sm:$0xff]
    %v1553 = vld [vmem:[%s1515 + $0x128] sm:$0xff]
    %v1554 = vld [vmem:[%s1515 + $0x130] sm:$0xff]
    %v1555 = vld [vmem:[%s1515 + $0x138] sm:$0xff]
    %v1556 = vld [vmem:[%s1515 + $0x140] sm:$0xff]
    %v1557 = vld [vmem:[%s1515 + $0x148] sm:$0xff]
    %v1558 = vld [vmem:[%s1515 + $0x150] sm:$0xff]
    %v1559 = vld [vmem:[%s1515 + $0x158] sm:$0xff]
    %v1560 = vld [vmem:[%s1515 + $0x160] sm:$0xff]
    %v1561 = vld [vmem:[%s1515 + $0x168] sm:$0xff]
    %v1562 = vld [vmem:[%s1515 + $0x170] sm:$0xff]
    %v1563 = vld [vmem:[%s1515 + $0x178] sm:$0xff]
    %v1564 = vld [vmem:[%s1515 + $0x180] sm:$0xff]
    %v1565 = vld [vmem:[%s1515 + $0x188] sm:$0xff]
    %v1566 = vld [vmem:[%s1515 + $0x190] sm:$0xff]
    %v1567 = vld [vmem:[%s1515 + $0x198] sm:$0xff]
    %v1568 = vld [vmem:[%s1515 + $0x1a0] sm:$0xff]
    %v1569 = vld [vmem:[%s1515 + $0x1a8] sm:$0xff]
    %v1570 = vld [vmem:[%s1515 + $0x1b0] sm:$0xff]
    %v1571 = vld [vmem:[%s1515 + $0x1b8] sm:$0xff]
    %v1572 = vld [vmem:[%s1515 + $0x1c0] sm:$0xff]
    %v1573 = vld [vmem:[%s1515 + $0x1c8] sm:$0xff]
    %v1574 = vld [vmem:[%s1515 + $0x1d0] sm:$0xff]
    %v1575 = vld [vmem:[%s1515 + $0x1d8] sm:$0xff]
    %v1576 = vld [vmem:[%s1515 + $0x1e0] sm:$0xff]
    %v1577 = vld [vmem:[%s1515 + $0x1e8] sm:$0xff]
    %v1578 = vld [vmem:[%s1515 + $0x1f0] sm:$0xff]
    %v1579 = vld [vmem:[%s1515 + $0x1f8] sm:$0xff]
    %1581 = vset.pattern.permute.xlu0 0
    %1582 = vperm.xlu0 %1581, %v94
    %v1583 = vpop.permute.xlu0 %1582
    %1586 = vset.pattern.permute.xlu0 0
    %1587 = vperm.xlu0 %1586, %v95
    %v1588 = vpop.permute.xlu0 %1587
    %1591 = vset.pattern.permute.xlu0 0
    %1592 = vperm.xlu0 %1591, %v96
    %v1593 = vpop.permute.xlu0 %1592
    %v1595 = vmul.f32 %v436, %v1583
    %v1596 = vmul.f32 %v437, %v1583
    %v1597 = vmul.f32 %v438, %v1588
    %v1598 = vmul.f32 %v439, %v1588
    %v1599 = vmul.f32 %v440, %v1593
    %v1600 = vmul.f32 %v441, %v1593
    %1601 = vmatprep.subr.mxu0 %v1517
    %1602 = vmatpush1.msra.mxu0 %v1516
    %1603 = vmatprep.subr.mxu0 %v1519
    %1604 = vmatpush1.msra.mxu0 %v1518
    %1605 = vmatprep.subr.mxu0 %v1521
    %1606 = vmatpush1.msra.mxu0 %v1520
    %1607 = vmatprep.subr.mxu0 %v1523
    %1608 = vmatpush1.msra.mxu0 %v1522
    %1609 = vmatprep.subr.mxu0 %v1525
    %1610 = vmatpush1.msra.mxu0 %v1524
    %1611 = vmatprep.subr.mxu0 %v1527
    %1612 = vmatpush1.msra.mxu0 %v1526
    %1613 = vmatprep.subr.mxu0 %v1529
    %1614 = vmatpush1.msra.mxu0 %v1528
    %1615 = vmatprep.subr.mxu0 %v1531
    %1616 = vmatpush1.msra.mxu0 %v1530
    %1617 = vmatprep.subr.mxu0 %v1533
    %1618 = vmatpush1.msra.mxu0 %v1532
    %1619 = vmatprep.subr.mxu0 %v1535
    %1620 = vmatpush1.msra.mxu0 %v1534
    %1621 = vmatprep.subr.mxu0 %v1537
    %1622 = vmatpush1.msra.mxu0 %v1536
    %1623 = vmatprep.subr.mxu0 %v1539
    %1624 = vmatpush1.msra.mxu0 %v1538
    %1625 = vmatprep.subr.mxu0 %v1541
    %1626 = vmatpush1.msra.mxu0 %v1540
    %1627 = vmatprep.subr.mxu0 %v1543
    %1628 = vmatpush1.msra.mxu0 %v1542
    %1629 = vmatprep.subr.mxu0 %v1545
    %1630 = vmatpush1.msra.mxu0 %v1544
    %1631 = vmatprep.subr.mxu0 %v1547
    %1632 = vmatpush1.msra.mxu0 %v1546
    %1633 = vmatprep.subr.mxu0 %v1549
    %1634 = vmatpush1.msra.mxu0 %v1548
    %1635 = vmatprep.subr.mxu0 %v1551
    %1636 = vmatpush1.msra.mxu0 %v1550
    %1637 = vmatprep.subr.mxu0 %v1553
    %1638 = vmatpush1.msra.mxu0 %v1552
    %1639 = vmatprep.subr.mxu0 %v1555
    %1640 = vmatpush1.msra.mxu0 %v1554
    %1641 = vmatprep.subr.mxu0 %v1557
    %1642 = vmatpush1.msra.mxu0 %v1556
    %1643 = vmatprep.subr.mxu0 %v1559
    %1644 = vmatpush1.msra.mxu0 %v1558
    %1645 = vmatprep.subr.mxu0 %v1561
    %1646 = vmatpush1.msra.mxu0 %v1560
    %1647 = vmatprep.subr.mxu0 %v1563
    %1648 = vmatpush1.msra.mxu0 %v1562
    %1649 = vmatprep.subr.mxu0 %v1565
    %1650 = vmatpush1.msra.mxu0 %v1564
    %1651 = vmatprep.subr.mxu0 %v1567
    %1652 = vmatpush1.msra.mxu0 %v1566
    %1653 = vmatprep.subr.mxu0 %v1569
    %1654 = vmatpush1.msra.mxu0 %v1568
    %1655 = vmatprep.subr.mxu0 %v1571
    %1656 = vmatpush1.msra.mxu0 %v1570
    %1657 = vmatprep.subr.mxu0 %v1573
    %1658 = vmatpush1.msra.mxu0 %v1572
    %1659 = vmatprep.subr.mxu0 %v1575
    %1660 = vmatpush1.msra.mxu0 %v1574
    %1661 = vmatprep.subr.mxu0 %v1577
    %1662 = vmatpush1.msra.mxu0 %v1576
    %1663 = vmatprep.subr.mxu0 %v1579
    %1664 = vmatpush1.msra.mxu0 %v1578
    %1665 = vmatprep.mubr.f32.mxu0 %v1596
    %1666 = vmatmul.mubr.f32.gmra.mrb[0].mxu0 %v1595
    %v1667 = vpop.f32.mrb[0].mxu0
    %v1668 = vadd.f32 0.0, %v1667
    %v1669 = vpop.f32.mrb[0].mxu0
    %v1670 = vadd.f32 0.0, %v1669
    %1671 = vmatprep.mubr.f32.mxu0 %v1598
    %1672 = vmatmul.mubr.f32.gmra.mrb[0].mxu0 %v1597
    %v1673 = vpop.f32.mrb[0].mxu0
    %v1674 = vadd.f32 0.0, %v1673
    %v1675 = vpop.f32.mrb[0].mxu0
    %v1676 = vadd.f32 0.0, %v1675
    %1677 = vmatprep.mubr.f32.mxu0 %v1600
    %1678 = vmatmul.mubr.f32.gmra.mrb[0].mxu0 %v1599
    %v1679 = vpop.f32.mrb[0].mxu0
    %v1680 = vadd.f32 0.0, %v1679
    %v1681 = vpop.f32.mrb[0].mxu0
    %v1682 = vadd.f32 0.0, %v1681
    %1683 = vdwg.mxu0
    %v1684 = vadd.f32 %v1414, %v1668
    %v1685 = vadd.f32 %v1415, %v1670
    %v1686 = vadd.f32 %v1416, %v1674
    %v1687 = vadd.f32 %v1417, %v1676
    %v1688 = vadd.f32 %v1418, %v1680
    %v1689 = vadd.f32 %v1419, %v1682
    %v1690 = vmul.f32 %v454, %v1583
    %v1691 = vmul.f32 %v455, %v1583
    %v1692 = vmul.f32 %v456, %v1588
    %v1693 = vmul.f32 %v457, %v1588
    %v1694 = vmul.f32 %v458, %v1593
    %v1695 = vmul.f32 %v459, %v1593
    %1696 = vmatprep.subr.mxu0 %v1517
    %1697 = vmatpush1.msra.mxu0 %v1516
    %1698 = vmatprep.subr.mxu0 %v1519
    %1699 = vmatpush1.msra.mxu0 %v1518
    %1700 = vmatprep.subr.mxu0 %v1521
    %1701 = vmatpush1.msra.mxu0 %v1520
    %1702 = vmatprep.subr.mxu0 %v1523
    %1703 = vmatpush1.msra.mxu0 %v1522
    %1704 = vmatprep.subr.mxu0 %v1525
    %1705 = vmatpush1.msra.mxu0 %v1524
    %1706 = vmatprep.subr.mxu0 %v1527
    %1707 = vmatpush1.msra.mxu0 %v1526
    %1708 = vmatprep.subr.mxu0 %v1529
    %1709 = vmatpush1.msra.mxu0 %v1528
    %1710 = vmatprep.subr.mxu0 %v1531
    %1711 = vmatpush1.msra.mxu0 %v1530
    %1712 = vmatprep.subr.mxu0 %v1533
    %1713 = vmatpush1.msra.mxu0 %v1532
    %1714 = vmatprep.subr.mxu0 %v1535
    %1715 = vmatpush1.msra.mxu0 %v1534
    %1716 = vmatprep.subr.mxu0 %v1537
    %1717 = vmatpush1.msra.mxu0 %v1536
    %1718 = vmatprep.subr.mxu0 %v1539
    %1719 = vmatpush1.msra.mxu0 %v1538
    %1720 = vmatprep.subr.mxu0 %v1541
    %1721 = vmatpush1.msra.mxu0 %v1540
    %1722 = vmatprep.subr.mxu0 %v1543
    %1723 = vmatpush1.msra.mxu0 %v1542
    %1724 = vmatprep.subr.mxu0 %v1545
    %1725 = vmatpush1.msra.mxu0 %v1544
    %1726 = vmatprep.subr.mxu0 %v1547
    %1727 = vmatpush1.msra.mxu0 %v1546
    %1728 = vmatprep.subr.mxu0 %v1549
    %1729 = vmatpush1.msra.mxu0 %v1548
    %1730 = vmatprep.subr.mxu0 %v1551
    %1731 = vmatpush1.msra.mxu0 %v1550
    %1732 = vmatprep.subr.mxu0 %v1553
    %1733 = vmatpush1.msra.mxu0 %v1552
    %1734 = vmatprep.subr.mxu0 %v1555
    %1735 = vmatpush1.msra.mxu0 %v1554
    %1736 = vmatprep.subr.mxu0 %v1557
    %1737 = vmatpush1.msra.mxu0 %v1556
    %1738 = vmatprep.subr.mxu0 %v1559
    %1739 = vmatpush1.msra.mxu0 %v1558
    %1740 = vmatprep.subr.mxu0 %v1561
    %1741 = vmatpush1.msra.mxu0 %v1560
    %1742 = vmatprep.subr.mxu0 %v1563
    %1743 = vmatpush1.msra.mxu0 %v1562
    %1744 = vmatprep.subr.mxu0 %v1565
    %1745 = vmatpush1.msra.mxu0 %v1564
    %1746 = vmatprep.subr.mxu0 %v1567
    %1747 = vmatpush1.msra.mxu0 %v1566
    %1748 = vmatprep.subr.mxu0 %v1569
    %1749 = vmatpush1.msra.mxu0 %v1568
    %1750 = vmatprep.subr.mxu0 %v1571
    %1751 = vmatpush1.msra.mxu0 %v1570
    %1752 = vmatprep.subr.mxu0 %v1573
    %1753 = vmatpush1.msra.mxu0 %v1572
    %1754 = vmatprep.subr.mxu0 %v1575
    %1755 = vmatpush1.msra.mxu0 %v1574
    %1756 = vmatprep.subr.mxu0 %v1577
    %1757 = vmatpush1.msra.mxu0 %v1576
    %1758 = vmatprep.subr.mxu0 %v1579
    %1759 = vmatpush1.msra.mxu0 %v1578
    %1760 = vmatprep.mubr.f32.mxu0 %v1691
    %1761 = vmatmul.mubr.f32.gmra.mrb[0].mxu0 %v1690
    %v1762 = vpop.f32.mrb[0].mxu0
    %v1763 = vadd.f32 0.0, %v1762
    %v1764 = vpop.f32.mrb[0].mxu0
    %v1765 = vadd.f32 0.0, %v1764
    %1766 = vmatprep.mubr.f32.mxu0 %v1693
    %1767 = vmatmul.mubr.f32.gmra.mrb[0].mxu0 %v1692
    %v1768 = vpop.f32.mrb[0].mxu0
    %v1769 = vadd.f32 0.0, %v1768
    %v1770 = vpop.f32.mrb[0].mxu0
    %v1771 = vadd.f32 0.0, %v1770
    %1772 = vmatprep.mubr.f32.mxu0 %v1695
    %1773 = vmatmul.mubr.f32.gmra.mrb[0].mxu0 %v1694
    %v1774 = vpop.f32.mrb[0].mxu0
    %v1775 = vadd.f32 0.0, %v1774
    %v1776 = vpop.f32.mrb[0].mxu0
    %v1777 = vadd.f32 0.0, %v1776
    %1778 = vdwg.mxu0
    %v1779 = vadd.f32 %v1509, %v1763
    %v1780 = vadd.f32 %v1510, %v1765
    %v1781 = vadd.f32 %v1511, %v1769
    %v1782 = vadd.f32 %v1512, %v1771
    %v1783 = vadd.f32 %v1513, %v1775
    %v1784 = vadd.f32 %v1514, %v1777
    %s1785 = scalar_lea.vmem [#allocation5], 2560
    %v1786 = vld [vmem:[%s1785] sm:$0xff]
    %v1787 = vld [vmem:[%s1785 + $0x8] sm:$0xff]
    %v1788 = vld [vmem:[%s1785 + $0x10] sm:$0xff]
    %v1789 = vld [vmem:[%s1785 + $0x18] sm:$0xff]
    %v1790 = vld [vmem:[%s1785 + $0x20] sm:$0xff]
    %v1791 = vld [vmem:[%s1785 + $0x28] sm:$0xff]
    %v1792 = vld [vmem:[%s1785 + $0x30] sm:$0xff]
    %v1793 = vld [vmem:[%s1785 + $0x38] sm:$0xff]
    %v1794 = vld [vmem:[%s1785 + $0x40] sm:$0xff]
    %v1795 = vld [vmem:[%s1785 + $0x48] sm:$0xff]
    %v1796 = vld [vmem:[%s1785 + $0x50] sm:$0xff]
    %v1797 = vld [vmem:[%s1785 + $0x58] sm:$0xff]
    %v1798 = vld [vmem:[%s1785 + $0x60] sm:$0xff]
    %v1799 = vld [vmem:[%s1785 + $0x68] sm:$0xff]
    %v1800 = vld [vmem:[%s1785 + $0x70] sm:$0xff]
    %v1801 = vld [vmem:[%s1785 + $0x78] sm:$0xff]
    %v1802 = vld [vmem:[%s1785 + $0x80] sm:$0xff]
    %v1803 = vld [vmem:[%s1785 + $0x88] sm:$0xff]
    %v1804 = vld [vmem:[%s1785 + $0x90] sm:$0xff]
    %v1805 = vld [vmem:[%s1785 + $0x98] sm:$0xff]
    %v1806 = vld [vmem:[%s1785 + $0xa0] sm:$0xff]
    %v1807 = vld [vmem:[%s1785 + $0xa8] sm:$0xff]
    %v1808 = vld [vmem:[%s1785 + $0xb0] sm:$0xff]
    %v1809 = vld [vmem:[%s1785 + $0xb8] sm:$0xff]
    %v1810 = vld [vmem:[%s1785 + $0xc0] sm:$0xff]
    %v1811 = vld [vmem:[%s1785 + $0xc8] sm:$0xff]
    %v1812 = vld [vmem:[%s1785 + $0xd0] sm:$0xff]
    %v1813 = vld [vmem:[%s1785 + $0xd8] sm:$0xff]
    %v1814 = vld [vmem:[%s1785 + $0xe0] sm:$0xff]
    %v1815 = vld [vmem:[%s1785 + $0xe8] sm:$0xff]
    %v1816 = vld [vmem:[%s1785 + $0xf0] sm:$0xff]
    %v1817 = vld [vmem:[%s1785 + $0xf8] sm:$0xff]
    %v1818 = vld [vmem:[%s1785 + $0x100] sm:$0xff]
    %v1819 = vld [vmem:[%s1785 + $0x108] sm:$0xff]
    %v1820 = vld [vmem:[%s1785 + $0x110] sm:$0xff]
    %v1821 = vld [vmem:[%s1785 + $0x118] sm:$0xff]
    %v1822 = vld [vmem:[%s1785 + $0x120] sm:$0xff]
    %v1823 = vld [vmem:[%s1785 + $0x128] sm:$0xff]
    %v1824 = vld [vmem:[%s1785 + $0x130] sm:$0xff]
    %v1825 = vld [vmem:[%s1785 + $0x138] sm:$0xff]
    %v1826 = vld [vmem:[%s1785 + $0x140] sm:$0xff]
    %v1827 = vld [vmem:[%s1785 + $0x148] sm:$0xff]
    %v1828 = vld [vmem:[%s1785 + $0x150] sm:$0xff]
    %v1829 = vld [vmem:[%s1785 + $0x158] sm:$0xff]
    %v1830 = vld [vmem:[%s1785 + $0x160] sm:$0xff]
    %v1831 = vld [vmem:[%s1785 + $0x168] sm:$0xff]
    %v1832 = vld [vmem:[%s1785 + $0x170] sm:$0xff]
    %v1833 = vld [vmem:[%s1785 + $0x178] sm:$0xff]
    %v1834 = vld [vmem:[%s1785 + $0x180] sm:$0xff]
    %v1835 = vld [vmem:[%s1785 + $0x188] sm:$0xff]
    %v1836 = vld [vmem:[%s1785 + $0x190] sm:$0xff]
    %v1837 = vld [vmem:[%s1785 + $0x198] sm:$0xff]
    %v1838 = vld [vmem:[%s1785 + $0x1a0] sm:$0xff]
    %v1839 = vld [vmem:[%s1785 + $0x1a8] sm:$0xff]
    %v1840 = vld [vmem:[%s1785 + $0x1b0] sm:$0xff]
    %v1841 = vld [vmem:[%s1785 + $0x1b8] sm:$0xff]
    %v1842 = vld [vmem:[%s1785 + $0x1c0] sm:$0xff]
    %v1843 = vld [vmem:[%s1785 + $0x1c8] sm:$0xff]
    %v1844 = vld [vmem:[%s1785 + $0x1d0] sm:$0xff]
    %v1845 = vld [vmem:[%s1785 + $0x1d8] sm:$0xff]
    %v1846 = vld [vmem:[%s1785 + $0x1e0] sm:$0xff]
    %v1847 = vld [vmem:[%s1785 + $0x1e8] sm:$0xff]
    %v1848 = vld [vmem:[%s1785 + $0x1f0] sm:$0xff]
    %v1849 = vld [vmem:[%s1785 + $0x1f8] sm:$0xff]
    %1851 = vset.pattern.permute.xlu0 0
    %1852 = vperm.xlu0 %1851, %v97
    %v1853 = vpop.permute.xlu0 %1852
    %1856 = vset.pattern.permute.xlu0 0
    %1857 = vperm.xlu0 %1856, %v98
    %v1858 = vpop.permute.xlu0 %1857
    %1861 = vset.pattern.permute.xlu0 0
    %1862 = vperm.xlu0 %1861, %v99
    %v1863 = vpop.permute.xlu0 %1862
    %v1865 = vmul.f32 %v436, %v1853
    %v1866 = vmul.f32 %v437, %v1853
    %v1867 = vmul.f32 %v438, %v1858
    %v1868 = vmul.f32 %v439, %v1858
    %v1869 = vmul.f32 %v440, %v1863
    %v1870 = vmul.f32 %v441, %v1863
    %1871 = vmatprep.subr.mxu0 %v1787
    %1872 = vmatpush1.msra.mxu0 %v1786
    %1873 = vmatprep.subr.mxu0 %v1789
    %1874 = vmatpush1.msra.mxu0 %v1788
    %1875 = vmatprep.subr.mxu0 %v1791
    %1876 = vmatpush1.msra.mxu0 %v1790
    %1877 = vmatprep.subr.mxu0 %v1793
    %1878 = vmatpush1.msra.mxu0 %v1792
    %1879 = vmatprep.subr.mxu0 %v1795
    %1880 = vmatpush1.msra.mxu0 %v1794
    %1881 = vmatprep.subr.mxu0 %v1797
    %1882 = vmatpush1.msra.mxu0 %v1796
    %1883 = vmatprep.subr.mxu0 %v1799
    %1884 = vmatpush1.msra.mxu0 %v1798
    %1885 = vmatprep.subr.mxu0 %v1801
    %1886 = vmatpush1.msra.mxu0 %v1800
    %1887 = vmatprep.subr.mxu0 %v1803
    %1888 = vmatpush1.msra.mxu0 %v1802
    %1889 = vmatprep.subr.mxu0 %v1805
    %1890 = vmatpush1.msra.mxu0 %v1804
    %1891 = vmatprep.subr.mxu0 %v1807
    %1892 = vmatpush1.msra.mxu0 %v1806
    %1893 = vmatprep.subr.mxu0 %v1809
    %1894 = vmatpush1.msra.mxu0 %v1808
    %1895 = vmatprep.subr.mxu0 %v1811
    %1896 = vmatpush1.msra.mxu0 %v1810
    %1897 = vmatprep.subr.mxu0 %v1813
    %1898 = vmatpush1.msra.mxu0 %v1812
    %1899 = vmatprep.subr.mxu0 %v1815
    %1900 = vmatpush1.msra.mxu0 %v1814
    %1901 = vmatprep.subr.mxu0 %v1817
    %1902 = vmatpush1.msra.mxu0 %v1816
    %1903 = vmatprep.subr.mxu0 %v1819
    %1904 = vmatpush1.msra.mxu0 %v1818
    %1905 = vmatprep.subr.mxu0 %v1821
    %1906 = vmatpush1.msra.mxu0 %v1820
    %1907 = vmatprep.subr.mxu0 %v1823
    %1908 = vmatpush1.msra.mxu0 %v1822
    %1909 = vmatprep.subr.mxu0 %v1825
    %1910 = vmatpush1.msra.mxu0 %v1824
    %1911 = vmatprep.subr.mxu0 %v1827
    %1912 = vmatpush1.msra.mxu0 %v1826
    %1913 = vmatprep.subr.mxu0 %v1829
    %1914 = vmatpush1.msra.mxu0 %v1828
    %1915 = vmatprep.subr.mxu0 %v1831
    %1916 = vmatpush1.msra.mxu0 %v1830
    %1917 = vmatprep.subr.mxu0 %v1833
    %1918 = vmatpush1.msra.mxu0 %v1832
    %1919 = vmatprep.subr.mxu0 %v1835
    %1920 = vmatpush1.msra.mxu0 %v1834
    %1921 = vmatprep.subr.mxu0 %v1837
    %1922 = vmatpush1.msra.mxu0 %v1836
    %1923 = vmatprep.subr.mxu0 %v1839
    %1924 = vmatpush1.msra.mxu0 %v1838
    %1925 = vmatprep.subr.mxu0 %v1841
    %1926 = vmatpush1.msra.mxu0 %v1840
    %1927 = vmatprep.subr.mxu0 %v1843
    %1928 = vmatpush1.msra.mxu0 %v1842
    %1929 = vmatprep.subr.mxu0 %v1845
    %1930 = vmatpush1.msra.mxu0 %v1844
    %1931 = vmatprep.subr.mxu0 %v1847
    %1932 = vmatpush1.msra.mxu0 %v1846
    %1933 = vmatprep.subr.mxu0 %v1849
    %1934 = vmatpush1.msra.mxu0 %v1848
    %1935 = vmatprep.mubr.f32.mxu0 %v1866
    %1936 = vmatmul.mubr.f32.gmra.mrb[0].mxu0 %v1865
    %v1937 = vpop.f32.mrb[0].mxu0
    %v1938 = vadd.f32 0.0, %v1937
    %v1939 = vpop.f32.mrb[0].mxu0
    %v1940 = vadd.f32 0.0, %v1939
    %1941 = vmatprep.mubr.f32.mxu0 %v1868
    %1942 = vmatmul.mubr.f32.gmra.mrb[0].mxu0 %v1867
    %v1943 = vpop.f32.mrb[0].mxu0
    %v1944 = vadd.f32 0.0, %v1943
    %v1945 = vpop.f32.mrb[0].mxu0
    %v1946 = vadd.f32 0.0, %v1945
    %1947 = vmatprep.mubr.f32.mxu0 %v1870
    %1948 = vmatmul.mubr.f32.gmra.mrb[0].mxu0 %v1869
    %v1949 = vpop.f32.mrb[0].mxu0
    %v1950 = vadd.f32 0.0, %v1949
    %v1951 = vpop.f32.mrb[0].mxu0
    %v1952 = vadd.f32 0.0, %v1951
    %1953 = vdwg.mxu0
    %v1954 = vadd.f32 %v1684, %v1938
    %v1955 = vadd.f32 %v1685, %v1940
    %v1956 = vadd.f32 %v1686, %v1944
    %v1957 = vadd.f32 %v1687, %v1946
    %v1958 = vadd.f32 %v1688, %v1950
    %v1959 = vadd.f32 %v1689, %v1952
    %v1960 = vmul.f32 %v454, %v1853
    %v1961 = vmul.f32 %v455, %v1853
    %v1962 = vmul.f32 %v456, %v1858
    %v1963 = vmul.f32 %v457, %v1858
    %v1964 = vmul.f32 %v458, %v1863
    %v1965 = vmul.f32 %v459, %v1863
    %1966 = vmatprep.subr.mxu0 %v1787
    %1967 = vmatpush1.msra.mxu0 %v1786
    %1968 = vmatprep.subr.mxu0 %v1789
    %1969 = vmatpush1.msra.mxu0 %v1788
    %1970 = vmatprep.subr.mxu0 %v1791
    %1971 = vmatpush1.msra.mxu0 %v1790
    %1972 = vmatprep.subr.mxu0 %v1793
    %1973 = vmatpush1.msra.mxu0 %v1792
    %1974 = vmatprep.subr.mxu0 %v1795
    %1975 = vmatpush1.msra.mxu0 %v1794
    %1976 = vmatprep.subr.mxu0 %v1797
    %1977 = vmatpush1.msra.mxu0 %v1796
    %1978 = vmatprep.subr.mxu0 %v1799
    %1979 = vmatpush1.msra.mxu0 %v1798
    %1980 = vmatprep.subr.mxu0 %v1801
    %1981 = vmatpush1.msra.mxu0 %v1800
    %1982 = vmatprep.subr.mxu0 %v1803
    %1983 = vmatpush1.msra.mxu0 %v1802
    %1984 = vmatprep.subr.mxu0 %v1805
    %1985 = vmatpush1.msra.mxu0 %v1804
    %1986 = vmatprep.subr.mxu0 %v1807
    %1987 = vmatpush1.msra.mxu0 %v1806
    %1988 = vmatprep.subr.mxu0 %v1809
    %1989 = vmatpush1.msra.mxu0 %v1808
    %1990 = vmatprep.subr.mxu0 %v1811
    %1991 = vmatpush1.msra.mxu0 %v1810
    %1992 = vmatprep.subr.mxu0 %v1813
    %1993 = vmatpush1.msra.mxu0 %v1812
    %1994 = vmatprep.subr.mxu0 %v1815
    %1995 = vmatpush1.msra.mxu0 %v1814
    %1996 = vmatprep.subr.mxu0 %v1817
    %1997 = vmatpush1.msra.mxu0 %v1816
    %1998 = vmatprep.subr.mxu0 %v1819
    %1999 = vmatpush1.msra.mxu0 %v1818
    %2000 = vmatprep.subr.mxu0 %v1821
    %2001 = vmatpush1.msra.mxu0 %v1820
    %2002 = vmatprep.subr.mxu0 %v1823
    %2003 = vmatpush1.msra.mxu0 %v1822
    %2004 = vmatprep.subr.mxu0 %v1825
    %2005 = vmatpush1.msra.mxu0 %v1824
    %2006 = vmatprep.subr.mxu0 %v1827
    %2007 = vmatpush1.msra.mxu0 %v1826
    %2008 = vmatprep.subr.mxu0 %v1829
    %2009 = vmatpush1.msra.mxu0 %v1828
    %2010 = vmatprep.subr.mxu0 %v1831
    %2011 = vmatpush1.msra.mxu0 %v1830
    %2012 = vmatprep.subr.mxu0 %v1833
    %2013 = vmatpush1.msra.mxu0 %v1832
    %2014 = vmatprep.subr.mxu0 %v1835
    %2015 = vmatpush1.msra.mxu0 %v1834
    %2016 = vmatprep.subr.mxu0 %v1837
    %2017 = vmatpush1.msra.mxu0 %v1836
    %2018 = vmatprep.subr.mxu0 %v1839
    %2019 = vmatpush1.msra.mxu0 %v1838
    %2020 = vmatprep.subr.mxu0 %v1841
    %2021 = vmatpush1.msra.mxu0 %v1840
    %2022 = vmatprep.subr.mxu0 %v1843
    %2023 = vmatpush1.msra.mxu0 %v1842
    %2024 = vmatprep.subr.mxu0 %v1845
    %2025 = vmatpush1.msra.mxu0 %v1844
    %2026 = vmatprep.subr.mxu0 %v1847
    %2027 = vmatpush1.msra.mxu0 %v1846
    %2028 = vmatprep.subr.mxu0 %v1849
    %2029 = vmatpush1.msra.mxu0 %v1848
    %2030 = vmatprep.mubr.f32.mxu0 %v1961
    %2031 = vmatmul.mubr.f32.gmra.mrb[0].mxu0 %v1960
    %v2032 = vpop.f32.mrb[0].mxu0
    %v2033 = vadd.f32 0.0, %v2032
    %v2034 = vpop.f32.mrb[0].mxu0
    %v2035 = vadd.f32 0.0, %v2034
    %2036 = vmatprep.mubr.f32.mxu0 %v1963
    %2037 = vmatmul.mubr.f32.gmra.mrb[0].mxu0 %v1962
    %v2038 = vpop.f32.mrb[0].mxu0
    %v2039 = vadd.f32 0.0, %v2038
    %v2040 = vpop.f32.mrb[0].mxu0
    %v2041 = vadd.f32 0.0, %v2040
    %2042 = vmatprep.mubr.f32.mxu0 %v1965
    %2043 = vmatmul.mubr.f32.gmra.mrb[0].mxu0 %v1964
    %v2044 = vpop.f32.mrb[0].mxu0
    %v2045 = vadd.f32 0.0, %v2044
    %v2046 = vpop.f32.mrb[0].mxu0
    %v2047 = vadd.f32 0.0, %v2046
    %2048 = vdwg.mxu0
    %v2049 = vadd.f32 %v1779, %v2033
    %v2050 = vadd.f32 %v1780, %v2035
    %v2051 = vadd.f32 %v1781, %v2039
    %v2052 = vadd.f32 %v1782, %v2041
    %v2053 = vadd.f32 %v1783, %v2045
    %v2054 = vadd.f32 %v1784, %v2047
    %s2055 = scalar_lea.vmem [#allocation5], 3072
    %v2056 = vld [vmem:[%s2055] sm:$0xff]
    %v2057 = vld [vmem:[%s2055 + $0x8] sm:$0xff]
    %v2058 = vld [vmem:[%s2055 + $0x10] sm:$0xff]
    %v2059 = vld [vmem:[%s2055 + $0x18] sm:$0xff]
    %v2060 = vld [vmem:[%s2055 + $0x20] sm:$0xff]
    %v2061 = vld [vmem:[%s2055 + $0x28] sm:$0xff]
    %v2062 = vld [vmem:[%s2055 + $0x30] sm:$0xff]
    %v2063 = vld [vmem:[%s2055 + $0x38] sm:$0xff]
    %v2064 = vld [vmem:[%s2055 + $0x40] sm:$0xff]
    %v2065 = vld [vmem:[%s2055 + $0x48] sm:$0xff]
    %v2066 = vld [vmem:[%s2055 + $0x50] sm:$0xff]
    %v2067 = vld [vmem:[%s2055 + $0x58] sm:$0xff]
    %v2068 = vld [vmem:[%s2055 + $0x60] sm:$0xff]
    %v2069 = vld [vmem:[%s2055 + $0x68] sm:$0xff]
    %v2070 = vld [vmem:[%s2055 + $0x70] sm:$0xff]
    %v2071 = vld [vmem:[%s2055 + $0x78] sm:$0xff]
    %v2072 = vld [vmem:[%s2055 + $0x80] sm:$0xff]
    %v2073 = vld [vmem:[%s2055 + $0x88] sm:$0xff]
    %v2074 = vld [vmem:[%s2055 + $0x90] sm:$0xff]
    %v2075 = vld [vmem:[%s2055 + $0x98] sm:$0xff]
    %v2076 = vld [vmem:[%s2055 + $0xa0] sm:$0xff]
    %v2077 = vld [vmem:[%s2055 + $0xa8] sm:$0xff]
    %v2078 = vld [vmem:[%s2055 + $0xb0] sm:$0xff]
    %v2079 = vld [vmem:[%s2055 + $0xb8] sm:$0xff]
    %v2080 = vld [vmem:[%s2055 + $0xc0] sm:$0xff]
    %v2081 = vld [vmem:[%s2055 + $0xc8] sm:$0xff]
    %v2082 = vld [vmem:[%s2055 + $0xd0] sm:$0xff]
    %v2083 = vld [vmem:[%s2055 + $0xd8] sm:$0xff]
    %v2084 = vld [vmem:[%s2055 + $0xe0] sm:$0xff]
    %v2085 = vld [vmem:[%s2055 + $0xe8] sm:$0xff]
    %v2086 = vld [vmem:[%s2055 + $0xf0] sm:$0xff]
    %v2087 = vld [vmem:[%s2055 + $0xf8] sm:$0xff]
    %v2088 = vld [vmem:[%s2055 + $0x100] sm:$0xff]
    %v2089 = vld [vmem:[%s2055 + $0x108] sm:$0xff]
    %v2090 = vld [vmem:[%s2055 + $0x110] sm:$0xff]
    %v2091 = vld [vmem:[%s2055 + $0x118] sm:$0xff]
    %v2092 = vld [vmem:[%s2055 + $0x120] sm:$0xff]
    %v2093 = vld [vmem:[%s2055 + $0x128] sm:$0xff]
    %v2094 = vld [vmem:[%s2055 + $0x130] sm:$0xff]
    %v2095 = vld [vmem:[%s2055 + $0x138] sm:$0xff]
    %v2096 = vld [vmem:[%s2055 + $0x140] sm:$0xff]
    %v2097 = vld [vmem:[%s2055 + $0x148] sm:$0xff]
    %v2098 = vld [vmem:[%s2055 + $0x150] sm:$0xff]
    %v2099 = vld [vmem:[%s2055 + $0x158] sm:$0xff]
    %v2100 = vld [vmem:[%s2055 + $0x160] sm:$0xff]
    %v2101 = vld [vmem:[%s2055 + $0x168] sm:$0xff]
    %v2102 = vld [vmem:[%s2055 + $0x170] sm:$0xff]
    %v2103 = vld [vmem:[%s2055 + $0x178] sm:$0xff]
    %v2104 = vld [vmem:[%s2055 + $0x180] sm:$0xff]
    %v2105 = vld [vmem:[%s2055 + $0x188] sm:$0xff]
    %v2106 = vld [vmem:[%s2055 + $0x190] sm:$0xff]
    %v2107 = vld [vmem:[%s2055 + $0x198] sm:$0xff]
    %v2108 = vld [vmem:[%s2055 + $0x1a0] sm:$0xff]
    %v2109 = vld [vmem:[%s2055 + $0x1a8] sm:$0xff]
    %v2110 = vld [vmem:[%s2055 + $0x1b0] sm:$0xff]
    %v2111 = vld [vmem:[%s2055 + $0x1b8] sm:$0xff]
    %v2112 = vld [vmem:[%s2055 + $0x1c0] sm:$0xff]
    %v2113 = vld [vmem:[%s2055 + $0x1c8] sm:$0xff]
    %v2114 = vld [vmem:[%s2055 + $0x1d0] sm:$0xff]
    %v2115 = vld [vmem:[%s2055 + $0x1d8] sm:$0xff]
    %v2116 = vld [vmem:[%s2055 + $0x1e0] sm:$0xff]
    %v2117 = vld [vmem:[%s2055 + $0x1e8] sm:$0xff]
    %v2118 = vld [vmem:[%s2055 + $0x1f0] sm:$0xff]
    %v2119 = vld [vmem:[%s2055 + $0x1f8] sm:$0xff]
    %2121 = vset.pattern.permute.xlu0 0
    %2122 = vperm.xlu0 %2121, %v100
    %v2123 = vpop.permute.xlu0 %2122
    %2126 = vset.pattern.permute.xlu0 0
    %2127 = vperm.xlu0 %2126, %v101
    %v2128 = vpop.permute.xlu0 %2127
    %2131 = vset.pattern.permute.xlu0 0
    %2132 = vperm.xlu0 %2131, %v102
    %v2133 = vpop.permute.xlu0 %2132
    %v2135 = vmul.f32 %v436, %v2123
    %v2136 = vmul.f32 %v437, %v2123
    %v2137 = vmul.f32 %v438, %v2128
    %v2138 = vmul.f32 %v439, %v2128
    %v2139 = vmul.f32 %v440, %v2133
    %v2140 = vmul.f32 %v441, %v2133
    %2141 = vmatprep.subr.mxu0 %v2057
    %2142 = vmatpush1.msra.mxu0 %v2056
    %2143 = vmatprep.subr.mxu0 %v2059
    %2144 = vmatpush1.msra.mxu0 %v2058
    %2145 = vmatprep.subr.mxu0 %v2061
    %2146 = vmatpush1.msra.mxu0 %v2060
    %2147 = vmatprep.subr.mxu0 %v2063
    %2148 = vmatpush1.msra.mxu0 %v2062
    %2149 = vmatprep.subr.mxu0 %v2065
    %2150 = vmatpush1.msra.mxu0 %v2064
    %2151 = vmatprep.subr.mxu0 %v2067
    %2152 = vmatpush1.msra.mxu0 %v2066
    %2153 = vmatprep.subr.mxu0 %v2069
    %2154 = vmatpush1.msra.mxu0 %v2068
    %2155 = vmatprep.subr.mxu0 %v2071
    %2156 = vmatpush1.msra.mxu0 %v2070
    %2157 = vmatprep.subr.mxu0 %v2073
    %2158 = vmatpush1.msra.mxu0 %v2072
    %2159 = vmatprep.subr.mxu0 %v2075
    %2160 = vmatpush1.msra.mxu0 %v2074
    %2161 = vmatprep.subr.mxu0 %v2077
    %2162 = vmatpush1.msra.mxu0 %v2076
    %2163 = vmatprep.subr.mxu0 %v2079
    %2164 = vmatpush1.msra.mxu0 %v2078
    %2165 = vmatprep.subr.mxu0 %v2081
    %2166 = vmatpush1.msra.mxu0 %v2080
    %2167 = vmatprep.subr.mxu0 %v2083
    %2168 = vmatpush1.msra.mxu0 %v2082
    %2169 = vmatprep.subr.mxu0 %v2085
    %2170 = vmatpush1.msra.mxu0 %v2084
    %2171 = vmatprep.subr.mxu0 %v2087
    %2172 = vmatpush1.msra.mxu0 %v2086
    %2173 = vmatprep.subr.mxu0 %v2089
    %2174 = vmatpush1.msra.mxu0 %v2088
    %2175 = vmatprep.subr.mxu0 %v2091
    %2176 = vmatpush1.msra.mxu0 %v2090
    %2177 = vmatprep.subr.mxu0 %v2093
    %2178 = vmatpush1.msra.mxu0 %v2092
    %2179 = vmatprep.subr.mxu0 %v2095
    %2180 = vmatpush1.msra.mxu0 %v2094
    %2181 = vmatprep.subr.mxu0 %v2097
    %2182 = vmatpush1.msra.mxu0 %v2096
    %2183 = vmatprep.subr.mxu0 %v2099
    %2184 = vmatpush1.msra.mxu0 %v2098
    %2185 = vmatprep.subr.mxu0 %v2101
    %2186 = vmatpush1.msra.mxu0 %v2100
    %2187 = vmatprep.subr.mxu0 %v2103
    %2188 = vmatpush1.msra.mxu0 %v2102
    %2189 = vmatprep.subr.mxu0 %v2105
    %2190 = vmatpush1.msra.mxu0 %v2104
    %2191 = vmatprep.subr.mxu0 %v2107
    %2192 = vmatpush1.msra.mxu0 %v2106
    %2193 = vmatprep.subr.mxu0 %v2109
    %2194 = vmatpush1.msra.mxu0 %v2108
    %2195 = vmatprep.subr.mxu0 %v2111
    %2196 = vmatpush1.msra.mxu0 %v2110
    %2197 = vmatprep.subr.mxu0 %v2113
    %2198 = vmatpush1.msra.mxu0 %v2112
    %2199 = vmatprep.subr.mxu0 %v2115
    %2200 = vmatpush1.msra.mxu0 %v2114
    %2201 = vmatprep.subr.mxu0 %v2117
    %2202 = vmatpush1.msra.mxu0 %v2116
    %2203 = vmatprep.subr.mxu0 %v2119
    %2204 = vmatpush1.msra.mxu0 %v2118
    %2205 = vmatprep.mubr.f32.mxu0 %v2136
    %2206 = vmatmul.mubr.f32.gmra.mrb[0].mxu0 %v2135
    %v2207 = vpop.f32.mrb[0].mxu0
    %v2208 = vadd.f32 0.0, %v2207
    %v2209 = vpop.f32.mrb[0].mxu0
    %v2210 = vadd.f32 0.0, %v2209
    %2211 = vmatprep.mubr.f32.mxu0 %v2138
    %2212 = vmatmul.mubr.f32.gmra.mrb[0].mxu0 %v2137
    %v2213 = vpop.f32.mrb[0].mxu0
    %v2214 = vadd.f32 0.0, %v2213
    %v2215 = vpop.f32.mrb[0].mxu0
    %v2216 = vadd.f32 0.0, %v2215
    %2217 = vmatprep.mubr.f32.mxu0 %v2140
    %2218 = vmatmul.mubr.f32.gmra.mrb[0].mxu0 %v2139
    %v2219 = vpop.f32.mrb[0].mxu0
    %v2220 = vadd.f32 0.0, %v2219
    %v2221 = vpop.f32.mrb[0].mxu0
    %v2222 = vadd.f32 0.0, %v2221
    %2223 = vdwg.mxu0
    %v2224 = vadd.f32 %v1954, %v2208
    %v2225 = vadd.f32 %v1955, %v2210
    %v2226 = vadd.f32 %v1956, %v2214
    %v2227 = vadd.f32 %v1957, %v2216
    %v2228 = vadd.f32 %v1958, %v2220
    %v2229 = vadd.f32 %v1959, %v2222
    %v2230 = vmul.f32 %v454, %v2123
    %v2231 = vmul.f32 %v455, %v2123
    %v2232 = vmul.f32 %v456, %v2128
    %v2233 = vmul.f32 %v457, %v2128
    %v2234 = vmul.f32 %v458, %v2133
    %v2235 = vmul.f32 %v459, %v2133
    %2236 = vmatprep.subr.mxu0 %v2057
    %2237 = vmatpush1.msra.mxu0 %v2056
    %2238 = vmatprep.subr.mxu0 %v2059
    %2239 = vmatpush1.msra.mxu0 %v2058
    %2240 = vmatprep.subr.mxu0 %v2061
    %2241 = vmatpush1.msra.mxu0 %v2060
    %2242 = vmatprep.subr.mxu0 %v2063
    %2243 = vmatpush1.msra.mxu0 %v2062
    %2244 = vmatprep.subr.mxu0 %v2065
    %2245 = vmatpush1.msra.mxu0 %v2064
    %2246 = vmatprep.subr.mxu0 %v2067
    %2247 = vmatpush1.msra.mxu0 %v2066
    %2248 = vmatprep.subr.mxu0 %v2069
    %2249 = vmatpush1.msra.mxu0 %v2068
    %2250 = vmatprep.subr.mxu0 %v2071
    %2251 = vmatpush1.msra.mxu0 %v2070
    %2252 = vmatprep.subr.mxu0 %v2073
    %2253 = vmatpush1.msra.mxu0 %v2072
    %2254 = vmatprep.subr.mxu0 %v2075
    %2255 = vmatpush1.msra.mxu0 %v2074
    %2256 = vmatprep.subr.mxu0 %v2077
    %2257 = vmatpush1.msra.mxu0 %v2076
    %2258 = vmatprep.subr.mxu0 %v2079
    %2259 = vmatpush1.msra.mxu0 %v2078
    %2260 = vmatprep.subr.mxu0 %v2081
    %2261 = vmatpush1.msra.mxu0 %v2080
    %2262 = vmatprep.subr.mxu0 %v2083
    %2263 = vmatpush1.msra.mxu0 %v2082
    %2264 = vmatprep.subr.mxu0 %v2085
    %2265 = vmatpush1.msra.mxu0 %v2084
    %2266 = vmatprep.subr.mxu0 %v2087
    %2267 = vmatpush1.msra.mxu0 %v2086
    %2268 = vmatprep.subr.mxu0 %v2089
    %2269 = vmatpush1.msra.mxu0 %v2088
    %2270 = vmatprep.subr.mxu0 %v2091
    %2271 = vmatpush1.msra.mxu0 %v2090
    %2272 = vmatprep.subr.mxu0 %v2093
    %2273 = vmatpush1.msra.mxu0 %v2092
    %2274 = vmatprep.subr.mxu0 %v2095
    %2275 = vmatpush1.msra.mxu0 %v2094
    %2276 = vmatprep.subr.mxu0 %v2097
    %2277 = vmatpush1.msra.mxu0 %v2096
    %2278 = vmatprep.subr.mxu0 %v2099
    %2279 = vmatpush1.msra.mxu0 %v2098
    %2280 = vmatprep.subr.mxu0 %v2101
    %2281 = vmatpush1.msra.mxu0 %v2100
    %2282 = vmatprep.subr.mxu0 %v2103
    %2283 = vmatpush1.msra.mxu0 %v2102
    %2284 = vmatprep.subr.mxu0 %v2105
    %2285 = vmatpush1.msra.mxu0 %v2104
    %2286 = vmatprep.subr.mxu0 %v2107
    %2287 = vmatpush1.msra.mxu0 %v2106
    %2288 = vmatprep.subr.mxu0 %v2109
    %2289 = vmatpush1.msra.mxu0 %v2108
    %2290 = vmatprep.subr.mxu0 %v2111
    %2291 = vmatpush1.msra.mxu0 %v2110
    %2292 = vmatprep.subr.mxu0 %v2113
    %2293 = vmatpush1.msra.mxu0 %v2112
    %2294 = vmatprep.subr.mxu0 %v2115
    %2295 = vmatpush1.msra.mxu0 %v2114
    %2296 = vmatprep.subr.mxu0 %v2117
    %2297 = vmatpush1.msra.mxu0 %v2116
    %2298 = vmatprep.subr.mxu0 %v2119
    %2299 = vmatpush1.msra.mxu0 %v2118
    %2300 = vmatprep.mubr.f32.mxu0 %v2231
    %2301 = vmatmul.mubr.f32.gmra.mrb[0].mxu0 %v2230
    %v2302 = vpop.f32.mrb[0].mxu0
    %v2303 = vadd.f32 0.0, %v2302
    %v2304 = vpop.f32.mrb[0].mxu0
    %v2305 = vadd.f32 0.0, %v2304
    %2306 = vmatprep.mubr.f32.mxu0 %v2233
    %2307 = vmatmul.mubr.f32.gmra.mrb[0].mxu0 %v2232
    %v2308 = vpop.f32.mrb[0].mxu0
    %v2309 = vadd.f32 0.0, %v2308
    %v2310 = vpop.f32.mrb[0].mxu0
    %v2311 = vadd.f32 0.0, %v2310
    %2312 = vmatprep.mubr.f32.mxu0 %v2235
    %2313 = vmatmul.mubr.f32.gmra.mrb[0].mxu0 %v2234
    %v2314 = vpop.f32.mrb[0].mxu0
    %v2315 = vadd.f32 0.0, %v2314
    %v2316 = vpop.f32.mrb[0].mxu0
    %v2317 = vadd.f32 0.0, %v2316
    %2318 = vdwg.mxu0
    %v2319 = vadd.f32 %v2049, %v2303
    %v2320 = vadd.f32 %v2050, %v2305
    %v2321 = vadd.f32 %v2051, %v2309
    %v2322 = vadd.f32 %v2052, %v2311
    %v2323 = vadd.f32 %v2053, %v2315
    %v2324 = vadd.f32 %v2054, %v2317
    %s2325 = scalar_lea.vmem [#allocation5], 3584
    %v2326 = vld [vmem:[%s2325] sm:$0xff]
    %v2327 = vld [vmem:[%s2325 + $0x8] sm:$0xff]
    %v2328 = vld [vmem:[%s2325 + $0x10] sm:$0xff]
    %v2329 = vld [vmem:[%s2325 + $0x18] sm:$0xff]
    %v2330 = vld [vmem:[%s2325 + $0x20] sm:$0xff]
    %v2331 = vld [vmem:[%s2325 + $0x28] sm:$0xff]
    %v2332 = vld [vmem:[%s2325 + $0x30] sm:$0xff]
    %v2333 = vld [vmem:[%s2325 + $0x38] sm:$0xff]
    %v2334 = vld [vmem:[%s2325 + $0x40] sm:$0xff]
    %v2335 = vld [vmem:[%s2325 + $0x48] sm:$0xff]
    %v2336 = vld [vmem:[%s2325 + $0x50] sm:$0xff]
    %v2337 = vld [vmem:[%s2325 + $0x58] sm:$0xff]
    %v2338 = vld [vmem:[%s2325 + $0x60] sm:$0xff]
    %v2339 = vld [vmem:[%s2325 + $0x68] sm:$0xff]
    %v2340 = vld [vmem:[%s2325 + $0x70] sm:$0xff]
    %v2341 = vld [vmem:[%s2325 + $0x78] sm:$0xff]
    %v2342 = vld [vmem:[%s2325 + $0x80] sm:$0xff]
    %v2343 = vld [vmem:[%s2325 + $0x88] sm:$0xff]
    %v2344 = vld [vmem:[%s2325 + $0x90] sm:$0xff]
    %v2345 = vld [vmem:[%s2325 + $0x98] sm:$0xff]
    %v2346 = vld [vmem:[%s2325 + $0xa0] sm:$0xff]
    %v2347 = vld [vmem:[%s2325 + $0xa8] sm:$0xff]
    %v2348 = vld [vmem:[%s2325 + $0xb0] sm:$0xff]
    %v2349 = vld [vmem:[%s2325 + $0xb8] sm:$0xff]
    %v2350 = vld [vmem:[%s2325 + $0xc0] sm:$0xff]
    %v2351 = vld [vmem:[%s2325 + $0xc8] sm:$0xff]
    %v2352 = vld [vmem:[%s2325 + $0xd0] sm:$0xff]
    %v2353 = vld [vmem:[%s2325 + $0xd8] sm:$0xff]
    %v2354 = vld [vmem:[%s2325 + $0xe0] sm:$0xff]
    %v2355 = vld [vmem:[%s2325 + $0xe8] sm:$0xff]
    %v2356 = vld [vmem:[%s2325 + $0xf0] sm:$0xff]
    %v2357 = vld [vmem:[%s2325 + $0xf8] sm:$0xff]
    %v2358 = vld [vmem:[%s2325 + $0x100] sm:$0xff]
    %v2359 = vld [vmem:[%s2325 + $0x108] sm:$0xff]
    %v2360 = vld [vmem:[%s2325 + $0x110] sm:$0xff]
    %v2361 = vld [vmem:[%s2325 + $0x118] sm:$0xff]
    %v2362 = vld [vmem:[%s2325 + $0x120] sm:$0xff]
    %v2363 = vld [vmem:[%s2325 + $0x128] sm:$0xff]
    %v2364 = vld [vmem:[%s2325 + $0x130] sm:$0xff]
    %v2365 = vld [vmem:[%s2325 + $0x138] sm:$0xff]
    %v2366 = vld [vmem:[%s2325 + $0x140] sm:$0xff]
    %v2367 = vld [vmem:[%s2325 + $0x148] sm:$0xff]
    %v2368 = vld [vmem:[%s2325 + $0x150] sm:$0xff]
    %v2369 = vld [vmem:[%s2325 + $0x158] sm:$0xff]
    %v2370 = vld [vmem:[%s2325 + $0x160] sm:$0xff]
    %v2371 = vld [vmem:[%s2325 + $0x168] sm:$0xff]
    %v2372 = vld [vmem:[%s2325 + $0x170] sm:$0xff]
    %v2373 = vld [vmem:[%s2325 + $0x178] sm:$0xff]
    %v2374 = vld [vmem:[%s2325 + $0x180] sm:$0xff]
    %v2375 = vld [vmem:[%s2325 + $0x188] sm:$0xff]
    %v2376 = vld [vmem:[%s2325 + $0x190] sm:$0xff]
    %v2377 = vld [vmem:[%s2325 + $0x198] sm:$0xff]
    %v2378 = vld [vmem:[%s2325 + $0x1a0] sm:$0xff]
    %v2379 = vld [vmem:[%s2325 + $0x1a8] sm:$0xff]
    %v2380 = vld [vmem:[%s2325 + $0x1b0] sm:$0xff]
    %v2381 = vld [vmem:[%s2325 + $0x1b8] sm:$0xff]
    %v2382 = vld [vmem:[%s2325 + $0x1c0] sm:$0xff]
    %v2383 = vld [vmem:[%s2325 + $0x1c8] sm:$0xff]
    %v2384 = vld [vmem:[%s2325 + $0x1d0] sm:$0xff]
    %v2385 = vld [vmem:[%s2325 + $0x1d8] sm:$0xff]
    %v2386 = vld [vmem:[%s2325 + $0x1e0] sm:$0xff]
    %v2387 = vld [vmem:[%s2325 + $0x1e8] sm:$0xff]
    %v2388 = vld [vmem:[%s2325 + $0x1f0] sm:$0xff]
    %v2389 = vld [vmem:[%s2325 + $0x1f8] sm:$0xff]
    %2391 = vset.pattern.permute.xlu0 0
    %2392 = vperm.xlu0 %2391, %v103
    %v2393 = vpop.permute.xlu0 %2392
    %2396 = vset.pattern.permute.xlu0 0
    %2397 = vperm.xlu0 %2396, %v104
    %v2398 = vpop.permute.xlu0 %2397
    %2401 = vset.pattern.permute.xlu0 0
    %2402 = vperm.xlu0 %2401, %v105
    %v2403 = vpop.permute.xlu0 %2402
    %v2405 = vmul.f32 %v436, %v2393
    %v2406 = vmul.f32 %v437, %v2393
    %v2407 = vmul.f32 %v438, %v2398
    %v2408 = vmul.f32 %v439, %v2398
    %v2409 = vmul.f32 %v440, %v2403
    %v2410 = vmul.f32 %v441, %v2403
    %2411 = vmatprep.subr.mxu0 %v2327
    %2412 = vmatpush1.msra.mxu0 %v2326
    %2413 = vmatprep.subr.mxu0 %v2329
    %2414 = vmatpush1.msra.mxu0 %v2328
    %2415 = vmatprep.subr.mxu0 %v2331
    %2416 = vmatpush1.msra.mxu0 %v2330
    %2417 = vmatprep.subr.mxu0 %v2333
    %2418 = vmatpush1.msra.mxu0 %v2332
    %2419 = vmatprep.subr.mxu0 %v2335
    %2420 = vmatpush1.msra.mxu0 %v2334
    %2421 = vmatprep.subr.mxu0 %v2337
    %2422 = vmatpush1.msra.mxu0 %v2336
    %2423 = vmatprep.subr.mxu0 %v2339
    %2424 = vmatpush1.msra.mxu0 %v2338
    %2425 = vmatprep.subr.mxu0 %v2341
    %2426 = vmatpush1.msra.mxu0 %v2340
    %2427 = vmatprep.subr.mxu0 %v2343
    %2428 = vmatpush1.msra.mxu0 %v2342
    %2429 = vmatprep.subr.mxu0 %v2345
    %2430 = vmatpush1.msra.mxu0 %v2344
    %2431 = vmatprep.subr.mxu0 %v2347
    %2432 = vmatpush1.msra.mxu0 %v2346
    %2433 = vmatprep.subr.mxu0 %v2349
    %2434 = vmatpush1.msra.mxu0 %v2348
    %2435 = vmatprep.subr.mxu0 %v2351
    %2436 = vmatpush1.msra.mxu0 %v2350
    %2437 = vmatprep.subr.mxu0 %v2353
    %2438 = vmatpush1.msra.mxu0 %v2352
    %2439 = vmatprep.subr.mxu0 %v2355
    %2440 = vmatpush1.msra.mxu0 %v2354
    %2441 = vmatprep.subr.mxu0 %v2357
    %2442 = vmatpush1.msra.mxu0 %v2356
    %2443 = vmatprep.subr.mxu0 %v2359
    %2444 = vmatpush1.msra.mxu0 %v2358
    %2445 = vmatprep.subr.mxu0 %v2361
    %2446 = vmatpush1.msra.mxu0 %v2360
    %2447 = vmatprep.subr.mxu0 %v2363
    %2448 = vmatpush1.msra.mxu0 %v2362
    %2449 = vmatprep.subr.mxu0 %v2365
    %2450 = vmatpush1.msra.mxu0 %v2364
    %2451 = vmatprep.subr.mxu0 %v2367
    %2452 = vmatpush1.msra.mxu0 %v2366
    %2453 = vmatprep.subr.mxu0 %v2369
    %2454 = vmatpush1.msra.mxu0 %v2368
    %2455 = vmatprep.subr.mxu0 %v2371
    %2456 = vmatpush1.msra.mxu0 %v2370
    %2457 = vmatprep.subr.mxu0 %v2373
    %2458 = vmatpush1.msra.mxu0 %v2372
    %2459 = vmatprep.subr.mxu0 %v2375
    %2460 = vmatpush1.msra.mxu0 %v2374
    %2461 = vmatprep.subr.mxu0 %v2377
    %2462 = vmatpush1.msra.mxu0 %v2376
    %2463 = vmatprep.subr.mxu0 %v2379
    %2464 = vmatpush1.msra.mxu0 %v2378
    %2465 = vmatprep.subr.mxu0 %v2381
    %2466 = vmatpush1.msra.mxu0 %v2380
    %2467 = vmatprep.subr.mxu0 %v2383
    %2468 = vmatpush1.msra.mxu0 %v2382
    %2469 = vmatprep.subr.mxu0 %v2385
    %2470 = vmatpush1.msra.mxu0 %v2384
    %2471 = vmatprep.subr.mxu0 %v2387
    %2472 = vmatpush1.msra.mxu0 %v2386
    %2473 = vmatprep.subr.mxu0 %v2389
    %2474 = vmatpush1.msra.mxu0 %v2388
    %2475 = vmatprep.mubr.f32.mxu0 %v2406
    %2476 = vmatmul.mubr.f32.gmra.mrb[0].mxu0 %v2405
    %v2477 = vpop.f32.mrb[0].mxu0
    %v2478 = vadd.f32 0.0, %v2477
    %v2479 = vpop.f32.mrb[0].mxu0
    %v2480 = vadd.f32 0.0, %v2479
    %2481 = vmatprep.mubr.f32.mxu0 %v2408
    %2482 = vmatmul.mubr.f32.gmra.mrb[0].mxu0 %v2407
    %v2483 = vpop.f32.mrb[0].mxu0
    %v2484 = vadd.f32 0.0, %v2483
    %v2485 = vpop.f32.mrb[0].mxu0
    %v2486 = vadd.f32 0.0, %v2485
    %2487 = vmatprep.mubr.f32.mxu0 %v2410
    %2488 = vmatmul.mubr.f32.gmra.mrb[0].mxu0 %v2409
    %v2489 = vpop.f32.mrb[0].mxu0
    %v2490 = vadd.f32 0.0, %v2489
    %v2491 = vpop.f32.mrb[0].mxu0
    %v2492 = vadd.f32 0.0, %v2491
    %2493 = vdwg.mxu0
    %v2494 = vadd.f32 %v2224, %v2478
    %v2495 = vadd.f32 %v2225, %v2480
    %v2496 = vadd.f32 %v2226, %v2484
    %v2497 = vadd.f32 %v2227, %v2486
    %v2498 = vadd.f32 %v2228, %v2490
    %v2499 = vadd.f32 %v2229, %v2492
    %v2500 = vmul.f32 %v454, %v2393
    %v2501 = vmul.f32 %v455, %v2393
    %v2502 = vmul.f32 %v456, %v2398
    %v2503 = vmul.f32 %v457, %v2398
    %v2504 = vmul.f32 %v458, %v2403
    %v2505 = vmul.f32 %v459, %v2403
    %2506 = vmatprep.subr.mxu0 %v2327
    %2507 = vmatpush1.msra.mxu0 %v2326
    %2508 = vmatprep.subr.mxu0 %v2329
    %2509 = vmatpush1.msra.mxu0 %v2328
    %2510 = vmatprep.subr.mxu0 %v2331
    %2511 = vmatpush1.msra.mxu0 %v2330
    %2512 = vmatprep.subr.mxu0 %v2333
    %2513 = vmatpush1.msra.mxu0 %v2332
    %2514 = vmatprep.subr.mxu0 %v2335
    %2515 = vmatpush1.msra.mxu0 %v2334
    %2516 = vmatprep.subr.mxu0 %v2337
    %2517 = vmatpush1.msra.mxu0 %v2336
    %2518 = vmatprep.subr.mxu0 %v2339
    %2519 = vmatpush1.msra.mxu0 %v2338
    %2520 = vmatprep.subr.mxu0 %v2341
    %2521 = vmatpush1.msra.mxu0 %v2340
    %2522 = vmatprep.subr.mxu0 %v2343
    %2523 = vmatpush1.msra.mxu0 %v2342
    %2524 = vmatprep.subr.mxu0 %v2345
    %2525 = vmatpush1.msra.mxu0 %v2344
    %2526 = vmatprep.subr.mxu0 %v2347
    %2527 = vmatpush1.msra.mxu0 %v2346
    %2528 = vmatprep.subr.mxu0 %v2349
    %2529 = vmatpush1.msra.mxu0 %v2348
    %2530 = vmatprep.subr.mxu0 %v2351
    %2531 = vmatpush1.msra.mxu0 %v2350
    %2532 = vmatprep.subr.mxu0 %v2353
    %2533 = vmatpush1.msra.mxu0 %v2352
    %2534 = vmatprep.subr.mxu0 %v2355
    %2535 = vmatpush1.msra.mxu0 %v2354
    %2536 = vmatprep.subr.mxu0 %v2357
    %2537 = vmatpush1.msra.mxu0 %v2356
    %2538 = vmatprep.subr.mxu0 %v2359
    %2539 = vmatpush1.msra.mxu0 %v2358
    %2540 = vmatprep.subr.mxu0 %v2361
    %2541 = vmatpush1.msra.mxu0 %v2360
    %2542 = vmatprep.subr.mxu0 %v2363
    %2543 = vmatpush1.msra.mxu0 %v2362
    %2544 = vmatprep.subr.mxu0 %v2365
    %2545 = vmatpush1.msra.mxu0 %v2364
    %2546 = vmatprep.subr.mxu0 %v2367
    %2547 = vmatpush1.msra.mxu0 %v2366
    %2548 = vmatprep.subr.mxu0 %v2369
    %2549 = vmatpush1.msra.mxu0 %v2368
    %2550 = vmatprep.subr.mxu0 %v2371
    %2551 = vmatpush1.msra.mxu0 %v2370
    %2552 = vmatprep.subr.mxu0 %v2373
    %2553 = vmatpush1.msra.mxu0 %v2372
    %2554 = vmatprep.subr.mxu0 %v2375
    %2555 = vmatpush1.msra.mxu0 %v2374
    %2556 = vmatprep.subr.mxu0 %v2377
    %2557 = vmatpush1.msra.mxu0 %v2376
    %2558 = vmatprep.subr.mxu0 %v2379
    %2559 = vmatpush1.msra.mxu0 %v2378
    %2560 = vmatprep.subr.mxu0 %v2381
    %2561 = vmatpush1.msra.mxu0 %v2380
    %2562 = vmatprep.subr.mxu0 %v2383
    %2563 = vmatpush1.msra.mxu0 %v2382
    %2564 = vmatprep.subr.mxu0 %v2385
    %2565 = vmatpush1.msra.mxu0 %v2384
    %2566 = vmatprep.subr.mxu0 %v2387
    %2567 = vmatpush1.msra.mxu0 %v2386
    %2568 = vmatprep.subr.mxu0 %v2389
    %2569 = vmatpush1.msra.mxu0 %v2388
    %2570 = vmatprep.mubr.f32.mxu0 %v2501
    %2571 = vmatmul.mubr.f32.gmra.mrb[0].mxu0 %v2500
    %v2572 = vpop.f32.mrb[0].mxu0
    %v2573 = vadd.f32 0.0, %v2572
    %v2574 = vpop.f32.mrb[0].mxu0
    %v2575 = vadd.f32 0.0, %v2574
    %2576 = vmatprep.mubr.f32.mxu0 %v2503
    %2577 = vmatmul.mubr.f32.gmra.mrb[0].mxu0 %v2502
    %v2578 = vpop.f32.mrb[0].mxu0
    %v2579 = vadd.f32 0.0, %v2578
    %v2580 = vpop.f32.mrb[0].mxu0
    %v2581 = vadd.f32 0.0, %v2580
    %2582 = vmatprep.mubr.f32.mxu0 %v2505
    %2583 = vmatmul.mubr.f32.gmra.mrb[0].mxu0 %v2504
    %v2584 = vpop.f32.mrb[0].mxu0
    %v2585 = vadd.f32 0.0, %v2584
    %v2586 = vpop.f32.mrb[0].mxu0
    %v2587 = vadd.f32 0.0, %v2586
    %2588 = vdwg.mxu0
    %v2589 = vadd.f32 %v2319, %v2573
    %v2590 = vadd.f32 %v2320, %v2575
    %v2591 = vadd.f32 %v2321, %v2579
    %v2592 = vadd.f32 %v2322, %v2581
    %v2593 = vadd.f32 %v2323, %v2585
    %v2594 = vadd.f32 %v2324, %v2587
    %s2595 = scalar_lea.vmem [#allocation5], 4096
    %v2596 = vld [vmem:[%s2595] sm:$0xff]
    %v2597 = vld [vmem:[%s2595 + $0x8] sm:$0xff]
    %v2598 = vld [vmem:[%s2595 + $0x10] sm:$0xff]
    %v2599 = vld [vmem:[%s2595 + $0x18] sm:$0xff]
    %v2600 = vld [vmem:[%s2595 + $0x20] sm:$0xff]
    %v2601 = vld [vmem:[%s2595 + $0x28] sm:$0xff]
    %v2602 = vld [vmem:[%s2595 + $0x30] sm:$0xff]
    %v2603 = vld [vmem:[%s2595 + $0x38] sm:$0xff]
    %v2604 = vld [vmem:[%s2595 + $0x40] sm:$0xff]
    %v2605 = vld [vmem:[%s2595 + $0x48] sm:$0xff]
    %v2606 = vld [vmem:[%s2595 + $0x50] sm:$0xff]
    %v2607 = vld [vmem:[%s2595 + $0x58] sm:$0xff]
    %v2608 = vld [vmem:[%s2595 + $0x60] sm:$0xff]
    %v2609 = vld [vmem:[%s2595 + $0x68] sm:$0xff]
    %v2610 = vld [vmem:[%s2595 + $0x70] sm:$0xff]
    %v2611 = vld [vmem:[%s2595 + $0x78] sm:$0xff]
    %v2612 = vld [vmem:[%s2595 + $0x80] sm:$0xff]
    %v2613 = vld [vmem:[%s2595 + $0x88] sm:$0xff]
    %v2614 = vld [vmem:[%s2595 + $0x90] sm:$0xff]
    %v2615 = vld [vmem:[%s2595 + $0x98] sm:$0xff]
    %v2616 = vld [vmem:[%s2595 + $0xa0] sm:$0xff]
    %v2617 = vld [vmem:[%s2595 + $0xa8] sm:$0xff]
    %v2618 = vld [vmem:[%s2595 + $0xb0] sm:$0xff]
    %v2619 = vld [vmem:[%s2595 + $0xb8] sm:$0xff]
    %v2620 = vld [vmem:[%s2595 + $0xc0] sm:$0xff]
    %v2621 = vld [vmem:[%s2595 + $0xc8] sm:$0xff]
    %v2622 = vld [vmem:[%s2595 + $0xd0] sm:$0xff]
    %v2623 = vld [vmem:[%s2595 + $0xd8] sm:$0xff]
    %v2624 = vld [vmem:[%s2595 + $0xe0] sm:$0xff]
    %v2625 = vld [vmem:[%s2595 + $0xe8] sm:$0xff]
    %v2626 = vld [vmem:[%s2595 + $0xf0] sm:$0xff]
    %v2627 = vld [vmem:[%s2595 + $0xf8] sm:$0xff]
    %v2628 = vld [vmem:[%s2595 + $0x100] sm:$0xff]
    %v2629 = vld [vmem:[%s2595 + $0x108] sm:$0xff]
    %v2630 = vld [vmem:[%s2595 + $0x110] sm:$0xff]
    %v2631 = vld [vmem:[%s2595 + $0x118] sm:$0xff]
    %v2632 = vld [vmem:[%s2595 + $0x120] sm:$0xff]
    %v2633 = vld [vmem:[%s2595 + $0x128] sm:$0xff]
    %v2634 = vld [vmem:[%s2595 + $0x130] sm:$0xff]
    %v2635 = vld [vmem:[%s2595 + $0x138] sm:$0xff]
    %v2636 = vld [vmem:[%s2595 + $0x140] sm:$0xff]
    %v2637 = vld [vmem:[%s2595 + $0x148] sm:$0xff]
    %v2638 = vld [vmem:[%s2595 + $0x150] sm:$0xff]
    %v2639 = vld [vmem:[%s2595 + $0x158] sm:$0xff]
    %v2640 = vld [vmem:[%s2595 + $0x160] sm:$0xff]
    %v2641 = vld [vmem:[%s2595 + $0x168] sm:$0xff]
    %v2642 = vld [vmem:[%s2595 + $0x170] sm:$0xff]
    %v2643 = vld [vmem:[%s2595 + $0x178] sm:$0xff]
    %v2644 = vld [vmem:[%s2595 + $0x180] sm:$0xff]
    %v2645 = vld [vmem:[%s2595 + $0x188] sm:$0xff]
    %v2646 = vld [vmem:[%s2595 + $0x190] sm:$0xff]
    %v2647 = vld [vmem:[%s2595 + $0x198] sm:$0xff]
    %v2648 = vld [vmem:[%s2595 + $0x1a0] sm:$0xff]
    %v2649 = vld [vmem:[%s2595 + $0x1a8] sm:$0xff]
    %v2650 = vld [vmem:[%s2595 + $0x1b0] sm:$0xff]
    %v2651 = vld [vmem:[%s2595 + $0x1b8] sm:$0xff]
    %v2652 = vld [vmem:[%s2595 + $0x1c0] sm:$0xff]
    %v2653 = vld [vmem:[%s2595 + $0x1c8] sm:$0xff]
    %v2654 = vld [vmem:[%s2595 + $0x1d0] sm:$0xff]
    %v2655 = vld [vmem:[%s2595 + $0x1d8] sm:$0xff]
    %v2656 = vld [vmem:[%s2595 + $0x1e0] sm:$0xff]
    %v2657 = vld [vmem:[%s2595 + $0x1e8] sm:$0xff]
    %v2658 = vld [vmem:[%s2595 + $0x1f0] sm:$0xff]
    %v2659 = vld [vmem:[%s2595 + $0x1f8] sm:$0xff]
    %2661 = vset.pattern.permute.xlu0 0
    %2662 = vperm.xlu0 %2661, %v106
    %v2663 = vpop.permute.xlu0 %2662
    %2666 = vset.pattern.permute.xlu0 0
    %2667 = vperm.xlu0 %2666, %v107
    %v2668 = vpop.permute.xlu0 %2667
    %2671 = vset.pattern.permute.xlu0 0
    %2672 = vperm.xlu0 %2671, %v108
    %v2673 = vpop.permute.xlu0 %2672
    %v2675 = vmul.f32 %v436, %v2663
    %v2676 = vmul.f32 %v437, %v2663
    %v2677 = vmul.f32 %v438, %v2668
    %v2678 = vmul.f32 %v439, %v2668
    %v2679 = vmul.f32 %v440, %v2673
    %v2680 = vmul.f32 %v441, %v2673
    %2681 = vmatprep.subr.mxu0 %v2597
    %2682 = vmatpush1.msra.mxu0 %v2596
    %2683 = vmatprep.subr.mxu0 %v2599
    %2684 = vmatpush1.msra.mxu0 %v2598
    %2685 = vmatprep.subr.mxu0 %v2601
    %2686 = vmatpush1.msra.mxu0 %v2600
    %2687 = vmatprep.subr.mxu0 %v2603
    %2688 = vmatpush1.msra.mxu0 %v2602
    %2689 = vmatprep.subr.mxu0 %v2605
    %2690 = vmatpush1.msra.mxu0 %v2604
    %2691 = vmatprep.subr.mxu0 %v2607
    %2692 = vmatpush1.msra.mxu0 %v2606
    %2693 = vmatprep.subr.mxu0 %v2609
    %2694 = vmatpush1.msra.mxu0 %v2608
    %2695 = vmatprep.subr.mxu0 %v2611
    %2696 = vmatpush1.msra.mxu0 %v2610
    %2697 = vmatprep.subr.mxu0 %v2613
    %2698 = vmatpush1.msra.mxu0 %v2612
    %2699 = vmatprep.subr.mxu0 %v2615
    %2700 = vmatpush1.msra.mxu0 %v2614
    %2701 = vmatprep.subr.mxu0 %v2617
    %2702 = vmatpush1.msra.mxu0 %v2616
    %2703 = vmatprep.subr.mxu0 %v2619
    %2704 = vmatpush1.msra.mxu0 %v2618
    %2705 = vmatprep.subr.mxu0 %v2621
    %2706 = vmatpush1.msra.mxu0 %v2620
    %2707 = vmatprep.subr.mxu0 %v2623
    %2708 = vmatpush1.msra.mxu0 %v2622
    %2709 = vmatprep.subr.mxu0 %v2625
    %2710 = vmatpush1.msra.mxu0 %v2624
    %2711 = vmatprep.subr.mxu0 %v2627
    %2712 = vmatpush1.msra.mxu0 %v2626
    %2713 = vmatprep.subr.mxu0 %v2629
    %2714 = vmatpush1.msra.mxu0 %v2628
    %2715 = vmatprep.subr.mxu0 %v2631
    %2716 = vmatpush1.msra.mxu0 %v2630
    %2717 = vmatprep.subr.mxu0 %v2633
    %2718 = vmatpush1.msra.mxu0 %v2632
    %2719 = vmatprep.subr.mxu0 %v2635
    %2720 = vmatpush1.msra.mxu0 %v2634
    %2721 = vmatprep.subr.mxu0 %v2637
    %2722 = vmatpush1.msra.mxu0 %v2636
    %2723 = vmatprep.subr.mxu0 %v2639
    %2724 = vmatpush1.msra.mxu0 %v2638
    %2725 = vmatprep.subr.mxu0 %v2641
    %2726 = vmatpush1.msra.mxu0 %v2640
    %2727 = vmatprep.subr.mxu0 %v2643
    %2728 = vmatpush1.msra.mxu0 %v2642
    %2729 = vmatprep.subr.mxu0 %v2645
    %2730 = vmatpush1.msra.mxu0 %v2644
    %2731 = vmatprep.subr.mxu0 %v2647
    %2732 = vmatpush1.msra.mxu0 %v2646
    %2733 = vmatprep.subr.mxu0 %v2649
    %2734 = vmatpush1.msra.mxu0 %v2648
    %2735 = vmatprep.subr.mxu0 %v2651
    %2736 = vmatpush1.msra.mxu0 %v2650
    %2737 = vmatprep.subr.mxu0 %v2653
    %2738 = vmatpush1.msra.mxu0 %v2652
    %2739 = vmatprep.subr.mxu0 %v2655
    %2740 = vmatpush1.msra.mxu0 %v2654
    %2741 = vmatprep.subr.mxu0 %v2657
    %2742 = vmatpush1.msra.mxu0 %v2656
    %2743 = vmatprep.subr.mxu0 %v2659
    %2744 = vmatpush1.msra.mxu0 %v2658
    %2745 = vmatprep.mubr.f32.mxu0 %v2676
    %2746 = vmatmul.mubr.f32.gmra.mrb[0].mxu0 %v2675
    %v2747 = vpop.f32.mrb[0].mxu0
    %v2748 = vadd.f32 0.0, %v2747
    %v2749 = vpop.f32.mrb[0].mxu0
    %v2750 = vadd.f32 0.0, %v2749
    %2751 = vmatprep.mubr.f32.mxu0 %v2678
    %2752 = vmatmul.mubr.f32.gmra.mrb[0].mxu0 %v2677
    %v2753 = vpop.f32.mrb[0].mxu0
    %v2754 = vadd.f32 0.0, %v2753
    %v2755 = vpop.f32.mrb[0].mxu0
    %v2756 = vadd.f32 0.0, %v2755
    %2757 = vmatprep.mubr.f32.mxu0 %v2680
    %2758 = vmatmul.mubr.f32.gmra.mrb[0].mxu0 %v2679
    %v2759 = vpop.f32.mrb[0].mxu0
    %v2760 = vadd.f32 0.0, %v2759
    %v2761 = vpop.f32.mrb[0].mxu0
    %v2762 = vadd.f32 0.0, %v2761
    %2763 = vdwg.mxu0
    %v2764 = vadd.f32 %v2494, %v2748
    %v2765 = vadd.f32 %v2495, %v2750
    %v2766 = vadd.f32 %v2496, %v2754
    %v2767 = vadd.f32 %v2497, %v2756
    %v2768 = vadd.f32 %v2498, %v2760
    %v2769 = vadd.f32 %v2499, %v2762
    %v2770 = vmul.f32 %v454, %v2663
    %v2771 = vmul.f32 %v455, %v2663
    %v2772 = vmul.f32 %v456, %v2668
    %v2773 = vmul.f32 %v457, %v2668
    %v2774 = vmul.f32 %v458, %v2673
    %v2775 = vmul.f32 %v459, %v2673
    %2776 = vmatprep.subr.mxu0 %v2597
    %2777 = vmatpush1.msra.mxu0 %v2596
    %2778 = vmatprep.subr.mxu0 %v2599
    %2779 = vmatpush1.msra.mxu0 %v2598
    %2780 = vmatprep.subr.mxu0 %v2601
    %2781 = vmatpush1.msra.mxu0 %v2600
    %2782 = vmatprep.subr.mxu0 %v2603
    %2783 = vmatpush1.msra.mxu0 %v2602
    %2784 = vmatprep.subr.mxu0 %v2605
    %2785 = vmatpush1.msra.mxu0 %v2604
    %2786 = vmatprep.subr.mxu0 %v2607
    %2787 = vmatpush1.msra.mxu0 %v2606
    %2788 = vmatprep.subr.mxu0 %v2609
    %2789 = vmatpush1.msra.mxu0 %v2608
    %2790 = vmatprep.subr.mxu0 %v2611
    %2791 = vmatpush1.msra.mxu0 %v2610
    %2792 = vmatprep.subr.mxu0 %v2613
    %2793 = vmatpush1.msra.mxu0 %v2612
    %2794 = vmatprep.subr.mxu0 %v2615
    %2795 = vmatpush1.msra.mxu0 %v2614
    %2796 = vmatprep.subr.mxu0 %v2617
    %2797 = vmatpush1.msra.mxu0 %v2616
    %2798 = vmatprep.subr.mxu0 %v2619
    %2799 = vmatpush1.msra.mxu0 %v2618
    %2800 = vmatprep.subr.mxu0 %v2621
    %2801 = vmatpush1.msra.mxu0 %v2620
    %2802 = vmatprep.subr.mxu0 %v2623
    %2803 = vmatpush1.msra.mxu0 %v2622
    %2804 = vmatprep.subr.mxu0 %v2625
    %2805 = vmatpush1.msra.mxu0 %v2624
    %2806 = vmatprep.subr.mxu0 %v2627
    %2807 = vmatpush1.msra.mxu0 %v2626
    %2808 = vmatprep.subr.mxu0 %v2629
    %2809 = vmatpush1.msra.mxu0 %v2628
    %2810 = vmatprep.subr.mxu0 %v2631
    %2811 = vmatpush1.msra.mxu0 %v2630
    %2812 = vmatprep.subr.mxu0 %v2633
    %2813 = vmatpush1.msra.mxu0 %v2632
    %2814 = vmatprep.subr.mxu0 %v2635
    %2815 = vmatpush1.msra.mxu0 %v2634
    %2816 = vmatprep.subr.mxu0 %v2637
    %2817 = vmatpush1.msra.mxu0 %v2636
    %2818 = vmatprep.subr.mxu0 %v2639
    %2819 = vmatpush1.msra.mxu0 %v2638
    %2820 = vmatprep.subr.mxu0 %v2641
    %2821 = vmatpush1.msra.mxu0 %v2640
    %2822 = vmatprep.subr.mxu0 %v2643
    %2823 = vmatpush1.msra.mxu0 %v2642
    %2824 = vmatprep.subr.mxu0 %v2645
    %2825 = vmatpush1.msra.mxu0 %v2644
    %2826 = vmatprep.subr.mxu0 %v2647
    %2827 = vmatpush1.msra.mxu0 %v2646
    %2828 = vmatprep.subr.mxu0 %v2649
    %2829 = vmatpush1.msra.mxu0 %v2648
    %2830 = vmatprep.subr.mxu0 %v2651
    %2831 = vmatpush1.msra.mxu0 %v2650
    %2832 = vmatprep.subr.mxu0 %v2653
    %2833 = vmatpush1.msra.mxu0 %v2652
    %2834 = vmatprep.subr.mxu0 %v2655
    %2835 = vmatpush1.msra.mxu0 %v2654
    %2836 = vmatprep.subr.mxu0 %v2657
    %2837 = vmatpush1.msra.mxu0 %v2656
    %2838 = vmatprep.subr.mxu0 %v2659
    %2839 = vmatpush1.msra.mxu0 %v2658
    %2840 = vmatprep.mubr.f32.mxu0 %v2771
    %2841 = vmatmul.mubr.f32.gmra.mrb[0].mxu0 %v2770
    %v2842 = vpop.f32.mrb[0].mxu0
    %v2843 = vadd.f32 0.0, %v2842
    %v2844 = vpop.f32.mrb[0].mxu0
    %v2845 = vadd.f32 0.0, %v2844
    %2846 = vmatprep.mubr.f32.mxu0 %v2773
    %2847 = vmatmul.mubr.f32.gmra.mrb[0].mxu0 %v2772
    %v2848 = vpop.f32.mrb[0].mxu0
    %v2849 = vadd.f32 0.0, %v2848
    %v2850 = vpop.f32.mrb[0].mxu0
    %v2851 = vadd.f32 0.0, %v2850
    %2852 = vmatprep.mubr.f32.mxu0 %v2775
    %2853 = vmatmul.mubr.f32.gmra.mrb[0].mxu0 %v2774
    %v2854 = vpop.f32.mrb[0].mxu0
    %v2855 = vadd.f32 0.0, %v2854
    %v2856 = vpop.f32.mrb[0].mxu0
    %v2857 = vadd.f32 0.0, %v2856
    %2858 = vdwg.mxu0
    %v2859 = vadd.f32 %v2589, %v2843
    %v2860 = vadd.f32 %v2590, %v2845
    %v2861 = vadd.f32 %v2591, %v2849
    %v2862 = vadd.f32 %v2592, %v2851
    %v2863 = vadd.f32 %v2593, %v2855
    %v2864 = vadd.f32 %v2594, %v2857
    %v2865 = vld [vmem:[%s6] sm:$0xff]
    %v2866 = vld [vmem:[%s6 + $0x8] sm:$0xff]
    %v2867 = vld [vmem:[%s6 + $0x10] sm:$0xff]
    %v2868 = vld [vmem:[%s7] sm:$0xff]
    %v2869 = vld [vmem:[%s7 + $0x8] sm:$0xff]
    %v2870 = vld [vmem:[%s7 + $0x10] sm:$0xff]
    %v2871 = vadd.f32 %v2764, %v2765
    %2872 = vadd.xlane.f32.xlu0 %v2871
    %v2873 = vpop.xlane.xlu0 %2872
    %v2874 = vadd.f32 %v2766, %v2767
    %2875 = vadd.xlane.f32.xlu0 %v2874
    %v2876 = vpop.xlane.xlu0 %2875
    %v2877 = vadd.f32 %v2768, %v2769
    %2878 = vadd.xlane.f32.xlu0 %v2877
    %v2879 = vpop.xlane.xlu0 %2878
    %v2880 = vadd.f32 %v2873, 0.0
    %v2881 = vadd.f32 %v2876, 0.0
    %v2882 = vadd.f32 %v2879, 0.0
    %v2883 = vadd.f32 %v2859, %v2860
    %2884 = vadd.xlane.f32.xlu0 %v2883
    %v2885 = vpop.xlane.xlu0 %2884
    %v2886 = vadd.f32 %v2861, %v2862
    %2887 = vadd.xlane.f32.xlu0 %v2886
    %v2888 = vpop.xlane.xlu0 %2887
    %v2889 = vadd.f32 %v2863, %v2864
    %2890 = vadd.xlane.f32.xlu0 %v2889
    %v2891 = vpop.xlane.xlu0 %2890
    %v2892 = vadd.f32 %v2880, %v2885
    %v2893 = vadd.f32 %v2881, %v2888
    %v2894 = vadd.f32 %v2882, %v2891
    %v2895 = vmul.f32 %v2892, 0.001953125
    %v2896 = vmul.f32 %v2893, 0.001953125
    %v2897 = vmul.f32 %v2894, 0.001953125
    %v2898 = vsub.f32 %v2764, %v2895
    %v2899 = vsub.f32 %v2765, %v2895
    %v2900 = vsub.f32 %v2766, %v2896
    %v2901 = vsub.f32 %v2767, %v2896
    %v2902 = vsub.f32 %v2768, %v2897
    %v2903 = vsub.f32 %v2769, %v2897
    %v2904 = vsub.f32 %v2859, %v2895
    %v2905 = vsub.f32 %v2860, %v2895
    %v2906 = vsub.f32 %v2861, %v2896
    %v2907 = vsub.f32 %v2862, %v2896
    %v2908 = vsub.f32 %v2863, %v2897
    %v2909 = vsub.f32 %v2864, %v2897
    %v2910 = vmul.f32 %v2898, %v2898
    %v2911 = vmul.f32 %v2899, %v2899
    %v2912 = vmul.f32 %v2900, %v2900
    %v2913 = vmul.f32 %v2901, %v2901
    %v2914 = vmul.f32 %v2902, %v2902
    %v2915 = vmul.f32 %v2903, %v2903
    %v2916 = vadd.f32 %v2910, %v2911
    %2917 = vadd.xlane.f32.xlu0 %v2916
    %v2918 = vpop.xlane.xlu0 %2917
    %v2919 = vadd.f32 %v2912, %v2913
    %2920 = vadd.xlane.f32.xlu0 %v2919
    %v2921 = vpop.xlane.xlu0 %2920
    %v2922 = vadd.f32 %v2914, %v2915
    %2923 = vadd.xlane.f32.xlu0 %v2922
    %v2924 = vpop.xlane.xlu0 %2923
    %v2925 = vadd.f32 %v2918, 0.0
    %v2926 = vadd.f32 %v2921, 0.0
    %v2927 = vadd.f32 %v2924, 0.0
    %v2928 = vmul.f32 %v2904, %v2904
    %v2929 = vmul.f32 %v2905, %v2905
    %v2930 = vmul.f32 %v2906, %v2906
    %v2931 = vmul.f32 %v2907, %v2907
    %v2932 = vmul.f32 %v2908, %v2908
    %v2933 = vmul.f32 %v2909, %v2909
    %v2934 = vadd.f32 %v2928, %v2929
    %2935 = vadd.xlane.f32.xlu0 %v2934
    %v2936 = vpop.xlane.xlu0 %2935
    %v2937 = vadd.f32 %v2930, %v2931
    %2938 = vadd.xlane.f32.xlu0 %v2937
    %v2939 = vpop.xlane.xlu0 %2938
    %v2940 = vadd.f32 %v2932, %v2933
    %2941 = vadd.xlane.f32.xlu0 %v2940
    %v2942 = vpop.xlane.xlu0 %2941
    %v2943 = vadd.f32 %v2925, %v2936
    %v2944 = vadd.f32 %v2926, %v2939
    %v2945 = vadd.f32 %v2927, %v2942
    %v2946 = vmul.f32 %v2943, 0.001953125
    %v2947 = vmul.f32 %v2944, 0.001953125
    %v2948 = vmul.f32 %v2945, 0.001953125
    %v2949 = vadd.f32 %v2946, 1e-05
    %v2950 = vadd.f32 %v2947, 1e-05
    %v2951 = vadd.f32 %v2948, 1e-05
    %v2952 = vrsqrt.pop %v2949
    %v2953 = vrsqrt.pop %v2950
    %v2954 = vrsqrt.pop %v2951
    %v2955 = vmul.f32 %v2865, %v2952
    %v2956 = vmul.f32 %v2866, %v2953
    %v2957 = vmul.f32 %v2867, %v2954
    %2959 = vset.pattern.permute.xlu0 0
    %2960 = vperm.xlu0 %2959, %v2955
    %v2961 = vpop.permute.xlu0 %2960
    %2964 = vset.pattern.permute.xlu0 0
    %2965 = vperm.xlu0 %2964, %v2956
    %v2966 = vpop.permute.xlu0 %2965
    %2969 = vset.pattern.permute.xlu0 0
    %2970 = vperm.xlu0 %2969, %v2957
    %v2971 = vpop.permute.xlu0 %2970
    %v2973 = vmul.f32 %v2898, %v2961
    %v2974 = vmul.f32 %v2899, %v2961
    %v2975 = vmul.f32 %v2900, %v2966
    %v2976 = vmul.f32 %v2901, %v2966
    %v2977 = vmul.f32 %v2902, %v2971
    %v2978 = vmul.f32 %v2903, %v2971
    %2980 = vset.pattern.permute.xlu0 0
    %2981 = vperm.xlu0 %2980, %v2868
    %v2982 = vpop.permute.xlu0 %2981
    %2985 = vset.pattern.permute.xlu0 0
    %2986 = vperm.xlu0 %2985, %v2869
    %v2987 = vpop.permute.xlu0 %2986
    %2990 = vset.pattern.permute.xlu0 0
    %2991 = vperm.xlu0 %2990, %v2870
    %v2992 = vpop.permute.xlu0 %2991
    %v2994 = vadd.f32 %v2973, %v2982
    %v2995 = vadd.f32 %v2974, %v2982
    %v2996 = vadd.f32 %v2975, %v2987
    %v2997 = vadd.f32 %v2976, %v2987
    %v2998 = vadd.f32 %v2977, %v2992
    %v2999 = vadd.f32 %v2978, %v2992
    %v3000 = vmax.f32 %v2994, 0.0
    %v3001 = vmax.f32 %v2995, 0.0
    %v3002 = vmax.f32 %v2996, 0.0
    %v3003 = vmax.f32 %v2997, 0.0
    %v3004 = vmax.f32 %v2998, 0.0
    %v3005 = vmax.f32 %v2999, 0.0
    %v3006 = vmul.f32 %v2904, %v2961
    %v3007 = vmul.f32 %v2905, %v2961
    %v3008 = vmul.f32 %v2906, %v2966
    %v3009 = vmul.f32 %v2907, %v2966
    %v3010 = vmul.f32 %v2908, %v2971
    %v3011 = vmul.f32 %v2909, %v2971
    %v3012 = vadd.f32 %v3006, %v2982
    %v3013 = vadd.f32 %v3007, %v2982
    %v3014 = vadd.f32 %v3008, %v2987
    %v3015 = vadd.f32 %v3009, %v2987
    %v3016 = vadd.f32 %v3010, %v2992
    %v3017 = vadd.f32 %v3011, %v2992
    %v3018 = vmax.f32 %v3012, 0.0
    %v3019 = vmax.f32 %v3013, 0.0
    %v3020 = vmax.f32 %v3014, 0.0
    %v3021 = vmax.f32 %v3015, 0.0
    %v3022 = vmax.f32 %v3016, 0.0
    %v3023 = vmax.f32 %v3017, 0.0
    %vm3024 = vcmask 195584
    %v3026 = vsel %vm3024, %v81, 0
    %3028 = vmatprep.subr.mxu0 %v3001
    %3029 = vmatpush1.msra.mxu0 %v3000
    %3030 = vmatprep.subr.mxu0 %v3003
    %3031 = vmatpush1.msra.mxu0 %v3002
    %3032 = vmatprep.subr.mxu0 %v3005
    %3033 = vmatpush1.msra.mxu0 %v3004
    %3034 = vmatprep.subr.mxu0 0.0
    %3035 = vmatpush1.msra.mxu0 0.0
    %3036 = vmatprep.subr.mxu0 0.0
    %3037 = vmatpush1.msra.mxu0 0.0
    %3038 = vmatprep.subr.mxu0 0.0
    %3039 = vmatpush1.msra.mxu0 0.0
    %3040 = vmatprep.subr.mxu0 0.0
    %3041 = vmatpush1.msra.mxu0 0.0
    %3042 = vmatprep.subr.mxu0 0.0
    %3043 = vmatpush1.msra.mxu0 0.0
    %3044 = vmatprep.subr.mxu0 0.0
    %3045 = vmatpush1.msra.mxu0 0.0
    %3046 = vmatprep.subr.mxu0 0.0
    %3047 = vmatpush1.msra.mxu0 0.0
    %3048 = vmatprep.subr.mxu0 0.0
    %3049 = vmatpush1.msra.mxu0 0.0
    %3050 = vmatprep.subr.mxu0 0.0
    %3051 = vmatpush1.msra.mxu0 0.0
    %3052 = vmatprep.subr.mxu0 0.0
    %3053 = vmatpush1.msra.mxu0 0.0
    %3054 = vmatprep.subr.mxu0 0.0
    %3055 = vmatpush1.msra.mxu0 0.0
    %3056 = vmatprep.subr.mxu0 0.0
    %3057 = vmatpush1.msra.mxu0 0.0
    %3058 = vmatprep.subr.mxu0 0.0
    %3059 = vmatpush1.msra.mxu0 0.0
    %3060 = vmatprep.subr.mxu0 0.0
    %3061 = vmatpush1.msra.mxu0 0.0
    %3062 = vmatprep.subr.mxu0 0.0
    %3063 = vmatpush1.msra.mxu0 0.0
    %3064 = vmatprep.subr.mxu0 0.0
    %3065 = vmatpush1.msra.mxu0 0.0
    %3066 = vmatprep.subr.mxu0 0.0
    %3067 = vmatpush1.msra.mxu0 0.0
    %3068 = vmatprep.subr.mxu0 0.0
    %3069 = vmatpush1.msra.mxu0 0.0
    %3070 = vmatprep.subr.mxu0 0.0
    %3071 = vmatpush1.msra.mxu0 0.0
    %3072 = vmatprep.subr.mxu0 0.0
    %3073 = vmatpush1.msra.mxu0 0.0
    %3074 = vmatprep.subr.mxu0 0.0
    %3075 = vmatpush1.msra.mxu0 0.0
    %3076 = vmatprep.subr.mxu0 0.0
    %3077 = vmatpush1.msra.mxu0 0.0
    %3078 = vmatprep.subr.mxu0 0.0
    %3079 = vmatpush1.msra.mxu0 0.0
    %3080 = vmatprep.subr.mxu0 0.0
    %3081 = vmatpush1.msra.mxu0 0.0
    %3082 = vmatprep.subr.mxu0 0.0
    %3083 = vmatpush1.msra.mxu0 0.0
    %3084 = vmatprep.subr.mxu0 0.0
    %3085 = vmatpush1.msra.mxu0 0.0
    %3086 = vmatprep.subr.mxu0 0.0
    %3087 = vmatpush1.msra.mxu0 0.0
    %3088 = vmatprep.subr.mxu0 0.0
    %3089 = vmatpush1.msra.mxu0 0.0
    %3090 = vmatprep.subr.mxu0 0.0
    %3091 = vmatpush1.msra.mxu0 0.0
    %3092 = vmatprep.mubr.f32.mxu0 0.0
    %3093 = vmatmul.mubr.f32.gmra.mrb[0].mxu0 %v3026
    %v3094 = vpop.f32.mrb[0].mxu0
    %v3095 = vadd.f32 0.0, %v3094
    %v3096 = vpop.f32.mrb[0].mxu0
    %v3097 = vadd.f32 0.0, %v3096
    %3098 = vdwg.mxu0
    %3099 = vmatprep.subr.mxu0 %v3019
    %3100 = vmatpush1.msra.mxu0 %v3018
    %3101 = vmatprep.subr.mxu0 %v3021
    %3102 = vmatpush1.msra.mxu0 %v3020
    %3103 = vmatprep.subr.mxu0 %v3023
    %3104 = vmatpush1.msra.mxu0 %v3022
    %3105 = vmatprep.subr.mxu0 0.0
    %3106 = vmatpush1.msra.mxu0 0.0
    %3107 = vmatprep.subr.mxu0 0.0
    %3108 = vmatpush1.msra.mxu0 0.0
    %3109 = vmatprep.subr.mxu0 0.0
    %3110 = vmatpush1.msra.mxu0 0.0
    %3111 = vmatprep.subr.mxu0 0.0
    %3112 = vmatpush1.msra.mxu0 0.0
    %3113 = vmatprep.subr.mxu0 0.0
    %3114 = vmatpush1.msra.mxu0 0.0
    %3115 = vmatprep.subr.mxu0 0.0
    %3116 = vmatpush1.msra.mxu0 0.0
    %3117 = vmatprep.subr.mxu0 0.0
    %3118 = vmatpush1.msra.mxu0 0.0
    %3119 = vmatprep.subr.mxu0 0.0
    %3120 = vmatpush1.msra.mxu0 0.0
    %3121 = vmatprep.subr.mxu0 0.0
    %3122 = vmatpush1.msra.mxu0 0.0
    %3123 = vmatprep.subr.mxu0 0.0
    %3124 = vmatpush1.msra.mxu0 0.0
    %3125 = vmatprep.subr.mxu0 0.0
    %3126 = vmatpush1.msra.mxu0 0.0
    %3127 = vmatprep.subr.mxu0 0.0
    %3128 = vmatpush1.msra.mxu0 0.0
    %3129 = vmatprep.subr.mxu0 0.0
    %3130 = vmatpush1.msra.mxu0 0.0
    %3131 = vmatprep.subr.mxu0 0.0
    %3132 = vmatpush1.msra.mxu0 0.0
    %3133 = vmatprep.subr.mxu0 0.0
    %3134 = vmatpush1.msra.mxu0 0.0
    %3135 = vmatprep.subr.mxu0 0.0
    %3136 = vmatpush1.msra.mxu0 0.0
    %3137 = vmatprep.subr.mxu0 0.0
    %3138 = vmatpush1.msra.mxu0 0.0
    %3139 = vmatprep.subr.mxu0 0.0
    %3140 = vmatpush1.msra.mxu0 0.0
    %3141 = vmatprep.subr.mxu0 0.0
    %3142 = vmatpush1.msra.mxu0 0.0
    %3143 = vmatprep.subr.mxu0 0.0
    %3144 = vmatpush1.msra.mxu0 0.0
    %3145 = vmatprep.subr.mxu0 0.0
    %3146 = vmatpush1.msra.mxu0 0.0
    %3147 = vmatprep.subr.mxu0 0.0
    %3148 = vmatpush1.msra.mxu0 0.0
    %3149 = vmatprep.subr.mxu0 0.0
    %3150 = vmatpush1.msra.mxu0 0.0
    %3151 = vmatprep.subr.mxu0 0.0
    %3152 = vmatpush1.msra.mxu0 0.0
    %3153 = vmatprep.subr.mxu0 0.0
    %3154 = vmatpush1.msra.mxu0 0.0
    %3155 = vmatprep.subr.mxu0 0.0
    %3156 = vmatpush1.msra.mxu0 0.0
    %3157 = vmatprep.subr.mxu0 0.0
    %3158 = vmatpush1.msra.mxu0 0.0
    %3159 = vmatprep.subr.mxu0 0.0
    %3160 = vmatpush1.msra.mxu0 0.0
    %3161 = vmatprep.subr.mxu0 0.0
    %3162 = vmatpush1.msra.mxu0 0.0
    %3163 = vmatprep.mubr.f32.mxu0 0.0
    %3164 = vmatmul.mubr.f32.gmra.mrb[0].mxu0 %v3026
    %v3165 = vpop.f32.mrb[0].mxu0
    %v3166 = vadd.f32 0.0, %v3165
    %v3167 = vpop.f32.mrb[0].mxu0
    %v3168 = vadd.f32 0.0, %v3167
    %3169 = vdwg.mxu0
    %v3170 = vld [vmem:[%s9] sm:$0xf]
    %v3171 = vld [vmem:[%s10] sm:$0xf]
    %v3172 = vsel %vm122, %v3095, 0.0
    %v3173 = vsel %vm122, %v3097, 0.0
    %v3174 = vadd.f32 %v3172, %v3173
    %3175 = vadd.xlane.f32.xlu0 %v3174
    %v3176 = vpop.xlane.xlu0 %3175
    %v3177 = vadd.f32 %v3176, 0.0
    %v3178 = vsel %vm122, %v3166, 0.0
    %v3179 = vsel %vm122, %v3168, 0.0
    %v3180 = vadd.f32 %v3178, %v3179
    %3181 = vadd.xlane.f32.xlu0 %v3180
    %v3182 = vpop.xlane.xlu0 %3181
    %v3183 = vadd.f32 %v3177, %v3182
    %v3184 = vmul.f32 %v3183, 0.001953125
    %v3185 = vsub.f32 %v3095, %v3184
    %v3186 = vsub.f32 %v3097, %v3184
    %v3187 = vsub.f32 %v3166, %v3184
    %v3188 = vsub.f32 %v3168, %v3184
    %v3189 = vmul.f32 %v3185, %v3185
    %v3190 = vmul.f32 %v3186, %v3186
    %v3191 = vsel %vm122, %v3189, 0.0
    %v3192 = vsel %vm122, %v3190, 0.0
    %v3193 = vadd.f32 %v3191, %v3192
    %3194 = vadd.xlane.f32.xlu0 %v3193
    %v3195 = vpop.xlane.xlu0 %3194
    %v3196 = vadd.f32 %v3195, 0.0
    %v3197 = vmul.f32 %v3187, %v3187
    %v3198 = vmul.f32 %v3188, %v3188
    %v3199 = vsel %vm122, %v3197, 0.0
    %v3200 = vsel %vm122, %v3198, 0.0
    %v3201 = vadd.f32 %v3199, %v3200
    %3202 = vadd.xlane.f32.xlu0 %v3201
    %v3203 = vpop.xlane.xlu0 %3202
    %v3204 = vadd.f32 %v3196, %v3203
    %v3205 = vmul.f32 %v3204, 0.001953125
    %v3206 = vadd.f32 %v3205, 1e-05
    %v3207 = vrsqrt.pop %v3206
    %v3208 = vmul.f32 %v3170, %v3207
    %3210 = vset.pattern.permute.xlu0 0
    %3211 = vperm.xlu0 %3210, %v3208
    %v3212 = vpop.permute.xlu0 %3211
    %v3214 = vmul.f32 %v3185, %v3212
    %v3215 = vmul.f32 %v3186, %v3212
    %3217 = vset.pattern.permute.xlu0 0
    %3218 = vperm.xlu0 %3217, %v3171
    %v3219 = vpop.permute.xlu0 %3218
    %v3221 = vadd.f32 %v3214, %v3219
    %v3222 = vadd.f32 %v3215, %v3219
    %v3223 = vmul.f32 %v3187, %v3212
    %v3224 = vmul.f32 %v3188, %v3212
    %v3225 = vadd.f32 %v3223, %v3219
    %v3226 = vadd.f32 %v3224, %v3219
    %v3228 = vadd.f32 %v3221, %v109
    %v3229 = vadd.f32 %v3222, %v111
    %v3231 = vadd.f32 %v3225, %v211
    %v3232 = vadd.f32 %v3226, %v213
    %v3235 = vcombine.low %v3228, %v3229
    %3237 = vst [vmem:[#allocation8] sm:$0xff] %v3235
    %v3240 = vcombine.low %v3231, %v3232
    %s3242 = scalar_lea.vmem [#allocation8], 8
    %3243 = vst [vmem:[%s3242] sm:$0xff] %v3240
    // Predicated region
    $region58: #{tpu_custom_call.1} parent=1 // pred_check
      _
    $region59: #{tpu_custom_call.1} parent=1 // pred_check_branch
      %3245 = sbr.rel (0) target = $region61
    $region60: #{tpu_custom_call.1} parent=1 // pred_region
      %s3247 = ssub.s32 256, 256
      %3248 = vsyncadd [#allocation4], %s3247
      %s3249 = sshll.u32 [#allocation8], 4
      %s3250 = int_to_ptr.vmem [resolvable:$true] %s3249
      %3255 = dma.vmem_to_hbm [thread:$0]  %s3250, 256, %s11, [#allocation4], 128, 128, 8
    $region61: #{tpu_custom_call.1} parent=1 // pred_fallthru
      _
    // Predicated region
    $region62: #{tpu_custom_call.1} parent=1 // pred_check
      _
    $region63: #{tpu_custom_call.1} parent=1 // pred_check_branch
      %3257 = sbr.rel (0) target = $region65
    $region64: #{tpu_custom_call.1} parent=1 // pred_region
      %3258 = dma.done [#allocation4], 256
    $region65: #{tpu_custom_call.1} parent=1 // pred_fallthru
      _
    %3259 = vsyncpa [#allocation3], 1
    %3260 = vsyncpa [#allocation6], 1
    %3261 = vsyncpa [#allocation4], 1

</llo_original>
